<compile_context>
chip_gen: v6e
topology: v6e:2x2x1
jax: 0.10.0
libtpu: 0.0.40
codegen_flags: <defaults>
</compile_context>

<pallas_src>
import jax
import jax.numpy as jnp
from jax.experimental import pallas as pl
from jax.experimental.pallas import tpu as pltpu

D_MODEL = 128          # constructor default is 512; kept lane-aligned & small (benchmark model)
NUM_HEADS = 8
HEAD_DIM = D_MODEL // NUM_HEADS
NUM_CLASSES = 3
OUT_PAD = 128          # lane-dense classifier output; real logits in first 3 lanes
NUM_LAYERS = 4
FF_DIM = 4 * D_MODEL
GENE_DIM = 512         # fixed by nn.Linear(512, d_model)
MORPH_DIM = 1536       # fixed by nn.Linear(1536, d_model)
SPATIAL_DIM = 2
SPATIAL_HIDDEN = 64
SPATIAL_HIDDEN_PAD = 128   # zero-padded to a full lane width (exact)
SEQ = 4                # [cls, gene, morph, spatial]
LN_EPS = 1e-5
ATTN_SCALE = 1.0 / float(HEAD_DIM) ** 0.5


def _round_up(x, m):
    return (x + m - 1) // m * m


def _layernorm(x, w, b, eps=LN_EPS):
    mu = jnp.mean(x, axis=-1, keepdims=True)
    var = jnp.mean((x - mu) ** 2, axis=-1, keepdims=True)
    return (x - mu) * jax.lax.rsqrt(var + eps) * w + b


def _erf(x):
    # Abramowitz & Stegun 7.1.26, |err| <= 1.5e-7.  Only exp/mul/add/select,
    # so it lowers on every TPU generation without relying on a native erf.
    a1, a2, a3, a4, a5 = (0.254829592, -0.284496736, 1.421413741,
                          -1.453152027, 1.061405429)
    p = 0.3275911
    sgn = jnp.where(x >= 0.0, 1.0, -1.0)
    ax = jnp.abs(x)
    t = 1.0 / (1.0 + p * ax)
    poly = ((((a5 * t + a4) * t + a3) * t + a2) * t + a1) * t
    return sgn * (1.0 - poly * jnp.exp(-ax * ax))


def _gelu_exact(x):
    # matches torch.nn.GELU() (erf formulation) to ~1e-7
    return 0.5 * x * (1.0 + _erf(x * 0.7071067811865476))


# ---------------------------------------------------------------------------
# Fused kernel: embedding + 4 encoder layers + classifier head
# ---------------------------------------------------------------------------
def fused_kernel(gene_ref, morph_ref, spatial_ref,
                 wg_ref, bg_ref, wm_ref, bm_ref,
                 ws1_ref, bs1_ref, ws2_ref, bs2_ref, cls_ref, hsel_ref,
                 wqkv_ref, bqkv_ref, wo_ref, bo_ref,
                 w1_ref, b1_ref, w2_ref, b2_ref,
                 ln1w_ref, ln1b_ref, ln2w_ref, ln2b_ref,
                 clnw_ref, clnb_ref, wc_ref, bc_ref,
                 o_ref):
    tb = gene_ref.shape[0]          # batch tile
    rows = SEQ * tb                 # flattened token rows

    # ---- input embedding (bf16 inputs/weights, f32 accumulation) ----
    g = jnp.dot(gene_ref[...], wg_ref[...],
                preferred_element_type=jnp.float32) + bg_ref[...]
    mo = jnp.dot(morph_ref[...], wm_ref[...],
                 preferred_element_type=jnp.float32) + bm_ref[...]

    # spatial MLP: the degenerate K=2 matmul is two VPU broadcast FMAs; hidden
    # is zero-padded to 128 lanes (gelu(0)=0 and ws2 pad rows are 0 -> exact)
    sp_h = (spatial_ref[:, 0:1] * ws1_ref[0:1, :]
            + spatial_ref[:, 1:2] * ws1_ref[1:2, :]
            + bs1_ref[...])
    sp_h = _gelu_exact(sp_h)
    sp = jnp.dot(sp_h.astype(jnp.bfloat16), ws2_ref[...],
                 preferred_element_type=jnp.float32) + bs2_ref[...]

    cls = jnp.broadcast_to(cls_ref[...], (tb, D_MODEL))

    # token-major flat layout: row = s*tb + b  (s: 0=cls, 1=gene, 2=morph, 3=spatial)
    x0 = jnp.concatenate([cls, g, mo, sp], axis=0)     # (rows, D) f32

    hsel = hsel_ref[...]   # (D, D) bf16 block-diagonal head selector (resident weight)

    def layer_body(l, x):
        # ---- multi-head self-attention (post-norm encoder layer) ----
        x_bf = x.astype(jnp.bfloat16)
        qkv = jnp.dot(x_bf, wqkv_ref[l],
                      preferred_element_type=jnp.float32) + bqkv_ref[l]
        q = (qkv[:, :D_MODEL] * ATTN_SCALE).reshape(SEQ, tb, D_MODEL)
        k = qkv[:, D_MODEL:2 * D_MODEL].reshape(SEQ, tb, D_MODEL)
        v = qkv[:, 2 * D_MODEL:].reshape(SEQ, tb, D_MODEL)

        # all (key j, query s) pairs at once via broadcast (no concat copies),
        # then ONE fused bf16 score matmul against the head selector:
        #   scores[j, s, b, d] = scale * sum_{d' in head(d)} q[s,b,d'] * k[j,b,d']
        qk = q[None, :, :, :] * k[:, None, :, :]              # (SEQ, SEQ, tb, D) f32
        scores = jnp.dot(qk.astype(jnp.bfloat16).reshape(SEQ * rows, D_MODEL),
                         hsel, preferred_element_type=jnp.float32)
        scores = scores.reshape(SEQ, SEQ, tb, D_MODEL)

        # softmax over key tokens (axis 0), per head lane
        m = jnp.max(scores, axis=0, keepdims=True)
        p_un = jnp.exp(scores - m)
        denom = jnp.sum(p_un, axis=0, keepdims=True)
        p = p_un * pl.reciprocal(denom, approx=True)           # EUP slot, ~free

        attn = jnp.sum(p * v[:, None, :, :], axis=0).reshape(rows, D_MODEL)
        attn = jnp.dot(attn.astype(jnp.bfloat16), wo_ref[l],
                       preferred_element_type=jnp.float32) + bo_ref[l]
        x = _layernorm(x + attn, ln1w_ref[l], ln1b_ref[l])     # post-norm, dropout=identity

        # ---- feed-forward (ReLU, TransformerEncoderLayer default) ----
        h1 = jnp.maximum(
            jnp.dot(x.astype(jnp.bfloat16), w1_ref[l],
                    preferred_element_type=jnp.float32) + b1_ref[l], 0.0)
        ff = jnp.dot(h1.astype(jnp.bfloat16), w2_ref[l],
                     preferred_element_type=jnp.float32) + b2_ref[l]
        return _layernorm(x + ff, ln2w_ref[l], ln2b_ref[l])

    x = jax.lax.fori_loop(0, NUM_LAYERS, layer_body, x0)

    # ---- classifier head on CLS-token rows (first tb rows in token-major layout) ----
    y = _layernorm(x[:tb, :], clnw_ref[...], clnb_ref[...])
    o_ref[...] = jnp.dot(y, wc_ref[...],
                         preferred_element_type=jnp.float32) + bc_ref[...]


# ---------------------------------------------------------------------------
# Parameter init (deterministic, synthetic); big matmul weights stored in bf16
# ---------------------------------------------------------------------------
def init_params(key):
    keys = iter(jax.random.split(key, 32))

    def w(k, din, dout, dtype=jnp.bfloat16, scale=0.02):
        return (scale * jax.random.normal(k, (din, dout), jnp.float32)).astype(dtype)

    p = {}
    p['wg'] = w(next(keys), GENE_DIM, D_MODEL)
    p['bg'] = jnp.zeros((1, D_MODEL), jnp.float32)
    p['wm'] = w(next(keys), MORPH_DIM, D_MODEL)
    p['bm'] = jnp.zeros((1, D_MODEL), jnp.float32)

    ws1 = w(next(keys), SPATIAL_DIM, SPATIAL_HIDDEN, jnp.float32)
    p['ws1'] = jnp.zeros((SPATIAL_DIM, SPATIAL_HIDDEN_PAD),
                         jnp.float32).at[:, :SPATIAL_HIDDEN].set(ws1)
    p['bs1'] = jnp.zeros((1, SPATIAL_HIDDEN_PAD), jnp.float32)
    ws2 = w(next(keys), SPATIAL_HIDDEN, D_MODEL, jnp.float32)
    p['ws2'] = jnp.zeros((SPATIAL_HIDDEN_PAD, D_MODEL),
                         jnp.float32).at[:SPATIAL_HIDDEN, :].set(ws2).astype(jnp.bfloat16)
    p['bs2'] = jnp.zeros((1, D_MODEL), jnp.float32)
    p['cls'] = jax.random.normal(next(keys), (1, D_MODEL), jnp.float32)

    p['wqkv'] = jnp.stack([w(next(keys), D_MODEL, 3 * D_MODEL) for _ in range(NUM_LAYERS)])
    p['bqkv'] = jnp.zeros((NUM_LAYERS, 1, 3 * D_MODEL), jnp.float32)
    p['wo'] = jnp.stack([w(next(keys), D_MODEL, D_MODEL) for _ in range(NUM_LAYERS)])
    p['bo'] = jnp.zeros((NUM_LAYERS, 1, D_MODEL), jnp.float32)
    p['w1'] = jnp.stack([w(next(keys), D_MODEL, FF_DIM) for _ in range(NUM_LAYERS)])
    p['b1'] = jnp.zeros((NUM_LAYERS, 1, FF_DIM), jnp.float32)
    p['w2'] = jnp.stack([w(next(keys), FF_DIM, D_MODEL) for _ in range(NUM_LAYERS)])
    p['b2'] = jnp.zeros((NUM_LAYERS, 1, D_MODEL), jnp.float32)
    p['ln1w'] = jnp.ones((NUM_LAYERS, 1, D_MODEL), jnp.float32)
    p['ln1b'] = jnp.zeros((NUM_LAYERS, 1, D_MODEL), jnp.float32)
    p['ln2w'] = jnp.ones((NUM_LAYERS, 1, D_MODEL), jnp.float32)
    p['ln2b'] = jnp.zeros((NUM_LAYERS, 1, D_MODEL), jnp.float32)

    p['cls_lnw'] = jnp.ones((1, D_MODEL), jnp.float32)
    p['cls_lnb'] = jnp.zeros((1, D_MODEL), jnp.float32)
    wc_real = w(next(keys), D_MODEL, NUM_CLASSES, jnp.float32)
    p['wc'] = jnp.zeros((D_MODEL, OUT_PAD), jnp.float32).at[:, :NUM_CLASSES].set(wc_real)
    p['bc'] = jnp.zeros((1, OUT_PAD), jnp.float32)
    return p


# ---------------------------------------------------------------------------
# Tile choice: MXU-aligned, megacore-aware, prefers a tile that divides B
# ---------------------------------------------------------------------------
def _choose_batch_tile(B, batch_tile):
    # multiple of 64 for large batches -> rows = 4*tb is a multiple of 256
    # (v6e/v7x MXU pass); 8 (sublane) suffices for tiny batches.
    align = 64 if B >= 128 else 8
    tb = _round_up(min(batch_tile, B), align)
    # v7x has 2 TensorCores: keep >= 2 grid tiles when the batch allows it
    if B >= 2 * align:
        tb = min(tb, _round_up((B + 1) // 2, align))
    # prefer an aligned tile that divides B exactly (skips the HBM pad copy)
    cand = tb
    while cand >= align:
        if B % cand == 0:
            return cand
        cand -= align
    return tb


# ---------------------------------------------------------------------------
# Forward pass: one fused pallas_call, gridded over batch tiles
# ---------------------------------------------------------------------------
def cell_transformer_forward(params, gene, morph, spatial, *,
                             batch_tile=256,
                             vmem_limit_bytes=48 * 1024 * 1024):
    # v6e: batch_tile=512 / vmem_limit ~96 MiB is fine (128 MiB physical VMEM);
    # v7x: keep batch_tile <= 256 and vmem_limit <= ~56 MiB (64 MiB physical);
    # v5e: anything above ~128 needs vmem_limit raised above the 16 MiB default.
    B = gene.shape[0]
    tb = _choose_batch_tile(B, batch_tile)
    b_pad = _round_up(B, tb)

    # stream the two wide inputs in bf16 (halves dominant HBM DMA + input VMEM)
    gene = gene.astype(jnp.bfloat16)
    morph = morph.astype(jnp.bfloat16)
    spatial = spatial.astype(jnp.float32)

    if b_pad != B:
        # TODO(synk): replace with an in-kernel ragged-row mask to avoid the HBM pad copy.
        pad = b_pad - B
        gene = jnp.pad(gene, ((0, pad), (0, 0)))
        morph = jnp.pad(morph, ((0, pad), (0, 0)))
        spatial = jnp.pad(spatial, ((0, pad), (0, 0)))
    num_tiles = b_pad // tb

    # block-diagonal head selector hsel[d,e] = 1 iff head(d) == head(e); bf16-exact
    head_id = jnp.arange(D_MODEL, dtype=jnp.int32) // HEAD_DIM
    hsel = (head_id[:, None] == head_id[None, :]).astype(jnp.bfloat16)

    weights = (params['wg'], params['bg'], params['wm'], params['bm'],
               params['ws1'], params['bs1'], params['ws2'], params['bs2'],
               params['cls'], hsel,
               params['wqkv'], params['bqkv'], params['wo'], params['bo'],
               params['w1'], params['b1'], params['w2'], params['b2'],
               params['ln1w'], params['ln1b'], params['ln2w'], params['ln2b'],
               params['cls_lnw'], params['cls_lnb'], params['wc'], params['bc'])

    def tile_spec(feat):
        return pl.BlockSpec((tb, feat), lambda i: (i, 0))

    def resident_spec(arr):
        # full-array block, constant index map -> fetched once, stays VMEM-resident
        # (pipeline_mode=pl.Buffered(1) would drop the 2nd ~2 MiB weight buffer;
        #  left at the default for wider jax-version compatibility)
        return pl.BlockSpec(arr.shape, lambda i, _n=arr.ndim: (0,) * _n)

    grid_spec = pltpu.PrefetchScalarGridSpec(
        num_scalar_prefetch=0,
        grid=(num_tiles,),
        in_specs=[tile_spec(GENE_DIM), tile_spec(MORPH_DIM), tile_spec(SPATIAL_DIM)]
                + [resident_spec(a) for a in weights],
        out_specs=pl.BlockSpec((tb, OUT_PAD), lambda i: (i, 0)),
    )

    logits_pad = pl.pallas_call(
        fused_kernel,
        out_shape=jax.ShapeDtypeStruct((b_pad, OUT_PAD), jnp.float32),
        grid_spec=grid_spec,
        compiler_params=pltpu.CompilerParams(
            dimension_semantics=("parallel",),
            vmem_limit_bytes=vmem_limit_bytes),
    )(gene, morph, spatial, *weights)

    return logits_pad[:B, :NUM_CLASSES]


if __name__ == "__main__":
    key = jax.random.PRNGKey(0)
    kp, kg, km, ks = jax.random.split(key, 4)

    params = init_params(kp)

    B = 2
    gene = jax.random.normal(kg, (B, GENE_DIM), jnp.float32)
    morph = jax.random.normal(km, (B, MORPH_DIM), jnp.float32)
    spatial = jax.random.normal(ks, (B, SPATIAL_DIM), jnp.float32)

    logits = cell_transformer_forward(params, gene, morph, spatial)
    logits = jax.block_until_ready(logits)
    assert logits.shape == (B, NUM_CLASSES)
    assert bool(jnp.all(jnp.isfinite(logits)))
    print("KERNEL_OK")
</pallas_src>

<mosaic_0001>
module attributes {stable_mosaic.version = 11 : i64} {
  func.func @fused_kernel(%arg0: i32, %arg1: memref<8x512xbf16, #tpu.memory_space<vmem>>, %arg2: memref<8x1536xbf16, #tpu.memory_space<vmem>>, %arg3: memref<8x2xf32, #tpu.memory_space<vmem>>, %arg4: memref<512x128xbf16, #tpu.memory_space<vmem>>, %arg5: memref<1x128xf32, #tpu.memory_space<vmem>>, %arg6: memref<1536x128xbf16, #tpu.memory_space<vmem>>, %arg7: memref<1x128xf32, #tpu.memory_space<vmem>>, %arg8: memref<2x128xf32, #tpu.memory_space<vmem>>, %arg9: memref<1x128xf32, #tpu.memory_space<vmem>>, %arg10: memref<128x128xbf16, #tpu.memory_space<vmem>>, %arg11: memref<1x128xf32, #tpu.memory_space<vmem>>, %arg12: memref<1x128xf32, #tpu.memory_space<vmem>>, %arg13: memref<128x128xbf16, #tpu.memory_space<vmem>>, %arg14: memref<4x128x384xbf16, #tpu.memory_space<vmem>>, %arg15: memref<4x1x384xf32, #tpu.memory_space<vmem>>, %arg16: memref<4x128x128xbf16, #tpu.memory_space<vmem>>, %arg17: memref<4x1x128xf32, #tpu.memory_space<vmem>>, %arg18: memref<4x128x512xbf16, #tpu.memory_space<vmem>>, %arg19: memref<4x1x512xf32, #tpu.memory_space<vmem>>, %arg20: memref<4x512x128xbf16, #tpu.memory_space<vmem>>, %arg21: memref<4x1x128xf32, #tpu.memory_space<vmem>>, %arg22: memref<4x1x128xf32, #tpu.memory_space<vmem>>, %arg23: memref<4x1x128xf32, #tpu.memory_space<vmem>>, %arg24: memref<4x1x128xf32, #tpu.memory_space<vmem>>, %arg25: memref<4x1x128xf32, #tpu.memory_space<vmem>>, %arg26: memref<1x128xf32, #tpu.memory_space<vmem>>, %arg27: memref<1x128xf32, #tpu.memory_space<vmem>>, %arg28: memref<128x128xf32, #tpu.memory_space<vmem>>, %arg29: memref<1x128xf32, #tpu.memory_space<vmem>>, %arg30: memref<8x128xf32, #tpu.memory_space<vmem>>) attributes {dimension_semantics = [#tpu.dimension_semantics<parallel>], iteration_bounds = array<i64: 1>, scalar_prefetch = 0 : i64, scratch_operands = 0 : i64, tpu.core_type = #tpu.core_type<tc>, window_params = [{transform_indices = @transform_0, window_bounds = array<i64: 8, 512>}, {transform_indices = @transform_1, window_bounds = array<i64: 8, 1536>}, {transform_indices = @transform_2, window_bounds = array<i64: 8, 2>}, {pipeline_mode = #tpu.pipeline_mode<synchronous>, transform_indices = @transform_3, window_bounds = array<i64: 512, 128>}, {pipeline_mode = #tpu.pipeline_mode<synchronous>, transform_indices = @transform_4, window_bounds = array<i64: 1, 128>}, {pipeline_mode = #tpu.pipeline_mode<synchronous>, transform_indices = @transform_5, window_bounds = array<i64: 1536, 128>}, {pipeline_mode = #tpu.pipeline_mode<synchronous>, transform_indices = @transform_6, window_bounds = array<i64: 1, 128>}, {pipeline_mode = #tpu.pipeline_mode<synchronous>, transform_indices = @transform_7, window_bounds = array<i64: 2, 128>}, {pipeline_mode = #tpu.pipeline_mode<synchronous>, transform_indices = @transform_8, window_bounds = array<i64: 1, 128>}, {pipeline_mode = #tpu.pipeline_mode<synchronous>, transform_indices = @transform_9, window_bounds = array<i64: 128, 128>}, {pipeline_mode = #tpu.pipeline_mode<synchronous>, transform_indices = @transform_10, window_bounds = array<i64: 1, 128>}, {pipeline_mode = #tpu.pipeline_mode<synchronous>, transform_indices = @transform_11, window_bounds = array<i64: 1, 128>}, {pipeline_mode = #tpu.pipeline_mode<synchronous>, transform_indices = @transform_12, window_bounds = array<i64: 128, 128>}, {pipeline_mode = #tpu.pipeline_mode<synchronous>, transform_indices = @transform_13, window_bounds = array<i64: 4, 128, 384>}, {pipeline_mode = #tpu.pipeline_mode<synchronous>, transform_indices = @transform_14, window_bounds = array<i64: 4, 1, 384>}, {pipeline_mode = #tpu.pipeline_mode<synchronous>, transform_indices = @transform_15, window_bounds = array<i64: 4, 128, 128>}, {pipeline_mode = #tpu.pipeline_mode<synchronous>, transform_indices = @transform_16, window_bounds = array<i64: 4, 1, 128>}, {pipeline_mode = #tpu.pipeline_mode<synchronous>, transform_indices = @transform_17, window_bounds = array<i64: 4, 128, 512>}, {pipeline_mode = #tpu.pipeline_mode<synchronous>, transform_indices = @transform_18, window_bounds = array<i64: 4, 1, 512>}, {pipeline_mode = #tpu.pipeline_mode<synchronous>, transform_indices = @transform_19, window_bounds = array<i64: 4, 512, 128>}, {pipeline_mode = #tpu.pipeline_mode<synchronous>, transform_indices = @transform_20, window_bounds = array<i64: 4, 1, 128>}, {pipeline_mode = #tpu.pipeline_mode<synchronous>, transform_indices = @transform_21, window_bounds = array<i64: 4, 1, 128>}, {pipeline_mode = #tpu.pipeline_mode<synchronous>, transform_indices = @transform_22, window_bounds = array<i64: 4, 1, 128>}, {pipeline_mode = #tpu.pipeline_mode<synchronous>, transform_indices = @transform_23, window_bounds = array<i64: 4, 1, 128>}, {pipeline_mode = #tpu.pipeline_mode<synchronous>, transform_indices = @transform_24, window_bounds = array<i64: 4, 1, 128>}, {pipeline_mode = #tpu.pipeline_mode<synchronous>, transform_indices = @transform_25, window_bounds = array<i64: 1, 128>}, {pipeline_mode = #tpu.pipeline_mode<synchronous>, transform_indices = @transform_26, window_bounds = array<i64: 1, 128>}, {pipeline_mode = #tpu.pipeline_mode<synchronous>, transform_indices = @transform_27, window_bounds = array<i64: 128, 128>}, {pipeline_mode = #tpu.pipeline_mode<synchronous>, transform_indices = @transform_28, window_bounds = array<i64: 1, 128>}, {transform_indices = @transform_29, window_bounds = array<i64: 8, 128>}]} {
    %c0 = arith.constant 0 : index
    %c0_0 = arith.constant 0 : index
    %0 = vector.load %arg1[%c0, %c0_0] : memref<8x512xbf16, #tpu.memory_space<vmem>>, vector<8x512xbf16>
    %c0_1 = arith.constant 0 : index
    %c0_2 = arith.constant 0 : index
    %1 = vector.load %arg4[%c0_1, %c0_2] : memref<512x128xbf16, #tpu.memory_space<vmem>>, vector<512x128xbf16>
    %cst = arith.constant dense<0.000000e+00> : vector<8x128xf32>
    %2 = tpu.matmul %0, %1, %cst {dimension_numbers = #tpu.dot_dimension_numbers<[1], [0], [0], [1], [0, 0, 1, 1], [], []>} : vector<8x512xbf16>, vector<512x128xbf16>, vector<8x128xf32> -> vector<8x128xf32>
    %c0_3 = arith.constant 0 : index
    %c0_4 = arith.constant 0 : index
    %3 = vector.load %arg5[%c0_3, %c0_4] : memref<1x128xf32, #tpu.memory_space<vmem>>, vector<1x128xf32>
    %4 = vector.broadcast %3 : vector<1x128xf32> to vector<8x128xf32>
    %5 = arith.addf %2, %4 : vector<8x128xf32>
    %c0_5 = arith.constant 0 : index
    %c0_6 = arith.constant 0 : index
    %6 = vector.load %arg2[%c0_5, %c0_6] : memref<8x1536xbf16, #tpu.memory_space<vmem>>, vector<8x1536xbf16>
    %c0_7 = arith.constant 0 : index
    %c0_8 = arith.constant 0 : index
    %7 = vector.load %arg6[%c0_7, %c0_8] : memref<1536x128xbf16, #tpu.memory_space<vmem>>, vector<1536x128xbf16>
    %cst_9 = arith.constant dense<0.000000e+00> : vector<8x128xf32>
    %8 = tpu.matmul %6, %7, %cst_9 {dimension_numbers = #tpu.dot_dimension_numbers<[1], [0], [0], [1], [0, 0, 1, 1], [], []>} : vector<8x1536xbf16>, vector<1536x128xbf16>, vector<8x128xf32> -> vector<8x128xf32>
    %c0_10 = arith.constant 0 : index
    %c0_11 = arith.constant 0 : index
    %9 = vector.load %arg7[%c0_10, %c0_11] : memref<1x128xf32, #tpu.memory_space<vmem>>, vector<1x128xf32>
    %10 = vector.broadcast %9 : vector<1x128xf32> to vector<8x128xf32>
    %11 = arith.addf %8, %10 : vector<8x128xf32>
    %c0_12 = arith.constant 0 : index
    %c0_13 = arith.constant 0 : index
    %12 = vector.load %arg3[%c0_12, %c0_13] : memref<8x2xf32, #tpu.memory_space<vmem>>, vector<8x1xf32>
    %c0_14 = arith.constant 0 : index
    %c0_15 = arith.constant 0 : index
    %13 = vector.load %arg8[%c0_14, %c0_15] : memref<2x128xf32, #tpu.memory_space<vmem>>, vector<1x128xf32>
    %14 = vector.broadcast %12 : vector<8x1xf32> to vector<8x128xf32>
    %15 = vector.broadcast %13 : vector<1x128xf32> to vector<8x128xf32>
    %16 = arith.mulf %14, %15 : vector<8x128xf32>
    %c0_16 = arith.constant 0 : index
    %c1 = arith.constant 1 : index
    %17 = vector.load %arg3[%c0_16, %c1] : memref<8x2xf32, #tpu.memory_space<vmem>>, vector<8x1xf32>
    %c1_17 = arith.constant 1 : index
    %c0_18 = arith.constant 0 : index
    %18 = vector.load %arg8[%c1_17, %c0_18] : memref<2x128xf32, #tpu.memory_space<vmem>>, vector<1x128xf32>
    %19 = vector.broadcast %17 : vector<8x1xf32> to vector<8x128xf32>
    %20 = vector.broadcast %18 : vector<1x128xf32> to vector<8x128xf32>
    %21 = arith.mulf %19, %20 : vector<8x128xf32>
    %22 = arith.addf %16, %21 : vector<8x128xf32>
    %c0_19 = arith.constant 0 : index
    %c0_20 = arith.constant 0 : index
    %23 = vector.load %arg9[%c0_19, %c0_20] : memref<1x128xf32, #tpu.memory_space<vmem>>, vector<1x128xf32>
    %24 = vector.broadcast %23 : vector<1x128xf32> to vector<8x128xf32>
    %25 = arith.addf %22, %24 : vector<8x128xf32>
    %cst_21 = arith.constant 5.000000e-01 : f32
    %26 = vector.broadcast %cst_21 : f32 to vector<8x128xf32>
    %27 = arith.mulf %26, %25 : vector<8x128xf32>
    %cst_22 = arith.constant 0.707106769 : f32
    %28 = vector.broadcast %cst_22 : f32 to vector<8x128xf32>
    %29 = arith.mulf %25, %28 : vector<8x128xf32>
    %cst_23 = arith.constant 0.000000e+00 : f32
    %30 = vector.broadcast %cst_23 : f32 to vector<8x128xf32>
    %31 = arith.cmpf oge, %29, %30 : vector<8x128xf32>
    %cst_24 = arith.constant 1.000000e+00 : f32
    %cst_25 = arith.constant -1.000000e+00 : f32
    %32 = vector.broadcast %cst_24 : f32 to vector<8x128xf32>
    %33 = vector.broadcast %cst_25 : f32 to vector<8x128xf32>
    %34 = arith.select %31, %32, %33 : vector<8x128xi1>, vector<8x128xf32>
    %35 = math.absf %29 : vector<8x128xf32>
    %cst_26 = arith.constant 0.327591091 : f32
    %36 = vector.broadcast %cst_26 : f32 to vector<8x128xf32>
    %37 = arith.mulf %36, %35 : vector<8x128xf32>
    %cst_27 = arith.constant 1.000000e+00 : f32
    %38 = vector.broadcast %cst_27 : f32 to vector<8x128xf32>
    %39 = arith.addf %38, %37 : vector<8x128xf32>
    %cst_28 = arith.constant 1.000000e+00 : f32
    %40 = vector.broadcast %cst_28 : f32 to vector<8x128xf32>
    %41 = arith.divf %40, %39 : vector<8x128xf32>
    %cst_29 = arith.constant 1.06140542 : f32
    %42 = vector.broadcast %cst_29 : f32 to vector<8x128xf32>
    %43 = arith.mulf %42, %41 : vector<8x128xf32>
    %cst_30 = arith.constant -1.45315206 : f32
    %44 = vector.broadcast %cst_30 : f32 to vector<8x128xf32>
    %45 = arith.addf %43, %44 : vector<8x128xf32>
    %46 = arith.mulf %45, %41 : vector<8x128xf32>
    %cst_31 = arith.constant 1.42141378 : f32
    %47 = vector.broadcast %cst_31 : f32 to vector<8x128xf32>
    %48 = arith.addf %46, %47 : vector<8x128xf32>
    %49 = arith.mulf %48, %41 : vector<8x128xf32>
    %cst_32 = arith.constant -0.284496725 : f32
    %50 = vector.broadcast %cst_32 : f32 to vector<8x128xf32>
    %51 = arith.addf %49, %50 : vector<8x128xf32>
    %52 = arith.mulf %51, %41 : vector<8x128xf32>
    %cst_33 = arith.constant 0.254829586 : f32
    %53 = vector.broadcast %cst_33 : f32 to vector<8x128xf32>
    %54 = arith.addf %52, %53 : vector<8x128xf32>
    %55 = arith.mulf %54, %41 : vector<8x128xf32>
    %cst_34 = arith.constant 0.000000e+00 : f32
    %56 = vector.broadcast %cst_34 : f32 to vector<8x128xf32>
    %57 = arith.subf %56, %35 : vector<8x128xf32>
    %58 = arith.mulf %57, %35 : vector<8x128xf32>
    %59 = math.exp %58 : vector<8x128xf32>
    %60 = arith.mulf %55, %59 : vector<8x128xf32>
    %cst_35 = arith.constant 1.000000e+00 : f32
    %61 = vector.broadcast %cst_35 : f32 to vector<8x128xf32>
    %62 = arith.subf %61, %60 : vector<8x128xf32>
    %63 = arith.mulf %34, %62 : vector<8x128xf32>
    %cst_36 = arith.constant 1.000000e+00 : f32
    %64 = vector.broadcast %cst_36 : f32 to vector<8x128xf32>
    %65 = arith.addf %64, %63 : vector<8x128xf32>
    %66 = arith.mulf %27, %65 : vector<8x128xf32>
    %67 = arith.truncf %66 : vector<8x128xf32> to vector<8x128xbf16>
    %c0_37 = arith.constant 0 : index
    %c0_38 = arith.constant 0 : index
    %68 = vector.load %arg10[%c0_37, %c0_38] : memref<128x128xbf16, #tpu.memory_space<vmem>>, vector<128x128xbf16>
    %cst_39 = arith.constant dense<0.000000e+00> : vector<8x128xf32>
    %69 = tpu.matmul %67, %68, %cst_39 {dimension_numbers = #tpu.dot_dimension_numbers<[1], [0], [0], [1], [0, 0, 1, 1], [], []>} : vector<8x128xbf16>, vector<128x128xbf16>, vector<8x128xf32> -> vector<8x128xf32>
    %c0_40 = arith.constant 0 : index
    %c0_41 = arith.constant 0 : index
    %70 = vector.load %arg11[%c0_40, %c0_41] : memref<1x128xf32, #tpu.memory_space<vmem>>, vector<1x128xf32>
    %71 = vector.broadcast %70 : vector<1x128xf32> to vector<8x128xf32>
    %72 = arith.addf %69, %71 : vector<8x128xf32>
    %c0_42 = arith.constant 0 : index
    %c0_43 = arith.constant 0 : index
    %73 = vector.load %arg12[%c0_42, %c0_43] : memref<1x128xf32, #tpu.memory_space<vmem>>, vector<1x128xf32>
    %74 = vector.shape_cast %73 : vector<1x128xf32> to vector<1x128xf32>
    %75 = vector.broadcast %74 : vector<1x128xf32> to vector<8x128xf32>
    %76 = tpu.concatenate %75, %5, %11, %72 in 0 : vector<8x128xf32>, vector<8x128xf32>, vector<8x128xf32>, vector<8x128xf32> -> vector<32x128xf32>
    %c0_44 = arith.constant 0 : index
    %c0_45 = arith.constant 0 : index
    %77 = vector.load %arg13[%c0_44, %c0_45] : memref<128x128xbf16, #tpu.memory_space<vmem>>, vector<128x128xbf16>
    %c0_i32 = arith.constant 0 : i32
    %c4_i32 = arith.constant 4 : i32
    %78 = arith.addi %c0_i32, %c4_i32 : i32
    %c1_i32 = arith.constant 1 : i32
    %79 = scf.for %arg31 = %c0_i32 to %78 step %c1_i32 iter_args(%arg32 = %76) -> (vector<32x128xf32>)  : i32 {
      %111 = arith.truncf %arg32 : vector<32x128xf32> to vector<32x128xbf16>
      %112 = arith.index_cast %arg31 : i32 to index
      %c0_63 = arith.constant 0 : index
      %c0_64 = arith.constant 0 : index
      %113 = vector.load %arg14[%112, %c0_63, %c0_64] : memref<4x128x384xbf16, #tpu.memory_space<vmem>>, vector<1x128x384xbf16>
      %114 = vector.shape_cast %113 : vector<1x128x384xbf16> to vector<128x384xbf16>
      %cst_65 = arith.constant dense<0.000000e+00> : vector<32x384xf32>
      %115 = tpu.matmul %111, %114, %cst_65 {dimension_numbers = #tpu.dot_dimension_numbers<[1], [0], [0], [1], [0, 0, 1, 1], [], []>} : vector<32x128xbf16>, vector<128x384xbf16>, vector<32x384xf32> -> vector<32x384xf32>
      %116 = arith.index_cast %arg31 : i32 to index
      %c0_66 = arith.constant 0 : index
      %c0_67 = arith.constant 0 : index
      %117 = vector.load %arg15[%116, %c0_66, %c0_67] : memref<4x1x384xf32, #tpu.memory_space<vmem>>, vector<1x1x384xf32>
      %118 = vector.shape_cast %117 : vector<1x1x384xf32> to vector<1x384xf32>
      %119 = vector.broadcast %118 : vector<1x384xf32> to vector<32x384xf32>
      %120 = arith.addf %115, %119 : vector<32x384xf32>
      %121 = vector.extract_strided_slice %120 {offsets = [0, 0], sizes = [32, 128], strides = [1, 1]} : vector<32x384xf32> to vector<32x128xf32>
      %cst_68 = arith.constant 2.500000e-01 : f32
      %122 = vector.broadcast %cst_68 : f32 to vector<32x128xf32>
      %123 = arith.mulf %121, %122 : vector<32x128xf32>
      %124 = vector.shape_cast %123 : vector<32x128xf32> to vector<4x8x128xf32>
      %125 = vector.extract_strided_slice %120 {offsets = [0, 128], sizes = [32, 128], strides = [1, 1]} : vector<32x384xf32> to vector<32x128xf32>
      %126 = vector.shape_cast %125 : vector<32x128xf32> to vector<4x8x128xf32>
      %127 = vector.extract_strided_slice %120 {offsets = [0, 256], sizes = [32, 128], strides = [1, 1]} : vector<32x384xf32> to vector<32x128xf32>
      %128 = vector.shape_cast %127 : vector<32x128xf32> to vector<4x8x128xf32>
      %129 = vector.shape_cast %124 : vector<4x8x128xf32> to vector<1x4x8x128xf32>
      %130 = vector.shape_cast %126 : vector<4x8x128xf32> to vector<4x1x8x128xf32>
      %131 = vector.broadcast %129 : vector<1x4x8x128xf32> to vector<4x4x8x128xf32>
      %132 = vector.broadcast %130 : vector<4x1x8x128xf32> to vector<4x4x8x128xf32>
      %133 = arith.mulf %131, %132 : vector<4x4x8x128xf32>
      %134 = arith.truncf %133 : vector<4x4x8x128xf32> to vector<4x4x8x128xbf16>
      %135 = vector.shape_cast %134 : vector<4x4x8x128xbf16> to vector<128x128xbf16>
      %cst_69 = arith.constant dense<0.000000e+00> : vector<128x128xf32>
      %136 = tpu.matmul %135, %77, %cst_69 {dimension_numbers = #tpu.dot_dimension_numbers<[1], [0], [0], [1], [0, 0, 1, 1], [], []>} : vector<128x128xbf16>, vector<128x128xbf16>, vector<128x128xf32> -> vector<128x128xf32>
      %137 = vector.shape_cast %136 : vector<128x128xf32> to vector<4x4x8x128xf32>
      %cst_70 = arith.constant dense<0xFF800000> : vector<4x8x128xf32>
      %138 = vector.multi_reduction <maximumf>, %137, %cst_70 [0] : vector<4x4x8x128xf32> to vector<4x8x128xf32>
      %139 = vector.shape_cast %138 : vector<4x8x128xf32> to vector<1x4x8x128xf32>
      %140 = vector.broadcast %139 : vector<1x4x8x128xf32> to vector<4x4x8x128xf32>
      %141 = arith.subf %137, %140 : vector<4x4x8x128xf32>
      %142 = math.exp %141 : vector<4x4x8x128xf32>
      %cst_71 = arith.constant dense<0.000000e+00> : vector<4x8x128xf32>
      %143 = vector.multi_reduction <add>, %142, %cst_71 [0] : vector<4x4x8x128xf32> to vector<4x8x128xf32>
      %144 = vector.shape_cast %143 : vector<4x8x128xf32> to vector<1x4x8x128xf32>
      %145 = tpu.reciprocal %144 {approx = true} : vector<1x4x8x128xf32> -> vector<1x4x8x128xf32>
      %146 = vector.broadcast %145 : vector<1x4x8x128xf32> to vector<4x4x8x128xf32>
      %147 = arith.mulf %142, %146 : vector<4x4x8x128xf32>
      %148 = vector.shape_cast %128 : vector<4x8x128xf32> to vector<4x1x8x128xf32>
      %149 = vector.broadcast %148 : vector<4x1x8x128xf32> to vector<4x4x8x128xf32>
      %150 = arith.mulf %147, %149 : vector<4x4x8x128xf32>
      %cst_72 = arith.constant dense<0.000000e+00> : vector<4x8x128xf32>
      %151 = vector.multi_reduction <add>, %150, %cst_72 [0] : vector<4x4x8x128xf32> to vector<4x8x128xf32>
      %152 = vector.shape_cast %151 : vector<4x8x128xf32> to vector<32x128xf32>
      %153 = arith.truncf %152 : vector<32x128xf32> to vector<32x128xbf16>
      %154 = arith.index_cast %arg31 : i32 to index
      %c0_73 = arith.constant 0 : index
      %c0_74 = arith.constant 0 : index
      %155 = vector.load %arg16[%154, %c0_73, %c0_74] : memref<4x128x128xbf16, #tpu.memory_space<vmem>>, vector<1x128x128xbf16>
      %156 = vector.shape_cast %155 : vector<1x128x128xbf16> to vector<128x128xbf16>
      %cst_75 = arith.constant dense<0.000000e+00> : vector<32x128xf32>
      %157 = tpu.matmul %153, %156, %cst_75 {dimension_numbers = #tpu.dot_dimension_numbers<[1], [0], [0], [1], [0, 0, 1, 1], [], []>} : vector<32x128xbf16>, vector<128x128xbf16>, vector<32x128xf32> -> vector<32x128xf32>
      %158 = arith.index_cast %arg31 : i32 to index
      %c0_76 = arith.constant 0 : index
      %c0_77 = arith.constant 0 : index
      %159 = vector.load %arg17[%158, %c0_76, %c0_77] : memref<4x1x128xf32, #tpu.memory_space<vmem>>, vector<1x1x128xf32>
      %160 = vector.shape_cast %159 : vector<1x1x128xf32> to vector<1x128xf32>
      %161 = vector.broadcast %160 : vector<1x128xf32> to vector<32x128xf32>
      %162 = arith.addf %157, %161 : vector<32x128xf32>
      %163 = arith.addf %arg32, %162 : vector<32x128xf32>
      %164 = arith.index_cast %arg31 : i32 to index
      %c0_78 = arith.constant 0 : index
      %c0_79 = arith.constant 0 : index
      %165 = vector.load %arg22[%164, %c0_78, %c0_79] : memref<4x1x128xf32, #tpu.memory_space<vmem>>, vector<1x1x128xf32>
      %166 = vector.shape_cast %165 : vector<1x1x128xf32> to vector<1x128xf32>
      %167 = arith.index_cast %arg31 : i32 to index
      %c0_80 = arith.constant 0 : index
      %c0_81 = arith.constant 0 : index
      %168 = vector.load %arg23[%167, %c0_80, %c0_81] : memref<4x1x128xf32, #tpu.memory_space<vmem>>, vector<1x1x128xf32>
      %169 = vector.shape_cast %168 : vector<1x1x128xf32> to vector<1x128xf32>
      %cst_82 = arith.constant dense<0.000000e+00> : vector<32xf32>
      %170 = vector.multi_reduction <add>, %163, %cst_82 [1] : vector<32x128xf32> to vector<32xf32>
      %171 = vector.shape_cast %170 : vector<32xf32> to vector<32x1xf32>
      %cst_83 = arith.constant 1.280000e+02 : f32
      %172 = vector.broadcast %cst_83 : f32 to vector<32x1xf32>
      %173 = arith.divf %171, %172 : vector<32x1xf32>
      %174 = vector.broadcast %173 : vector<32x1xf32> to vector<32x128xf32>
      %175 = arith.subf %163, %174 : vector<32x128xf32>
      %176 = arith.mulf %175, %175 : vector<32x128xf32>
      %cst_84 = arith.constant dense<0.000000e+00> : vector<32xf32>
      %177 = vector.multi_reduction <add>, %176, %cst_84 [1] : vector<32x128xf32> to vector<32xf32>
      %178 = vector.shape_cast %177 : vector<32xf32> to vector<32x1xf32>
      %cst_85 = arith.constant 1.280000e+02 : f32
      %179 = vector.broadcast %cst_85 : f32 to vector<32x1xf32>
      %180 = arith.divf %178, %179 : vector<32x1xf32>
      %181 = vector.broadcast %173 : vector<32x1xf32> to vector<32x128xf32>
      %182 = arith.subf %163, %181 : vector<32x128xf32>
      %cst_86 = arith.constant 9.99999974E-6 : f32
      %183 = vector.broadcast %cst_86 : f32 to vector<32x1xf32>
      %184 = arith.addf %180, %183 : vector<32x1xf32>
      %185 = math.rsqrt %184 : vector<32x1xf32>
      %186 = vector.broadcast %185 : vector<32x1xf32> to vector<32x128xf32>
      %187 = arith.mulf %182, %186 : vector<32x128xf32>
      %188 = vector.broadcast %166 : vector<1x128xf32> to vector<32x128xf32>
      %189 = arith.mulf %187, %188 : vector<32x128xf32>
      %190 = vector.broadcast %169 : vector<1x128xf32> to vector<32x128xf32>
      %191 = arith.addf %189, %190 : vector<32x128xf32>
      %192 = arith.truncf %191 : vector<32x128xf32> to vector<32x128xbf16>
      %193 = arith.index_cast %arg31 : i32 to index
      %c0_87 = arith.constant 0 : index
      %c0_88 = arith.constant 0 : index
      %194 = vector.load %arg18[%193, %c0_87, %c0_88] : memref<4x128x512xbf16, #tpu.memory_space<vmem>>, vector<1x128x512xbf16>
      %195 = vector.shape_cast %194 : vector<1x128x512xbf16> to vector<128x512xbf16>
      %cst_89 = arith.constant dense<0.000000e+00> : vector<32x512xf32>
      %196 = tpu.matmul %192, %195, %cst_89 {dimension_numbers = #tpu.dot_dimension_numbers<[1], [0], [0], [1], [0, 0, 1, 1], [], []>} : vector<32x128xbf16>, vector<128x512xbf16>, vector<32x512xf32> -> vector<32x512xf32>
      %197 = arith.index_cast %arg31 : i32 to index
      %c0_90 = arith.constant 0 : index
      %c0_91 = arith.constant 0 : index
      %198 = vector.load %arg19[%197, %c0_90, %c0_91] : memref<4x1x512xf32, #tpu.memory_space<vmem>>, vector<1x1x512xf32>
      %199 = vector.shape_cast %198 : vector<1x1x512xf32> to vector<1x512xf32>
      %200 = vector.broadcast %199 : vector<1x512xf32> to vector<32x512xf32>
      %201 = arith.addf %196, %200 : vector<32x512xf32>
      %cst_92 = arith.constant 0.000000e+00 : f32
      %202 = vector.broadcast %cst_92 : f32 to vector<32x512xf32>
      %203 = arith.maximumf %201, %202 : vector<32x512xf32>
      %204 = arith.truncf %203 : vector<32x512xf32> to vector<32x512xbf16>
      %205 = arith.index_cast %arg31 : i32 to index
      %c0_93 = arith.constant 0 : index
      %c0_94 = arith.constant 0 : index
      %206 = vector.load %arg20[%205, %c0_93, %c0_94] : memref<4x512x128xbf16, #tpu.memory_space<vmem>>, vector<1x512x128xbf16>
      %207 = vector.shape_cast %206 : vector<1x512x128xbf16> to vector<512x128xbf16>
      %cst_95 = arith.constant dense<0.000000e+00> : vector<32x128xf32>
      %208 = tpu.matmul %204, %207, %cst_95 {dimension_numbers = #tpu.dot_dimension_numbers<[1], [0], [0], [1], [0, 0, 1, 1], [], []>} : vector<32x512xbf16>, vector<512x128xbf16>, vector<32x128xf32> -> vector<32x128xf32>
      %209 = arith.index_cast %arg31 : i32 to index
      %c0_96 = arith.constant 0 : index
      %c0_97 = arith.constant 0 : index
      %210 = vector.load %arg21[%209, %c0_96, %c0_97] : memref<4x1x128xf32, #tpu.memory_space<vmem>>, vector<1x1x128xf32>
      %211 = vector.shape_cast %210 : vector<1x1x128xf32> to vector<1x128xf32>
      %212 = vector.broadcast %211 : vector<1x128xf32> to vector<32x128xf32>
      %213 = arith.addf %208, %212 : vector<32x128xf32>
      %214 = arith.addf %191, %213 : vector<32x128xf32>
      %215 = arith.index_cast %arg31 : i32 to index
      %c0_98 = arith.constant 0 : index
      %c0_99 = arith.constant 0 : index
      %216 = vector.load %arg24[%215, %c0_98, %c0_99] : memref<4x1x128xf32, #tpu.memory_space<vmem>>, vector<1x1x128xf32>
      %217 = vector.shape_cast %216 : vector<1x1x128xf32> to vector<1x128xf32>
      %218 = arith.index_cast %arg31 : i32 to index
      %c0_100 = arith.constant 0 : index
      %c0_101 = arith.constant 0 : index
      %219 = vector.load %arg25[%218, %c0_100, %c0_101] : memref<4x1x128xf32, #tpu.memory_space<vmem>>, vector<1x1x128xf32>
      %220 = vector.shape_cast %219 : vector<1x1x128xf32> to vector<1x128xf32>
      %cst_102 = arith.constant dense<0.000000e+00> : vector<32xf32>
      %221 = vector.multi_reduction <add>, %214, %cst_102 [1] : vector<32x128xf32> to vector<32xf32>
      %222 = vector.shape_cast %221 : vector<32xf32> to vector<32x1xf32>
      %cst_103 = arith.constant 1.280000e+02 : f32
      %223 = vector.broadcast %cst_103 : f32 to vector<32x1xf32>
      %224 = arith.divf %222, %223 : vector<32x1xf32>
      %225 = vector.broadcast %224 : vector<32x1xf32> to vector<32x128xf32>
      %226 = arith.subf %214, %225 : vector<32x128xf32>
      %227 = arith.mulf %226, %226 : vector<32x128xf32>
      %cst_104 = arith.constant dense<0.000000e+00> : vector<32xf32>
      %228 = vector.multi_reduction <add>, %227, %cst_104 [1] : vector<32x128xf32> to vector<32xf32>
      %229 = vector.shape_cast %228 : vector<32xf32> to vector<32x1xf32>
      %cst_105 = arith.constant 1.280000e+02 : f32
      %230 = vector.broadcast %cst_105 : f32 to vector<32x1xf32>
      %231 = arith.divf %229, %230 : vector<32x1xf32>
      %232 = vector.broadcast %224 : vector<32x1xf32> to vector<32x128xf32>
      %233 = arith.subf %214, %232 : vector<32x128xf32>
      %cst_106 = arith.constant 9.99999974E-6 : f32
      %234 = vector.broadcast %cst_106 : f32 to vector<32x1xf32>
      %235 = arith.addf %231, %234 : vector<32x1xf32>
      %236 = math.rsqrt %235 : vector<32x1xf32>
      %237 = vector.broadcast %236 : vector<32x1xf32> to vector<32x128xf32>
      %238 = arith.mulf %233, %237 : vector<32x128xf32>
      %239 = vector.broadcast %217 : vector<1x128xf32> to vector<32x128xf32>
      %240 = arith.mulf %238, %239 : vector<32x128xf32>
      %241 = vector.broadcast %220 : vector<1x128xf32> to vector<32x128xf32>
      %242 = arith.addf %240, %241 : vector<32x128xf32>
      scf.yield %242 : vector<32x128xf32>
    }
    %c4_i32_46 = arith.constant 4 : i32
    %80 = vector.extract_strided_slice %79 {offsets = [0, 0], sizes = [8, 128], strides = [1, 1]} : vector<32x128xf32> to vector<8x128xf32>
    %c0_47 = arith.constant 0 : index
    %c0_48 = arith.constant 0 : index
    %81 = vector.load %arg26[%c0_47, %c0_48] : memref<1x128xf32, #tpu.memory_space<vmem>>, vector<1x128xf32>
    %c0_49 = arith.constant 0 : index
    %c0_50 = arith.constant 0 : index
    %82 = vector.load %arg27[%c0_49, %c0_50] : memref<1x128xf32, #tpu.memory_space<vmem>>, vector<1x128xf32>
    %cst_51 = arith.constant dense<0.000000e+00> : vector<8xf32>
    %83 = vector.multi_reduction <add>, %80, %cst_51 [1] : vector<8x128xf32> to vector<8xf32>
    %84 = vector.shape_cast %83 : vector<8xf32> to vector<8x1xf32>
    %cst_52 = arith.constant 1.280000e+02 : f32
    %85 = vector.broadcast %cst_52 : f32 to vector<8x1xf32>
    %86 = arith.divf %84, %85 : vector<8x1xf32>
    %87 = vector.broadcast %86 : vector<8x1xf32> to vector<8x128xf32>
    %88 = arith.subf %80, %87 : vector<8x128xf32>
    %89 = arith.mulf %88, %88 : vector<8x128xf32>
    %cst_53 = arith.constant dense<0.000000e+00> : vector<8xf32>
    %90 = vector.multi_reduction <add>, %89, %cst_53 [1] : vector<8x128xf32> to vector<8xf32>
    %91 = vector.shape_cast %90 : vector<8xf32> to vector<8x1xf32>
    %cst_54 = arith.constant 1.280000e+02 : f32
    %92 = vector.broadcast %cst_54 : f32 to vector<8x1xf32>
    %93 = arith.divf %91, %92 : vector<8x1xf32>
    %94 = vector.broadcast %86 : vector<8x1xf32> to vector<8x128xf32>
    %95 = arith.subf %80, %94 : vector<8x128xf32>
    %cst_55 = arith.constant 9.99999974E-6 : f32
    %96 = vector.broadcast %cst_55 : f32 to vector<8x1xf32>
    %97 = arith.addf %93, %96 : vector<8x1xf32>
    %98 = math.rsqrt %97 : vector<8x1xf32>
    %99 = vector.broadcast %98 : vector<8x1xf32> to vector<8x128xf32>
    %100 = arith.mulf %95, %99 : vector<8x128xf32>
    %101 = vector.broadcast %81 : vector<1x128xf32> to vector<8x128xf32>
    %102 = arith.mulf %100, %101 : vector<8x128xf32>
    %103 = vector.broadcast %82 : vector<1x128xf32> to vector<8x128xf32>
    %104 = arith.addf %102, %103 : vector<8x128xf32>
    %c0_56 = arith.constant 0 : index
    %c0_57 = arith.constant 0 : index
    %105 = vector.load %arg28[%c0_56, %c0_57] : memref<128x128xf32, #tpu.memory_space<vmem>>, vector<128x128xf32>
    %cst_58 = arith.constant dense<0.000000e+00> : vector<8x128xf32>
    %106 = tpu.matmul %104, %105, %cst_58 {dimension_numbers = #tpu.dot_dimension_numbers<[1], [0], [0], [1], [0, 0, 1, 1], [], []>} : vector<8x128xf32>, vector<128x128xf32>, vector<8x128xf32> -> vector<8x128xf32>
    %c0_59 = arith.constant 0 : index
    %c0_60 = arith.constant 0 : index
    %107 = vector.load %arg29[%c0_59, %c0_60] : memref<1x128xf32, #tpu.memory_space<vmem>>, vector<1x128xf32>
    %108 = vector.broadcast %107 : vector<1x128xf32> to vector<8x128xf32>
    %109 = arith.addf %106, %108 : vector<8x128xf32>
    %c0_61 = arith.constant 0 : index
    %c0_62 = arith.constant 0 : index
    %110 = vector.load %arg30[%c0_61, %c0_62] : memref<8x128xf32, #tpu.memory_space<vmem>>, vector<8x128xf32>
    tpu.vector_store %arg30[%c0_61, %c0_62], %109 {strides = array<i32>} : memref<8x128xf32, #tpu.memory_space<vmem>>, vector<8x128xf32>,
    return
  }
  func.func @transform_0(%arg0: i32) -> (i32, i32) {
    %c0_i32 = arith.constant 0 : i32
    %c0_i32_0 = arith.constant 0 : i32
    return %arg0, %c0_i32 : i32, i32
  }
  func.func @transform_1(%arg0: i32) -> (i32, i32) {
    %c0_i32 = arith.constant 0 : i32
    %c0_i32_0 = arith.constant 0 : i32
    return %arg0, %c0_i32 : i32, i32
  }
  func.func @transform_2(%arg0: i32) -> (i32, i32) {
    %c0_i32 = arith.constant 0 : i32
    %c0_i32_0 = arith.constant 0 : i32
    return %arg0, %c0_i32 : i32, i32
  }
  func.func @transform_3(%arg0: i32) -> (i32, i32) {
    %c0_i32 = arith.constant 0 : i32
    %c0_i32_0 = arith.constant 0 : i32
    %c0_i32_1 = arith.constant 0 : i32
    return %c0_i32, %c0_i32_0 : i32, i32
  }
  func.func @transform_4(%arg0: i32) -> (i32, i32) {
    %c0_i32 = arith.constant 0 : i32
    %c0_i32_0 = arith.constant 0 : i32
    %c0_i32_1 = arith.constant 0 : i32
    return %c0_i32, %c0_i32_0 : i32, i32
  }
  func.func @transform_5(%arg0: i32) -> (i32, i32) {
    %c0_i32 = arith.constant 0 : i32
    %c0_i32_0 = arith.constant 0 : i32
    %c0_i32_1 = arith.constant 0 : i32
    return %c0_i32, %c0_i32_0 : i32, i32
  }
  func.func @transform_6(%arg0: i32) -> (i32, i32) {
    %c0_i32 = arith.constant 0 : i32
    %c0_i32_0 = arith.constant 0 : i32
    %c0_i32_1 = arith.constant 0 : i32
    return %c0_i32, %c0_i32_0 : i32, i32
  }
  func.func @transform_7(%arg0: i32) -> (i32, i32) {
    %c0_i32 = arith.constant 0 : i32
    %c0_i32_0 = arith.constant 0 : i32
    %c0_i32_1 = arith.constant 0 : i32
    return %c0_i32, %c0_i32_0 : i32, i32
  }
  func.func @transform_8(%arg0: i32) -> (i32, i32) {
    %c0_i32 = arith.constant 0 : i32
    %c0_i32_0 = arith.constant 0 : i32
    %c0_i32_1 = arith.constant 0 : i32
    return %c0_i32, %c0_i32_0 : i32, i32
  }
  func.func @transform_9(%arg0: i32) -> (i32, i32) {
    %c0_i32 = arith.constant 0 : i32
    %c0_i32_0 = arith.constant 0 : i32
    %c0_i32_1 = arith.constant 0 : i32
    return %c0_i32, %c0_i32_0 : i32, i32
  }
  func.func @transform_10(%arg0: i32) -> (i32, i32) {
    %c0_i32 = arith.constant 0 : i32
    %c0_i32_0 = arith.constant 0 : i32
    %c0_i32_1 = arith.constant 0 : i32
    return %c0_i32, %c0_i32_0 : i32, i32
  }
  func.func @transform_11(%arg0: i32) -> (i32, i32) {
    %c0_i32 = arith.constant 0 : i32
    %c0_i32_0 = arith.constant 0 : i32
    %c0_i32_1 = arith.constant 0 : i32
    return %c0_i32, %c0_i32_0 : i32, i32
  }
  func.func @transform_12(%arg0: i32) -> (i32, i32) {
    %c0_i32 = arith.constant 0 : i32
    %c0_i32_0 = arith.constant 0 : i32
    %c0_i32_1 = arith.constant 0 : i32
    return %c0_i32, %c0_i32_0 : i32, i32
  }
  func.func @transform_13(%arg0: i32) -> (i32, i32, i32) {
    %c0_i32 = arith.constant 0 : i32
    %c0_i32_0 = arith.constant 0 : i32
    %c0_i32_1 = arith.constant 0 : i32
    %c0_i32_2 = arith.constant 0 : i32
    return %c0_i32, %c0_i32_0, %c0_i32_1 : i32, i32, i32
  }
  func.func @transform_14(%arg0: i32) -> (i32, i32, i32) {
    %c0_i32 = arith.constant 0 : i32
    %c0_i32_0 = arith.constant 0 : i32
    %c0_i32_1 = arith.constant 0 : i32
    %c0_i32_2 = arith.constant 0 : i32
    return %c0_i32, %c0_i32_0, %c0_i32_1 : i32, i32, i32
  }
  func.func @transform_15(%arg0: i32) -> (i32, i32, i32) {
    %c0_i32 = arith.constant 0 : i32
    %c0_i32_0 = arith.constant 0 : i32
    %c0_i32_1 = arith.constant 0 : i32
    %c0_i32_2 = arith.constant 0 : i32
    return %c0_i32, %c0_i32_0, %c0_i32_1 : i32, i32, i32
  }
  func.func @transform_16(%arg0: i32) -> (i32, i32, i32) {
    %c0_i32 = arith.constant 0 : i32
    %c0_i32_0 = arith.constant 0 : i32
    %c0_i32_1 = arith.constant 0 : i32
    %c0_i32_2 = arith.constant 0 : i32
    return %c0_i32, %c0_i32_0, %c0_i32_1 : i32, i32, i32
  }
  func.func @transform_17(%arg0: i32) -> (i32, i32, i32) {
    %c0_i32 = arith.constant 0 : i32
    %c0_i32_0 = arith.constant 0 : i32
    %c0_i32_1 = arith.constant 0 : i32
    %c0_i32_2 = arith.constant 0 : i32
    return %c0_i32, %c0_i32_0, %c0_i32_1 : i32, i32, i32
  }
  func.func @transform_18(%arg0: i32) -> (i32, i32, i32) {
    %c0_i32 = arith.constant 0 : i32
    %c0_i32_0 = arith.constant 0 : i32
    %c0_i32_1 = arith.constant 0 : i32
    %c0_i32_2 = arith.constant 0 : i32
    return %c0_i32, %c0_i32_0, %c0_i32_1 : i32, i32, i32
  }
  func.func @transform_19(%arg0: i32) -> (i32, i32, i32) {
    %c0_i32 = arith.constant 0 : i32
    %c0_i32_0 = arith.constant 0 : i32
    %c0_i32_1 = arith.constant 0 : i32
    %c0_i32_2 = arith.constant 0 : i32
    return %c0_i32, %c0_i32_0, %c0_i32_1 : i32, i32, i32
  }
  func.func @transform_20(%arg0: i32) -> (i32, i32, i32) {
    %c0_i32 = arith.constant 0 : i32
    %c0_i32_0 = arith.constant 0 : i32
    %c0_i32_1 = arith.constant 0 : i32
    %c0_i32_2 = arith.constant 0 : i32
    return %c0_i32, %c0_i32_0, %c0_i32_1 : i32, i32, i32
  }
  func.func @transform_21(%arg0: i32) -> (i32, i32, i32) {
    %c0_i32 = arith.constant 0 : i32
    %c0_i32_0 = arith.constant 0 : i32
    %c0_i32_1 = arith.constant 0 : i32
    %c0_i32_2 = arith.constant 0 : i32
    return %c0_i32, %c0_i32_0, %c0_i32_1 : i32, i32, i32
  }
  func.func @transform_22(%arg0: i32) -> (i32, i32, i32) {
    %c0_i32 = arith.constant 0 : i32
    %c0_i32_0 = arith.constant 0 : i32
    %c0_i32_1 = arith.constant 0 : i32
    %c0_i32_2 = arith.constant 0 : i32
    return %c0_i32, %c0_i32_0, %c0_i32_1 : i32, i32, i32
  }
  func.func @transform_23(%arg0: i32) -> (i32, i32, i32) {
    %c0_i32 = arith.constant 0 : i32
    %c0_i32_0 = arith.constant 0 : i32
    %c0_i32_1 = arith.constant 0 : i32
    %c0_i32_2 = arith.constant 0 : i32
    return %c0_i32, %c0_i32_0, %c0_i32_1 : i32, i32, i32
  }
  func.func @transform_24(%arg0: i32) -> (i32, i32, i32) {
    %c0_i32 = arith.constant 0 : i32
    %c0_i32_0 = arith.constant 0 : i32
    %c0_i32_1 = arith.constant 0 : i32
    %c0_i32_2 = arith.constant 0 : i32
    return %c0_i32, %c0_i32_0, %c0_i32_1 : i32, i32, i32
  }
  func.func @transform_25(%arg0: i32) -> (i32, i32) {
    %c0_i32 = arith.constant 0 : i32
    %c0_i32_0 = arith.constant 0 : i32
    %c0_i32_1 = arith.constant 0 : i32
    return %c0_i32, %c0_i32_0 : i32, i32
  }
  func.func @transform_26(%arg0: i32) -> (i32, i32) {
    %c0_i32 = arith.constant 0 : i32
    %c0_i32_0 = arith.constant 0 : i32
    %c0_i32_1 = arith.constant 0 : i32
    return %c0_i32, %c0_i32_0 : i32, i32
  }
  func.func @transform_27(%arg0: i32) -> (i32, i32) {
    %c0_i32 = arith.constant 0 : i32
    %c0_i32_0 = arith.constant 0 : i32
    %c0_i32_1 = arith.constant 0 : i32
    return %c0_i32, %c0_i32_0 : i32, i32
  }
  func.func @transform_28(%arg0: i32) -> (i32, i32) {
    %c0_i32 = arith.constant 0 : i32
    %c0_i32_0 = arith.constant 0 : i32
    %c0_i32_1 = arith.constant 0 : i32
    return %c0_i32, %c0_i32_0 : i32, i32
  }
  func.func @transform_29(%arg0: i32) -> (i32, i32) {
    %c0_i32 = arith.constant 0 : i32
    %c0_i32_0 = arith.constant 0 : i32
    return %arg0, %c0_i32 : i32, i32
  }
}

</mosaic_0001>

<llo_original>
// kernel: tpu_custom_call.1
$region0: #{tpu_custom_call.1}
  #allocation0 [shape = 'u32[]', space=smem, size = 0x4, offset = 0x4, fixed_abs, tag = 'smem constant byte address 0x4 - core index']
  #allocation1 [shape = 'u32[144,128]{1,0:T(1,128)}', space=vmem, size = 0x12000, scoped, tag = 'internal scratch']
  %s0 = inlined_call_operand.smem [shape: u32[30], index: -1, kind: input, shape index: {}]
  %s1 = sld [smem:[%s0]]
  %s2 = scalar_lea.smem %s0, 1
  %s3 = sld [smem:[%s2]]
  %s4 = scalar_lea.smem %s0, 2
  %s5 = sld [smem:[%s4]]
  %s6 = scalar_lea.smem %s0, 3
  %s7 = sld [smem:[%s6]]
  %s8 = scalar_lea.smem %s0, 4
  %s9 = sld [smem:[%s8]]
  %s10 = scalar_lea.smem %s0, 5
  %s11 = sld [smem:[%s10]]
  %s12 = scalar_lea.smem %s0, 6
  %s13 = sld [smem:[%s12]]
  %s14 = scalar_lea.smem %s0, 7
  %s15 = sld [smem:[%s14]]
  %s16 = scalar_lea.smem %s0, 8
  %s17 = sld [smem:[%s16]]
  %s18 = scalar_lea.smem %s0, 9
  %s19 = sld [smem:[%s18]]
  %s20 = scalar_lea.smem %s0, 10
  %s21 = sld [smem:[%s20]]
  %s22 = scalar_lea.smem %s0, 11
  %s23 = sld [smem:[%s22]]
  %s24 = scalar_lea.smem %s0, 12
  %s25 = sld [smem:[%s24]]
  %s26 = scalar_lea.smem %s0, 13
  %s27 = sld [smem:[%s26]]
  %s28 = scalar_lea.smem %s0, 14
  %s29 = sld [smem:[%s28]]
  %s30 = scalar_lea.smem %s0, 15
  %s31 = sld [smem:[%s30]]
  %s32 = scalar_lea.smem %s0, 16
  %s33 = sld [smem:[%s32]]
  %s34 = scalar_lea.smem %s0, 17
  %s35 = sld [smem:[%s34]]
  %s36 = scalar_lea.smem %s0, 18
  %s37 = sld [smem:[%s36]]
  %s38 = scalar_lea.smem %s0, 19
  %s39 = sld [smem:[%s38]]
  %s40 = scalar_lea.smem %s0, 20
  %s41 = sld [smem:[%s40]]
  %s42 = scalar_lea.smem %s0, 21
  %s43 = sld [smem:[%s42]]
  %s44 = scalar_lea.smem %s0, 22
  %s45 = sld [smem:[%s44]]
  %s46 = scalar_lea.smem %s0, 23
  %s47 = sld [smem:[%s46]]
  %s48 = scalar_lea.smem %s0, 24
  %s49 = sld [smem:[%s48]]
  %s50 = scalar_lea.smem %s0, 25
  %s51 = sld [smem:[%s50]]
  %s52 = scalar_lea.smem %s0, 26
  %s53 = sld [smem:[%s52]]
  %s54 = scalar_lea.smem %s0, 27
  %s55 = sld [smem:[%s54]]
  %s56 = scalar_lea.smem %s0, 28
  %s57 = sld [smem:[%s56]]
  %s58 = scalar_lea.smem %s0, 29
  %s59 = sld [smem:[%s58]]
  %s60 = sld [smem:[#allocation0]]
  $region201: #{tpu_custom_call.1} parent=0
    _
  %s62 = ssub.s32 1, %s60
  %s63 = scalar_select 0, %s62, %s60
  $region1: #{tpu_custom_call.1} parent=0
    #allocation2 [shape = 'u8[8192]{0}', space=vmem, size = 0x2000, scoped, tag = 'input window, operand 0, single buffered']
    #allocation3 [shape = 's32[1]{0}', space=sflag, size = 0x4, scoped, tag = 'scoped memory for tpu_custom_call.1']
    #allocation4 [shape = 's32[1]{0}', space=sflag, size = 0x4, scoped, tag = 'scoped memory for tpu_custom_call.1']
    #allocation5 [shape = 'u8[24576]{0}', space=vmem, size = 0x6000, scoped, tag = 'input window, operand 1, single buffered']
    #allocation6 [shape = 's32[1]{0}', space=sflag, size = 0x4, scoped, tag = 'scoped memory for tpu_custom_call.1']
    #allocation7 [shape = 'u8[131072]{0}', space=vmem, size = 0x20000, scoped, tag = 'input window, operand 3, single buffered']
    #allocation8 [shape = 'u8[512]{0}', space=vmem, size = 0x400, scoped, tag = 'input window, operand 4, single buffered']
    #allocation9 [shape = 's32[1]{0}', space=sflag, size = 0x4, scoped, tag = 'scoped memory for tpu_custom_call.1']
    #allocation10 [shape = 'u8[393216]{0}', space=vmem, size = 0x60000, scoped, tag = 'input window, operand 5, single buffered']
    #allocation11 [shape = 'u8[512]{0}', space=vmem, size = 0x400, scoped, tag = 'input window, operand 6, single buffered']
    #allocation12 [shape = 's32[1]{0}', space=sflag, size = 0x4, scoped, tag = 'scoped memory for tpu_custom_call.1']
    #allocation13 [shape = 'u8[1024]{0}', space=vmem, size = 0x400, scoped, tag = 'input window, operand 7, single buffered']
    #allocation14 [shape = 'u8[512]{0}', space=vmem, size = 0x400, scoped, tag = 'input window, operand 8, single buffered']
    #allocation15 [shape = 's32[1]{0}', space=sflag, size = 0x4, scoped, tag = 'scoped memory for tpu_custom_call.1']
    #allocation16 [shape = 'u8[32768]{0}', space=vmem, size = 0x8000, scoped, tag = 'input window, operand 9, single buffered']
    #allocation17 [shape = 'u8[512]{0}', space=vmem, size = 0x400, scoped, tag = 'input window, operand 10, single buffered']
    #allocation18 [shape = 's32[1]{0}', space=sflag, size = 0x4, scoped, tag = 'scoped memory for tpu_custom_call.1']
    #allocation19 [shape = 'u8[512]{0}', space=vmem, size = 0x400, scoped, tag = 'input window, operand 11, single buffered']
    #allocation20 [shape = 'u8[32768]{0}', space=vmem, size = 0x8000, scoped, tag = 'input window, operand 12, single buffered']
    #allocation21 [shape = 's32[1]{0}', space=sflag, size = 0x4, scoped, tag = 'scoped memory for tpu_custom_call.1']
    #allocation22 [shape = 'u8[393216]{0}', space=vmem, size = 0x60000, scoped, tag = 'input window, operand 13, single buffered']
    #allocation23 [shape = 'u8[131072]{0}', space=vmem, size = 0x20000, scoped, tag = 'input window, operand 15, single buffered']
    #allocation24 [shape = 's32[1]{0}', space=sflag, size = 0x4, scoped, tag = 'scoped memory for tpu_custom_call.1']
    #allocation25 [shape = 'u8[524288]{0}', space=vmem, size = 0x80000, scoped, tag = 'input window, operand 17, single buffered']
    #allocation26 [shape = 'u8[524288]{0}', space=vmem, size = 0x80000, scoped, tag = 'input window, operand 19, single buffered']
    #allocation27 [shape = 's32[1]{0}', space=sflag, size = 0x4, scoped, tag = 'scoped memory for tpu_custom_call.1']
    #allocation28 [shape = 'u8[65536]{0}', space=vmem, size = 0x10000, scoped, tag = 'input window, operand 27, single buffered']
    #allocation29 [shape = 'u8[4096]{0}', space=vmem, size = 0x1000, scoped, tag = 'output window, operand 0, single buffered']
    %64 = vsyncpa [#allocation3], 0
    %65 = vsyncpa [#allocation6], 0
    %66 = vsyncpa [#allocation9], 0
    %67 = vsyncpa [#allocation12], 0
    %68 = vsyncpa [#allocation15], 0
    %69 = vsyncpa [#allocation18], 0
    %70 = vsyncpa [#allocation21], 0
    %71 = vsyncpa [#allocation24], 0
    %72 = vsyncpa [#allocation27], 0
    %73 = vsyncpa [#allocation4], 0
    // Predicated region
    $region2: #{tpu_custom_call.1} parent=1 // pred_check
      _
    $region3: #{tpu_custom_call.1} parent=1 // pred_check_branch
      %75 = sbr.rel (0) target = $region5
    $region4: #{tpu_custom_call.1} parent=1 // pred_region
      %s77 = ssub.s32 256, 256
      %78 = vsyncadd [#allocation3], %s77
      %s80 = sshll.u32 [#allocation2], 4
      %s81 = int_to_ptr.vmem [resolvable:$true] %s80
      %83 = dma.hbm_to_vmem [thread:$0]  %s1, 256, %s81, [#allocation3]
    $region5: #{tpu_custom_call.1} parent=1 // pred_fallthru
      _
    // Predicated region
    $region6: #{tpu_custom_call.1} parent=1 // pred_check
      _
    $region7: #{tpu_custom_call.1} parent=1 // pred_check_branch
      %85 = sbr.rel (0) target = $region9
    $region8: #{tpu_custom_call.1} parent=1 // pred_region
      %s87 = ssub.s32 768, 768
      %88 = vsyncadd [#allocation6], %s87
      %s90 = sshll.u32 [#allocation5], 4
      %s91 = int_to_ptr.vmem [resolvable:$true] %s90
      %93 = dma.hbm_to_vmem [thread:$0]  %s3, 768, %s91, [#allocation6]
    $region9: #{tpu_custom_call.1} parent=1 // pred_fallthru
      _
    // Predicated region
    $region10: #{tpu_custom_call.1} parent=1 // pred_check
      _
    $region11: #{tpu_custom_call.1} parent=1 // pred_check_branch
      %95 = sbr.rel (0) target = $region13
    $region12: #{tpu_custom_call.1} parent=1 // pred_region
      _
    $region13: #{tpu_custom_call.1} parent=1 // pred_fallthru
      _
    // Predicated region
    $region14: #{tpu_custom_call.1} parent=1 // pred_check
      _
    $region15: #{tpu_custom_call.1} parent=1 // pred_check_branch
      %97 = sbr.rel (0) target = $region17
    $region16: #{tpu_custom_call.1} parent=1 // pred_region
      %s99 = ssub.s32 4096, 4096
      %100 = vsyncadd [#allocation6], %s99
      %s101 = sshll.u32 [#allocation7], 4
      %s102 = int_to_ptr.vmem [resolvable:$true] %s101
      %107 = dma.hbm_to_vmem [thread:$0]  %s7, 4096, %s102, [#allocation6], 64, 64, 4
    $region17: #{tpu_custom_call.1} parent=1 // pred_fallthru
      _
    // Predicated region
    $region18: #{tpu_custom_call.1} parent=1 // pred_check
      _
    $region19: #{tpu_custom_call.1} parent=1 // pred_check_branch
      %109 = sbr.rel (0) target = $region21
    $region20: #{tpu_custom_call.1} parent=1 // pred_region
      %s111 = ssub.s32 16, 16
      %112 = vsyncadd [#allocation9], %s111
      %s114 = sshll.u32 [#allocation8], 4
      %s115 = int_to_ptr.vmem [resolvable:$true] %s114
      %117 = dma.hbm_to_vmem [thread:$0]  %s9, 16, %s115, [#allocation9]
    $region21: #{tpu_custom_call.1} parent=1 // pred_fallthru
      _
    // Predicated region
    $region22: #{tpu_custom_call.1} parent=1 // pred_check
      _
    $region23: #{tpu_custom_call.1} parent=1 // pred_check_branch
      %119 = sbr.rel (0) target = $region25
    $region24: #{tpu_custom_call.1} parent=1 // pred_region
      %s121 = ssub.s32 12288, 12288
      %122 = vsyncadd [#allocation9], %s121
      %s123 = sshll.u32 [#allocation10], 4
      %s124 = int_to_ptr.vmem [resolvable:$true] %s123
      %129 = dma.hbm_to_vmem [thread:$0]  %s11, 12288, %s124, [#allocation9], 64, 64, 4
    $region25: #{tpu_custom_call.1} parent=1 // pred_fallthru
      _
    // Predicated region
    $region26: #{tpu_custom_call.1} parent=1 // pred_check
      _
    $region27: #{tpu_custom_call.1} parent=1 // pred_check_branch
      %131 = sbr.rel (0) target = $region29
    $region28: #{tpu_custom_call.1} parent=1 // pred_region
      %s133 = ssub.s32 16, 16
      %134 = vsyncadd [#allocation12], %s133
      %s136 = sshll.u32 [#allocation11], 4
      %s137 = int_to_ptr.vmem [resolvable:$true] %s136
      %139 = dma.hbm_to_vmem [thread:$0]  %s13, 16, %s137, [#allocation12]
    $region29: #{tpu_custom_call.1} parent=1 // pred_fallthru
      _
    // Predicated region
    $region30: #{tpu_custom_call.1} parent=1 // pred_check
      _
    $region31: #{tpu_custom_call.1} parent=1 // pred_check_branch
      %141 = sbr.rel (0) target = $region33
    $region32: #{tpu_custom_call.1} parent=1 // pred_region
      %s143 = ssub.s32 32, 32
      %144 = vsyncadd [#allocation12], %s143
      %s146 = sshll.u32 [#allocation13], 4
      %s147 = int_to_ptr.vmem [resolvable:$true] %s146
      %149 = dma.hbm_to_vmem [thread:$0]  %s15, 32, %s147, [#allocation12]
    $region33: #{tpu_custom_call.1} parent=1 // pred_fallthru
      _
    // Predicated region
    $region34: #{tpu_custom_call.1} parent=1 // pred_check
      _
    $region35: #{tpu_custom_call.1} parent=1 // pred_check_branch
      %151 = sbr.rel (0) target = $region37
    $region36: #{tpu_custom_call.1} parent=1 // pred_region
      %s153 = ssub.s32 16, 16
      %154 = vsyncadd [#allocation15], %s153
      %s156 = sshll.u32 [#allocation14], 4
      %s157 = int_to_ptr.vmem [resolvable:$true] %s156
      %159 = dma.hbm_to_vmem [thread:$0]  %s17, 16, %s157, [#allocation15]
    $region37: #{tpu_custom_call.1} parent=1 // pred_fallthru
      _
    // Predicated region
    $region38: #{tpu_custom_call.1} parent=1 // pred_check
      _
    $region39: #{tpu_custom_call.1} parent=1 // pred_check_branch
      %161 = sbr.rel (0) target = $region41
    $region40: #{tpu_custom_call.1} parent=1 // pred_region
      %s163 = ssub.s32 1024, 1024
      %164 = vsyncadd [#allocation15], %s163
      %s165 = sshll.u32 [#allocation16], 4
      %s166 = int_to_ptr.vmem [resolvable:$true] %s165
      %171 = dma.hbm_to_vmem [thread:$0]  %s19, 1024, %s166, [#allocation15], 64, 64, 4
    $region41: #{tpu_custom_call.1} parent=1 // pred_fallthru
      _
    // Predicated region
    $region42: #{tpu_custom_call.1} parent=1 // pred_check
      _
    $region43: #{tpu_custom_call.1} parent=1 // pred_check_branch
      %173 = sbr.rel (0) target = $region45
    $region44: #{tpu_custom_call.1} parent=1 // pred_region
      %s175 = ssub.s32 16, 16
      %176 = vsyncadd [#allocation18], %s175
      %s178 = sshll.u32 [#allocation17], 4
      %s179 = int_to_ptr.vmem [resolvable:$true] %s178
      %181 = dma.hbm_to_vmem [thread:$0]  %s21, 16, %s179, [#allocation18]
    $region45: #{tpu_custom_call.1} parent=1 // pred_fallthru
      _
    // Predicated region
    $region46: #{tpu_custom_call.1} parent=1 // pred_check
      _
    $region47: #{tpu_custom_call.1} parent=1 // pred_check_branch
      %183 = sbr.rel (0) target = $region49
    $region48: #{tpu_custom_call.1} parent=1 // pred_region
      %s185 = ssub.s32 16, 16
      %186 = vsyncadd [#allocation18], %s185
      %s188 = sshll.u32 [#allocation19], 4
      %s189 = int_to_ptr.vmem [resolvable:$true] %s188
      %191 = dma.hbm_to_vmem [thread:$0]  %s23, 16, %s189, [#allocation18]
    $region49: #{tpu_custom_call.1} parent=1 // pred_fallthru
      _
    // Predicated region
    $region50: #{tpu_custom_call.1} parent=1 // pred_check
      _
    $region51: #{tpu_custom_call.1} parent=1 // pred_check_branch
      %193 = sbr.rel (0) target = $region53
    $region52: #{tpu_custom_call.1} parent=1 // pred_region
      %s195 = ssub.s32 1024, 1024
      %196 = vsyncadd [#allocation21], %s195
      %s197 = sshll.u32 [#allocation20], 4
      %s198 = int_to_ptr.vmem [resolvable:$true] %s197
      %203 = dma.hbm_to_vmem [thread:$0]  %s25, 1024, %s198, [#allocation21], 64, 64, 4
    $region53: #{tpu_custom_call.1} parent=1 // pred_fallthru
      _
    // Predicated region
    $region54: #{tpu_custom_call.1} parent=1 // pred_check
      _
    $region55: #{tpu_custom_call.1} parent=1 // pred_check_branch
      %205 = sbr.rel (0) target = $region57
    $region56: #{tpu_custom_call.1} parent=1 // pred_region
      %s207 = ssub.s32 12288, 12288
      %208 = vsyncadd [#allocation21], %s207
      %s209 = sshll.u32 [#allocation22], 4
      %s210 = int_to_ptr.vmem [resolvable:$true] %s209
      %215 = dma.hbm_to_vmem [thread:$0]  %s27, 12288, %s210, [#allocation21], 192, 192, 12
    $region57: #{tpu_custom_call.1} parent=1 // pred_fallthru
      _
    // Predicated region
    $region58: #{tpu_custom_call.1} parent=1 // pred_check
      _
    $region59: #{tpu_custom_call.1} parent=1 // pred_check_branch
      %217 = sbr.rel (0) target = $region61
    $region60: #{tpu_custom_call.1} parent=1 // pred_region
      _
    $region61: #{tpu_custom_call.1} parent=1 // pred_fallthru
      _
    // Predicated region
    $region62: #{tpu_custom_call.1} parent=1 // pred_check
      _
    $region63: #{tpu_custom_call.1} parent=1 // pred_check_branch
      %219 = sbr.rel (0) target = $region65
    $region64: #{tpu_custom_call.1} parent=1 // pred_region
      %s221 = ssub.s32 4096, 4096
      %222 = vsyncadd [#allocation24], %s221
      %s223 = sshll.u32 [#allocation23], 4
      %s224 = int_to_ptr.vmem [resolvable:$true] %s223
      %229 = dma.hbm_to_vmem [thread:$0]  %s31, 4096, %s224, [#allocation24], 64, 64, 4
    $region65: #{tpu_custom_call.1} parent=1 // pred_fallthru
      _
    // Predicated region
    $region66: #{tpu_custom_call.1} parent=1 // pred_check
      _
    $region67: #{tpu_custom_call.1} parent=1 // pred_check_branch
      %231 = sbr.rel (0) target = $region69
    $region68: #{tpu_custom_call.1} parent=1 // pred_region
      _
    $region69: #{tpu_custom_call.1} parent=1 // pred_fallthru
      _
    // Predicated region
    $region70: #{tpu_custom_call.1} parent=1 // pred_check
      _
    $region71: #{tpu_custom_call.1} parent=1 // pred_check_branch
      %233 = sbr.rel (0) target = $region73
    $region72: #{tpu_custom_call.1} parent=1 // pred_region
      %s235 = ssub.s32 16384, 16384
      %236 = vsyncadd [#allocation24], %s235
      %s237 = sshll.u32 [#allocation25], 4
      %s238 = int_to_ptr.vmem [resolvable:$true] %s237
      %243 = dma.hbm_to_vmem [thread:$0]  %s35, 16384, %s238, [#allocation24], 256, 256, 16
    $region73: #{tpu_custom_call.1} parent=1 // pred_fallthru
      _
    // Predicated region
    $region74: #{tpu_custom_call.1} parent=1 // pred_check
      _
    $region75: #{tpu_custom_call.1} parent=1 // pred_check_branch
      %245 = sbr.rel (0) target = $region77
    $region76: #{tpu_custom_call.1} parent=1 // pred_region
      _
    $region77: #{tpu_custom_call.1} parent=1 // pred_fallthru
      _
    // Predicated region
    $region78: #{tpu_custom_call.1} parent=1 // pred_check
      _
    $region79: #{tpu_custom_call.1} parent=1 // pred_check_branch
      %247 = sbr.rel (0) target = $region81
    $region80: #{tpu_custom_call.1} parent=1 // pred_region
      %s249 = ssub.s32 16384, 16384
      %250 = vsyncadd [#allocation27], %s249
      %s251 = sshll.u32 [#allocation26], 4
      %s252 = int_to_ptr.vmem [resolvable:$true] %s251
      %257 = dma.hbm_to_vmem [thread:$0]  %s39, 16384, %s252, [#allocation27], 64, 64, 4
    $region81: #{tpu_custom_call.1} parent=1 // pred_fallthru
      _
    // Predicated region
    $region82: #{tpu_custom_call.1} parent=1 // pred_check
      _
    $region83: #{tpu_custom_call.1} parent=1 // pred_check_branch
      %259 = sbr.rel (0) target = $region85
    $region84: #{tpu_custom_call.1} parent=1 // pred_region
      _
    $region85: #{tpu_custom_call.1} parent=1 // pred_fallthru
      _
    // Predicated region
    $region86: #{tpu_custom_call.1} parent=1 // pred_check
      _
    $region87: #{tpu_custom_call.1} parent=1 // pred_check_branch
      %261 = sbr.rel (0) target = $region89
    $region88: #{tpu_custom_call.1} parent=1 // pred_region
      _
    $region89: #{tpu_custom_call.1} parent=1 // pred_fallthru
      _
    // Predicated region
    $region90: #{tpu_custom_call.1} parent=1 // pred_check
      _
    $region91: #{tpu_custom_call.1} parent=1 // pred_check_branch
      %263 = sbr.rel (0) target = $region93
    $region92: #{tpu_custom_call.1} parent=1 // pred_region
      _
    $region93: #{tpu_custom_call.1} parent=1 // pred_fallthru
      _
    // Predicated region
    $region94: #{tpu_custom_call.1} parent=1 // pred_check
      _
    $region95: #{tpu_custom_call.1} parent=1 // pred_check_branch
      %265 = sbr.rel (0) target = $region97
    $region96: #{tpu_custom_call.1} parent=1 // pred_region
      _
    $region97: #{tpu_custom_call.1} parent=1 // pred_fallthru
      _
    // Predicated region
    $region98: #{tpu_custom_call.1} parent=1 // pred_check
      _
    $region99: #{tpu_custom_call.1} parent=1 // pred_check_branch
      %267 = sbr.rel (0) target = $region101
    $region100: #{tpu_custom_call.1} parent=1 // pred_region
      _
    $region101: #{tpu_custom_call.1} parent=1 // pred_fallthru
      _
    // Predicated region
    $region102: #{tpu_custom_call.1} parent=1 // pred_check
      _
    $region103: #{tpu_custom_call.1} parent=1 // pred_check_branch
      %269 = sbr.rel (0) target = $region105
    $region104: #{tpu_custom_call.1} parent=1 // pred_region
      _
    $region105: #{tpu_custom_call.1} parent=1 // pred_fallthru
      _
    // Predicated region
    $region106: #{tpu_custom_call.1} parent=1 // pred_check
      _
    $region107: #{tpu_custom_call.1} parent=1 // pred_check_branch
      %271 = sbr.rel (0) target = $region109
    $region108: #{tpu_custom_call.1} parent=1 // pred_region
      _
    $region109: #{tpu_custom_call.1} parent=1 // pred_fallthru
      _
    // Predicated region
    $region110: #{tpu_custom_call.1} parent=1 // pred_check
      _
    $region111: #{tpu_custom_call.1} parent=1 // pred_check_branch
      %273 = sbr.rel (0) target = $region113
    $region112: #{tpu_custom_call.1} parent=1 // pred_region
      %s275 = ssub.s32 2048, 2048
      %276 = vsyncadd [#allocation27], %s275
      %s277 = sshll.u32 [#allocation28], 4
      %s278 = int_to_ptr.vmem [resolvable:$true] %s277
      %283 = dma.hbm_to_vmem [thread:$0]  %s55, 2048, %s278, [#allocation27], 128, 128, 8
    $region113: #{tpu_custom_call.1} parent=1 // pred_fallthru
      _
    // Predicated region
    $region114: #{tpu_custom_call.1} parent=1 // pred_check
      _
    $region115: #{tpu_custom_call.1} parent=1 // pred_check_branch
      %285 = sbr.rel (0) target = $region117
    $region116: #{tpu_custom_call.1} parent=1 // pred_region
      _
    $region117: #{tpu_custom_call.1} parent=1 // pred_fallthru
      _
    // Predicated region
    $region118: #{tpu_custom_call.1} parent=1 // pred_check
      _
    $region119: #{tpu_custom_call.1} parent=1 // pred_check_branch
      %287 = sbr.rel (0) target = $region121
    $region120: #{tpu_custom_call.1} parent=1 // pred_region
      %288 = dma.done [#allocation3], 256
    $region121: #{tpu_custom_call.1} parent=1 // pred_fallthru
      _
    // Predicated region
    $region122: #{tpu_custom_call.1} parent=1 // pred_check
      _
    $region123: #{tpu_custom_call.1} parent=1 // pred_check_branch
      %290 = sbr.rel (0) target = $region125
    $region124: #{tpu_custom_call.1} parent=1 // pred_region
      %291 = dma.done [#allocation6], 768
    $region125: #{tpu_custom_call.1} parent=1 // pred_fallthru
      _
    // Predicated region
    $region126: #{tpu_custom_call.1} parent=1 // pred_check
      _
    $region127: #{tpu_custom_call.1} parent=1 // pred_check_branch
      %293 = sbr.rel (0) target = $region129
    $region128: #{tpu_custom_call.1} parent=1 // pred_region
      %294 = dma.done [#allocation6], 4096
    $region129: #{tpu_custom_call.1} parent=1 // pred_fallthru
      _
    // Predicated region
    $region130: #{tpu_custom_call.1} parent=1 // pred_check
      _
    $region131: #{tpu_custom_call.1} parent=1 // pred_check_branch
      %296 = sbr.rel (0) target = $region133
    $region132: #{tpu_custom_call.1} parent=1 // pred_region
      %297 = dma.done [#allocation9], 16
    $region133: #{tpu_custom_call.1} parent=1 // pred_fallthru
      _
    // Predicated region
    $region134: #{tpu_custom_call.1} parent=1 // pred_check
      _
    $region135: #{tpu_custom_call.1} parent=1 // pred_check_branch
      %299 = sbr.rel (0) target = $region137
    $region136: #{tpu_custom_call.1} parent=1 // pred_region
      %300 = dma.done [#allocation9], 12288
    $region137: #{tpu_custom_call.1} parent=1 // pred_fallthru
      _
    // Predicated region
    $region138: #{tpu_custom_call.1} parent=1 // pred_check
      _
    $region139: #{tpu_custom_call.1} parent=1 // pred_check_branch
      %302 = sbr.rel (0) target = $region141
    $region140: #{tpu_custom_call.1} parent=1 // pred_region
      %303 = dma.done [#allocation12], 16
    $region141: #{tpu_custom_call.1} parent=1 // pred_fallthru
      _
    // Predicated region
    $region142: #{tpu_custom_call.1} parent=1 // pred_check
      _
    $region143: #{tpu_custom_call.1} parent=1 // pred_check_branch
      %305 = sbr.rel (0) target = $region145
    $region144: #{tpu_custom_call.1} parent=1 // pred_region
      %306 = dma.done [#allocation12], 32
    $region145: #{tpu_custom_call.1} parent=1 // pred_fallthru
      _
    // Predicated region
    $region146: #{tpu_custom_call.1} parent=1 // pred_check
      _
    $region147: #{tpu_custom_call.1} parent=1 // pred_check_branch
      %308 = sbr.rel (0) target = $region149
    $region148: #{tpu_custom_call.1} parent=1 // pred_region
      %309 = dma.done [#allocation15], 16
    $region149: #{tpu_custom_call.1} parent=1 // pred_fallthru
      _
    // Predicated region
    $region150: #{tpu_custom_call.1} parent=1 // pred_check
      _
    $region151: #{tpu_custom_call.1} parent=1 // pred_check_branch
      %311 = sbr.rel (0) target = $region153
    $region152: #{tpu_custom_call.1} parent=1 // pred_region
      %312 = dma.done [#allocation15], 1024
    $region153: #{tpu_custom_call.1} parent=1 // pred_fallthru
      _
    // Predicated region
    $region154: #{tpu_custom_call.1} parent=1 // pred_check
      _
    $region155: #{tpu_custom_call.1} parent=1 // pred_check_branch
      %314 = sbr.rel (0) target = $region157
    $region156: #{tpu_custom_call.1} parent=1 // pred_region
      %315 = dma.done [#allocation18], 16
    $region157: #{tpu_custom_call.1} parent=1 // pred_fallthru
      _
    // Predicated region
    $region158: #{tpu_custom_call.1} parent=1 // pred_check
      _
    $region159: #{tpu_custom_call.1} parent=1 // pred_check_branch
      %317 = sbr.rel (0) target = $region161
    $region160: #{tpu_custom_call.1} parent=1 // pred_region
      %318 = dma.done [#allocation18], 16
    $region161: #{tpu_custom_call.1} parent=1 // pred_fallthru
      _
    // Predicated region
    $region162: #{tpu_custom_call.1} parent=1 // pred_check
      _
    $region163: #{tpu_custom_call.1} parent=1 // pred_check_branch
      %320 = sbr.rel (0) target = $region165
    $region164: #{tpu_custom_call.1} parent=1 // pred_region
      %321 = dma.done [#allocation21], 1024
    $region165: #{tpu_custom_call.1} parent=1 // pred_fallthru
      _
    // Predicated region
    $region166: #{tpu_custom_call.1} parent=1 // pred_check
      _
    $region167: #{tpu_custom_call.1} parent=1 // pred_check_branch
      %323 = sbr.rel (0) target = $region169
    $region168: #{tpu_custom_call.1} parent=1 // pred_region
      %324 = dma.done [#allocation21], 12288
    $region169: #{tpu_custom_call.1} parent=1 // pred_fallthru
      _
    // Predicated region
    $region170: #{tpu_custom_call.1} parent=1 // pred_check
      _
    $region171: #{tpu_custom_call.1} parent=1 // pred_check_branch
      %326 = sbr.rel (0) target = $region173
    $region172: #{tpu_custom_call.1} parent=1 // pred_region
      %327 = dma.done [#allocation24], 4096
    $region173: #{tpu_custom_call.1} parent=1 // pred_fallthru
      _
    // Predicated region
    $region174: #{tpu_custom_call.1} parent=1 // pred_check
      _
    $region175: #{tpu_custom_call.1} parent=1 // pred_check_branch
      %329 = sbr.rel (0) target = $region177
    $region176: #{tpu_custom_call.1} parent=1 // pred_region
      %330 = dma.done [#allocation24], 16384
    $region177: #{tpu_custom_call.1} parent=1 // pred_fallthru
      _
    // Predicated region
    $region178: #{tpu_custom_call.1} parent=1 // pred_check
      _
    $region179: #{tpu_custom_call.1} parent=1 // pred_check_branch
      %332 = sbr.rel (0) target = $region181
    $region180: #{tpu_custom_call.1} parent=1 // pred_region
      %333 = dma.done [#allocation27], 16384
    $region181: #{tpu_custom_call.1} parent=1 // pred_fallthru
      _
    // Predicated region
    $region182: #{tpu_custom_call.1} parent=1 // pred_check
      _
    $region183: #{tpu_custom_call.1} parent=1 // pred_check_branch
      %335 = sbr.rel (0) target = $region185
    $region184: #{tpu_custom_call.1} parent=1 // pred_region
      %336 = dma.done [#allocation27], 2048
    $region185: #{tpu_custom_call.1} parent=1 // pred_fallthru
      _
    %v338 = vld [vmem:[#allocation2] sm:$0xff]
    %v339 = vld [vmem:[#allocation2 + $0x8] sm:$0xff]
    %v340 = vld [vmem:[#allocation7] sm:$0xf]
    %v341 = vld [vmem:[#allocation7 + $0x4] sm:$0xf]
    %v342 = vld [vmem:[#allocation7 + $0x8] sm:$0xf]
    %v343 = vld [vmem:[#allocation7 + $0xc] sm:$0xf]
    %v344 = vld [vmem:[#allocation7 + $0x10] sm:$0xf]
    %v345 = vld [vmem:[#allocation7 + $0x14] sm:$0xf]
    %v346 = vld [vmem:[#allocation7 + $0x18] sm:$0xf]
    %v347 = vld [vmem:[#allocation7 + $0x1c] sm:$0xf]
    %v348 = vld [vmem:[#allocation7 + $0x20] sm:$0xf]
    %v349 = vld [vmem:[#allocation7 + $0x24] sm:$0xf]
    %v350 = vld [vmem:[#allocation7 + $0x28] sm:$0xf]
    %v351 = vld [vmem:[#allocation7 + $0x2c] sm:$0xf]
    %v352 = vld [vmem:[#allocation7 + $0x30] sm:$0xf]
    %v353 = vld [vmem:[#allocation7 + $0x34] sm:$0xf]
    %v354 = vld [vmem:[#allocation7 + $0x38] sm:$0xf]
    %v355 = vld [vmem:[#allocation7 + $0x3c] sm:$0xf]
    %v356 = vld [vmem:[#allocation7 + $0x40] sm:$0xf]
    %v357 = vld [vmem:[#allocation7 + $0x44] sm:$0xf]
    %v358 = vld [vmem:[#allocation7 + $0x48] sm:$0xf]
    %v359 = vld [vmem:[#allocation7 + $0x4c] sm:$0xf]
    %v360 = vld [vmem:[#allocation7 + $0x50] sm:$0xf]
    %v361 = vld [vmem:[#allocation7 + $0x54] sm:$0xf]
    %v362 = vld [vmem:[#allocation7 + $0x58] sm:$0xf]
    %v363 = vld [vmem:[#allocation7 + $0x5c] sm:$0xf]
    %v364 = vld [vmem:[#allocation7 + $0x60] sm:$0xf]
    %v365 = vld [vmem:[#allocation7 + $0x64] sm:$0xf]
    %v366 = vld [vmem:[#allocation7 + $0x68] sm:$0xf]
    %v367 = vld [vmem:[#allocation7 + $0x6c] sm:$0xf]
    %v368 = vld [vmem:[#allocation7 + $0x70] sm:$0xf]
    %v369 = vld [vmem:[#allocation7 + $0x74] sm:$0xf]
    %v370 = vld [vmem:[#allocation7 + $0x78] sm:$0xf]
    %v371 = vld [vmem:[#allocation7 + $0x7c] sm:$0xf]
    %v372 = vld [vmem:[#allocation7 + $0x80] sm:$0xf]
    %v373 = vld [vmem:[#allocation7 + $0x84] sm:$0xf]
    %v374 = vld [vmem:[#allocation7 + $0x88] sm:$0xf]
    %v375 = vld [vmem:[#allocation7 + $0x8c] sm:$0xf]
    %v376 = vld [vmem:[#allocation7 + $0x90] sm:$0xf]
    %v377 = vld [vmem:[#allocation7 + $0x94] sm:$0xf]
    %v378 = vld [vmem:[#allocation7 + $0x98] sm:$0xf]
    %v379 = vld [vmem:[#allocation7 + $0x9c] sm:$0xf]
    %v380 = vld [vmem:[#allocation7 + $0xa0] sm:$0xf]
    %v381 = vld [vmem:[#allocation7 + $0xa4] sm:$0xf]
    %v382 = vld [vmem:[#allocation7 + $0xa8] sm:$0xf]
    %v383 = vld [vmem:[#allocation7 + $0xac] sm:$0xf]
    %v384 = vld [vmem:[#allocation7 + $0xb0] sm:$0xf]
    %v385 = vld [vmem:[#allocation7 + $0xb4] sm:$0xf]
    %v386 = vld [vmem:[#allocation7 + $0xb8] sm:$0xf]
    %v387 = vld [vmem:[#allocation7 + $0xbc] sm:$0xf]
    %v388 = vld [vmem:[#allocation7 + $0xc0] sm:$0xf]
    %v389 = vld [vmem:[#allocation7 + $0xc4] sm:$0xf]
    %v390 = vld [vmem:[#allocation7 + $0xc8] sm:$0xf]
    %v391 = vld [vmem:[#allocation7 + $0xcc] sm:$0xf]
    %v392 = vld [vmem:[#allocation7 + $0xd0] sm:$0xf]
    %v393 = vld [vmem:[#allocation7 + $0xd4] sm:$0xf]
    %v394 = vld [vmem:[#allocation7 + $0xd8] sm:$0xf]
    %v395 = vld [vmem:[#allocation7 + $0xdc] sm:$0xf]
    %v396 = vld [vmem:[#allocation7 + $0xe0] sm:$0xf]
    %v397 = vld [vmem:[#allocation7 + $0xe4] sm:$0xf]
    %v398 = vld [vmem:[#allocation7 + $0xe8] sm:$0xf]
    %v399 = vld [vmem:[#allocation7 + $0xec] sm:$0xf]
    %v400 = vld [vmem:[#allocation7 + $0xf0] sm:$0xf]
    %v401 = vld [vmem:[#allocation7 + $0xf4] sm:$0xf]
    %v402 = vld [vmem:[#allocation7 + $0xf8] sm:$0xf]
    %v403 = vld [vmem:[#allocation7 + $0xfc] sm:$0xf]
    %v404 = vld [vmem:[#allocation8] sm:$0x1]
    %v406 = vlaneseq
    %v407 = vshrl.u32 %v406, 7
    %v408 = vsub.s32 0, %v407
    %v409 = vrot.slane %v404, %v408
    %v413 = vunpack.c.l.b16 %v338
    %v414 = vunpack.c.h.b16 %v338
    %v415 = vunpack.c.l.b16 %v339
    %v416 = vunpack.c.h.b16 %v339
    %v417 = vpack.c.b16 %v413, %v413
    %v418 = vpack.c.b16 %v414, %v414
    %v419 = vpack.c.b16 %v415, %v415
    %v420 = vpack.c.b16 %v416, %v416
    %v489 = vunpack.c.l.b16 %v340
    %v490 = vunpack.c.l.b16 %v341
    %v491 = vunpack.c.l.b16 %v342
    %v492 = vunpack.c.l.b16 %v343
    %v493 = vunpack.c.l.b16 %v344
    %v494 = vunpack.c.l.b16 %v345
    %v495 = vunpack.c.l.b16 %v346
    %v496 = vunpack.c.l.b16 %v347
    %v497 = vunpack.c.l.b16 %v348
    %v498 = vunpack.c.l.b16 %v349
    %v499 = vunpack.c.l.b16 %v350
    %v500 = vunpack.c.l.b16 %v351
    %v501 = vunpack.c.l.b16 %v352
    %v502 = vunpack.c.l.b16 %v353
    %v503 = vunpack.c.l.b16 %v354
    %v504 = vunpack.c.l.b16 %v355
    %v505 = vunpack.c.l.b16 %v356
    %v506 = vunpack.c.l.b16 %v357
    %v507 = vunpack.c.l.b16 %v358
    %v508 = vunpack.c.l.b16 %v359
    %v509 = vunpack.c.l.b16 %v360
    %v510 = vunpack.c.l.b16 %v361
    %v511 = vunpack.c.l.b16 %v362
    %v512 = vunpack.c.l.b16 %v363
    %v513 = vunpack.c.l.b16 %v364
    %v514 = vunpack.c.l.b16 %v365
    %v515 = vunpack.c.l.b16 %v366
    %v516 = vunpack.c.l.b16 %v367
    %v517 = vunpack.c.l.b16 %v368
    %v518 = vunpack.c.l.b16 %v369
    %v519 = vunpack.c.l.b16 %v370
    %v520 = vunpack.c.l.b16 %v371
    %v521 = vunpack.c.l.b16 %v372
    %v522 = vunpack.c.l.b16 %v373
    %v523 = vunpack.c.l.b16 %v374
    %v524 = vunpack.c.l.b16 %v375
    %v525 = vunpack.c.l.b16 %v376
    %v526 = vunpack.c.l.b16 %v377
    %v527 = vunpack.c.l.b16 %v378
    %v528 = vunpack.c.l.b16 %v379
    %v529 = vunpack.c.l.b16 %v380
    %v530 = vunpack.c.l.b16 %v381
    %v531 = vunpack.c.l.b16 %v382
    %v532 = vunpack.c.l.b16 %v383
    %v533 = vunpack.c.l.b16 %v384
    %v534 = vunpack.c.l.b16 %v385
    %v535 = vunpack.c.l.b16 %v386
    %v536 = vunpack.c.l.b16 %v387
    %v537 = vunpack.c.l.b16 %v388
    %v538 = vunpack.c.l.b16 %v389
    %v539 = vunpack.c.l.b16 %v390
    %v540 = vunpack.c.l.b16 %v391
    %v541 = vunpack.c.l.b16 %v392
    %v542 = vunpack.c.l.b16 %v393
    %v543 = vunpack.c.l.b16 %v394
    %v544 = vunpack.c.l.b16 %v395
    %v545 = vunpack.c.l.b16 %v396
    %v546 = vunpack.c.l.b16 %v397
    %v547 = vunpack.c.l.b16 %v398
    %v548 = vunpack.c.l.b16 %v399
    %v549 = vunpack.c.l.b16 %v400
    %v550 = vunpack.c.l.b16 %v401
    %v551 = vunpack.c.l.b16 %v402
    %v552 = vunpack.c.l.b16 %v403
    %v553 = vpack.c.b16 %v490, %v489
    %v554 = vpack.c.b16 %v492, %v491
    %v555 = vpack.c.b16 %v494, %v493
    %v556 = vpack.c.b16 %v496, %v495
    %v557 = vpack.c.b16 %v498, %v497
    %v558 = vpack.c.b16 %v500, %v499
    %v559 = vpack.c.b16 %v502, %v501
    %v560 = vpack.c.b16 %v504, %v503
    %v561 = vpack.c.b16 %v506, %v505
    %v562 = vpack.c.b16 %v508, %v507
    %v563 = vpack.c.b16 %v510, %v509
    %v564 = vpack.c.b16 %v512, %v511
    %v565 = vpack.c.b16 %v514, %v513
    %v566 = vpack.c.b16 %v516, %v515
    %v567 = vpack.c.b16 %v518, %v517
    %v568 = vpack.c.b16 %v520, %v519
    %v569 = vpack.c.b16 %v522, %v521
    %v570 = vpack.c.b16 %v524, %v523
    %v571 = vpack.c.b16 %v526, %v525
    %v572 = vpack.c.b16 %v528, %v527
    %v573 = vpack.c.b16 %v530, %v529
    %v574 = vpack.c.b16 %v532, %v531
    %v575 = vpack.c.b16 %v534, %v533
    %v576 = vpack.c.b16 %v536, %v535
    %v577 = vpack.c.b16 %v538, %v537
    %v578 = vpack.c.b16 %v540, %v539
    %v579 = vpack.c.b16 %v542, %v541
    %v580 = vpack.c.b16 %v544, %v543
    %v581 = vpack.c.b16 %v546, %v545
    %v582 = vpack.c.b16 %v548, %v547
    %v583 = vpack.c.b16 %v550, %v549
    %v584 = vpack.c.b16 %v552, %v551
    %617 = vmatprep.subr.bf16.mxu0 0
    %618 = vmatpush1.bf16.msra.mxu0 %v560
    %619 = vmatprep.subr.bf16.mxu0 0
    %620 = vmatpush1.bf16.msra.mxu0 %v559
    %621 = vmatprep.subr.bf16.mxu0 0
    %622 = vmatpush1.bf16.msra.mxu0 %v558
    %623 = vmatprep.subr.bf16.mxu0 0
    %624 = vmatpush1.bf16.msra.mxu0 %v557
    %625 = vmatprep.subr.bf16.mxu0 0
    %626 = vmatpush1.bf16.msra.mxu0 %v556
    %627 = vmatprep.subr.bf16.mxu0 0
    %628 = vmatpush1.bf16.msra.mxu0 %v555
    %629 = vmatprep.subr.bf16.mxu0 0
    %630 = vmatpush1.bf16.msra.mxu0 %v554
    %631 = vmatprep.subr.bf16.mxu0 0
    %632 = vmatpush1.bf16.msra.mxu0 %v553
    %633 = vmatprep.subr.bf16.mxu0 0
    %634 = vmatpush2.bf16.msra.mxu0 %v568
    %635 = vmatprep.subr.bf16.mxu0 0
    %636 = vmatpush2.bf16.msra.mxu0 %v567
    %637 = vmatprep.subr.bf16.mxu0 0
    %638 = vmatpush2.bf16.msra.mxu0 %v566
    %639 = vmatprep.subr.bf16.mxu0 0
    %640 = vmatpush2.bf16.msra.mxu0 %v565
    %641 = vmatprep.subr.bf16.mxu0 0
    %642 = vmatpush2.bf16.msra.mxu0 %v564
    %643 = vmatprep.subr.bf16.mxu0 0
    %644 = vmatpush2.bf16.msra.mxu0 %v563
    %645 = vmatprep.subr.bf16.mxu0 0
    %646 = vmatpush2.bf16.msra.mxu0 %v562
    %647 = vmatprep.subr.bf16.mxu0 0
    %648 = vmatpush2.bf16.msra.mxu0 %v561
    %649 = vmatprep.mubr.bf16.mxu0 %v418
    %650 = vmatmul.mubr.bf16.gmra.mxu0 %v417
    %v651 = vpop.f32.mrf.mxu0
    %v652 = vadd.f32 %v409, %v651
    %v653 = vpop.f32.mrf.mxu0
    %v654 = vpop.f32.mrf.mxu0
    %v655 = vpop.f32.mrf.mxu0
    %656 = vdwg.mxu0
    %657 = vmatprep.subr.bf16.mxu0 0
    %658 = vmatpush1.bf16.msra.mxu0 %v576
    %659 = vmatprep.subr.bf16.mxu0 0
    %660 = vmatpush1.bf16.msra.mxu0 %v575
    %661 = vmatprep.subr.bf16.mxu0 0
    %662 = vmatpush1.bf16.msra.mxu0 %v574
    %663 = vmatprep.subr.bf16.mxu0 0
    %664 = vmatpush1.bf16.msra.mxu0 %v573
    %665 = vmatprep.subr.bf16.mxu0 0
    %666 = vmatpush1.bf16.msra.mxu0 %v572
    %667 = vmatprep.subr.bf16.mxu0 0
    %668 = vmatpush1.bf16.msra.mxu0 %v571
    %669 = vmatprep.subr.bf16.mxu0 0
    %670 = vmatpush1.bf16.msra.mxu0 %v570
    %671 = vmatprep.subr.bf16.mxu0 0
    %672 = vmatpush1.bf16.msra.mxu0 %v569
    %673 = vmatprep.subr.bf16.mxu0 0
    %674 = vmatpush2.bf16.msra.mxu0 %v584
    %675 = vmatprep.subr.bf16.mxu0 0
    %676 = vmatpush2.bf16.msra.mxu0 %v583
    %677 = vmatprep.subr.bf16.mxu0 0
    %678 = vmatpush2.bf16.msra.mxu0 %v582
    %679 = vmatprep.subr.bf16.mxu0 0
    %680 = vmatpush2.bf16.msra.mxu0 %v581
    %681 = vmatprep.subr.bf16.mxu0 0
    %682 = vmatpush2.bf16.msra.mxu0 %v580
    %683 = vmatprep.subr.bf16.mxu0 0
    %684 = vmatpush2.bf16.msra.mxu0 %v579
    %685 = vmatprep.subr.bf16.mxu0 0
    %686 = vmatpush2.bf16.msra.mxu0 %v578
    %687 = vmatprep.subr.bf16.mxu0 0
    %688 = vmatpush2.bf16.msra.mxu0 %v577
    %689 = vmatprep.mubr.bf16.mxu0 %v420
    %690 = vmatmul.mubr.bf16.gmra.mxu0 %v419
    %v691 = vpop.f32.mrf.mxu0
    %v692 = vadd.f32 %v652, %v691
    %v693 = vpop.f32.mrf.mxu0
    %v694 = vpop.f32.mrf.mxu0
    %v695 = vpop.f32.mrf.mxu0
    %696 = vdwg.mxu0
    %v697 = vld [vmem:[#allocation5] sm:$0xff]
    %v698 = vld [vmem:[#allocation5 + $0x8] sm:$0xff]
    %v699 = vld [vmem:[#allocation5 + $0x10] sm:$0xff]
    %v700 = vld [vmem:[#allocation5 + $0x18] sm:$0xff]
    %v701 = vld [vmem:[#allocation5 + $0x20] sm:$0xff]
    %v702 = vld [vmem:[#allocation5 + $0x28] sm:$0xff]
    %v703 = vld [vmem:[#allocation10] sm:$0xf]
    %v704 = vld [vmem:[#allocation10 + $0x4] sm:$0xf]
    %v705 = vld [vmem:[#allocation10 + $0x8] sm:$0xf]
    %v706 = vld [vmem:[#allocation10 + $0xc] sm:$0xf]
    %v707 = vld [vmem:[#allocation10 + $0x10] sm:$0xf]
    %v708 = vld [vmem:[#allocation10 + $0x14] sm:$0xf]
    %v709 = vld [vmem:[#allocation10 + $0x18] sm:$0xf]
    %v710 = vld [vmem:[#allocation10 + $0x1c] sm:$0xf]
    %v711 = vld [vmem:[#allocation10 + $0x20] sm:$0xf]
    %v712 = vld [vmem:[#allocation10 + $0x24] sm:$0xf]
    %v713 = vld [vmem:[#allocation10 + $0x28] sm:$0xf]
    %v714 = vld [vmem:[#allocation10 + $0x2c] sm:$0xf]
    %v715 = vld [vmem:[#allocation10 + $0x30] sm:$0xf]
    %v716 = vld [vmem:[#allocation10 + $0x34] sm:$0xf]
    %v717 = vld [vmem:[#allocation10 + $0x38] sm:$0xf]
    %v718 = vld [vmem:[#allocation10 + $0x3c] sm:$0xf]
    %v719 = vld [vmem:[#allocation10 + $0x40] sm:$0xf]
    %v720 = vld [vmem:[#allocation10 + $0x44] sm:$0xf]
    %v721 = vld [vmem:[#allocation10 + $0x48] sm:$0xf]
    %v722 = vld [vmem:[#allocation10 + $0x4c] sm:$0xf]
    %v723 = vld [vmem:[#allocation10 + $0x50] sm:$0xf]
    %v724 = vld [vmem:[#allocation10 + $0x54] sm:$0xf]
    %v725 = vld [vmem:[#allocation10 + $0x58] sm:$0xf]
    %v726 = vld [vmem:[#allocation10 + $0x5c] sm:$0xf]
    %v727 = vld [vmem:[#allocation10 + $0x60] sm:$0xf]
    %v728 = vld [vmem:[#allocation10 + $0x64] sm:$0xf]
    %v729 = vld [vmem:[#allocation10 + $0x68] sm:$0xf]
    %v730 = vld [vmem:[#allocation10 + $0x6c] sm:$0xf]
    %v731 = vld [vmem:[#allocation10 + $0x70] sm:$0xf]
    %v732 = vld [vmem:[#allocation10 + $0x74] sm:$0xf]
    %v733 = vld [vmem:[#allocation10 + $0x78] sm:$0xf]
    %v734 = vld [vmem:[#allocation10 + $0x7c] sm:$0xf]
    %v735 = vld [vmem:[#allocation10 + $0x80] sm:$0xf]
    %v736 = vld [vmem:[#allocation10 + $0x84] sm:$0xf]
    %v737 = vld [vmem:[#allocation10 + $0x88] sm:$0xf]
    %v738 = vld [vmem:[#allocation10 + $0x8c] sm:$0xf]
    %v739 = vld [vmem:[#allocation10 + $0x90] sm:$0xf]
    %v740 = vld [vmem:[#allocation10 + $0x94] sm:$0xf]
    %v741 = vld [vmem:[#allocation10 + $0x98] sm:$0xf]
    %v742 = vld [vmem:[#allocation10 + $0x9c] sm:$0xf]
    %v743 = vld [vmem:[#allocation10 + $0xa0] sm:$0xf]
    %v744 = vld [vmem:[#allocation10 + $0xa4] sm:$0xf]
    %v745 = vld [vmem:[#allocation10 + $0xa8] sm:$0xf]
    %v746 = vld [vmem:[#allocation10 + $0xac] sm:$0xf]
    %v747 = vld [vmem:[#allocation10 + $0xb0] sm:$0xf]
    %v748 = vld [vmem:[#allocation10 + $0xb4] sm:$0xf]
    %v749 = vld [vmem:[#allocation10 + $0xb8] sm:$0xf]
    %v750 = vld [vmem:[#allocation10 + $0xbc] sm:$0xf]
    %v751 = vld [vmem:[#allocation10 + $0xc0] sm:$0xf]
    %v752 = vld [vmem:[#allocation10 + $0xc4] sm:$0xf]
    %v753 = vld [vmem:[#allocation10 + $0xc8] sm:$0xf]
    %v754 = vld [vmem:[#allocation10 + $0xcc] sm:$0xf]
    %v755 = vld [vmem:[#allocation10 + $0xd0] sm:$0xf]
    %v756 = vld [vmem:[#allocation10 + $0xd4] sm:$0xf]
    %v757 = vld [vmem:[#allocation10 + $0xd8] sm:$0xf]
    %v758 = vld [vmem:[#allocation10 + $0xdc] sm:$0xf]
    %v759 = vld [vmem:[#allocation10 + $0xe0] sm:$0xf]
    %v760 = vld [vmem:[#allocation10 + $0xe4] sm:$0xf]
    %v761 = vld [vmem:[#allocation10 + $0xe8] sm:$0xf]
    %v762 = vld [vmem:[#allocation10 + $0xec] sm:$0xf]
    %v763 = vld [vmem:[#allocation10 + $0xf0] sm:$0xf]
    %v764 = vld [vmem:[#allocation10 + $0xf4] sm:$0xf]
    %v765 = vld [vmem:[#allocation10 + $0xf8] sm:$0xf]
    %v766 = vld [vmem:[#allocation10 + $0xfc] sm:$0xf]
    %v767 = vld [vmem:[#allocation10 + $0x100] sm:$0xf]
    %v768 = vld [vmem:[#allocation10 + $0x104] sm:$0xf]
    %v769 = vld [vmem:[#allocation10 + $0x108] sm:$0xf]
    %v770 = vld [vmem:[#allocation10 + $0x10c] sm:$0xf]
    %v771 = vld [vmem:[#allocation10 + $0x110] sm:$0xf]
    %v772 = vld [vmem:[#allocation10 + $0x114] sm:$0xf]
    %v773 = vld [vmem:[#allocation10 + $0x118] sm:$0xf]
    %v774 = vld [vmem:[#allocation10 + $0x11c] sm:$0xf]
    %v775 = vld [vmem:[#allocation10 + $0x120] sm:$0xf]
    %v776 = vld [vmem:[#allocation10 + $0x124] sm:$0xf]
    %v777 = vld [vmem:[#allocation10 + $0x128] sm:$0xf]
    %v778 = vld [vmem:[#allocation10 + $0x12c] sm:$0xf]
    %v779 = vld [vmem:[#allocation10 + $0x130] sm:$0xf]
    %v780 = vld [vmem:[#allocation10 + $0x134] sm:$0xf]
    %v781 = vld [vmem:[#allocation10 + $0x138] sm:$0xf]
    %v782 = vld [vmem:[#allocation10 + $0x13c] sm:$0xf]
    %v783 = vld [vmem:[#allocation10 + $0x140] sm:$0xf]
    %v784 = vld [vmem:[#allocation10 + $0x144] sm:$0xf]
    %v785 = vld [vmem:[#allocation10 + $0x148] sm:$0xf]
    %v786 = vld [vmem:[#allocation10 + $0x14c] sm:$0xf]
    %v787 = vld [vmem:[#allocation10 + $0x150] sm:$0xf]
    %v788 = vld [vmem:[#allocation10 + $0x154] sm:$0xf]
    %v789 = vld [vmem:[#allocation10 + $0x158] sm:$0xf]
    %v790 = vld [vmem:[#allocation10 + $0x15c] sm:$0xf]
    %v791 = vld [vmem:[#allocation10 + $0x160] sm:$0xf]
    %v792 = vld [vmem:[#allocation10 + $0x164] sm:$0xf]
    %v793 = vld [vmem:[#allocation10 + $0x168] sm:$0xf]
    %v794 = vld [vmem:[#allocation10 + $0x16c] sm:$0xf]
    %v795 = vld [vmem:[#allocation10 + $0x170] sm:$0xf]
    %v796 = vld [vmem:[#allocation10 + $0x174] sm:$0xf]
    %v797 = vld [vmem:[#allocation10 + $0x178] sm:$0xf]
    %v798 = vld [vmem:[#allocation10 + $0x17c] sm:$0xf]
    %v799 = vld [vmem:[#allocation10 + $0x180] sm:$0xf]
    %v800 = vld [vmem:[#allocation10 + $0x184] sm:$0xf]
    %v801 = vld [vmem:[#allocation10 + $0x188] sm:$0xf]
    %v802 = vld [vmem:[#allocation10 + $0x18c] sm:$0xf]
    %v803 = vld [vmem:[#allocation10 + $0x190] sm:$0xf]
    %v804 = vld [vmem:[#allocation10 + $0x194] sm:$0xf]
    %v805 = vld [vmem:[#allocation10 + $0x198] sm:$0xf]
    %v806 = vld [vmem:[#allocation10 + $0x19c] sm:$0xf]
    %v807 = vld [vmem:[#allocation10 + $0x1a0] sm:$0xf]
    %v808 = vld [vmem:[#allocation10 + $0x1a4] sm:$0xf]
    %v809 = vld [vmem:[#allocation10 + $0x1a8] sm:$0xf]
    %v810 = vld [vmem:[#allocation10 + $0x1ac] sm:$0xf]
    %v811 = vld [vmem:[#allocation10 + $0x1b0] sm:$0xf]
    %v812 = vld [vmem:[#allocation10 + $0x1b4] sm:$0xf]
    %v813 = vld [vmem:[#allocation10 + $0x1b8] sm:$0xf]
    %v814 = vld [vmem:[#allocation10 + $0x1bc] sm:$0xf]
    %v815 = vld [vmem:[#allocation10 + $0x1c0] sm:$0xf]
    %v816 = vld [vmem:[#allocation10 + $0x1c4] sm:$0xf]
    %v817 = vld [vmem:[#allocation10 + $0x1c8] sm:$0xf]
    %v818 = vld [vmem:[#allocation10 + $0x1cc] sm:$0xf]
    %v819 = vld [vmem:[#allocation10 + $0x1d0] sm:$0xf]
    %v820 = vld [vmem:[#allocation10 + $0x1d4] sm:$0xf]
    %v821 = vld [vmem:[#allocation10 + $0x1d8] sm:$0xf]
    %v822 = vld [vmem:[#allocation10 + $0x1dc] sm:$0xf]
    %v823 = vld [vmem:[#allocation10 + $0x1e0] sm:$0xf]
    %v824 = vld [vmem:[#allocation10 + $0x1e4] sm:$0xf]
    %v825 = vld [vmem:[#allocation10 + $0x1e8] sm:$0xf]
    %v826 = vld [vmem:[#allocation10 + $0x1ec] sm:$0xf]
    %v827 = vld [vmem:[#allocation10 + $0x1f0] sm:$0xf]
    %v828 = vld [vmem:[#allocation10 + $0x1f4] sm:$0xf]
    %v829 = vld [vmem:[#allocation10 + $0x1f8] sm:$0xf]
    %v830 = vld [vmem:[#allocation10 + $0x1fc] sm:$0xf]
    %v831 = vld [vmem:[#allocation10 + $0x200] sm:$0xf]
    %v832 = vld [vmem:[#allocation10 + $0x204] sm:$0xf]
    %v833 = vld [vmem:[#allocation10 + $0x208] sm:$0xf]
    %v834 = vld [vmem:[#allocation10 + $0x20c] sm:$0xf]
    %v835 = vld [vmem:[#allocation10 + $0x210] sm:$0xf]
    %v836 = vld [vmem:[#allocation10 + $0x214] sm:$0xf]
    %v837 = vld [vmem:[#allocation10 + $0x218] sm:$0xf]
    %v838 = vld [vmem:[#allocation10 + $0x21c] sm:$0xf]
    %v839 = vld [vmem:[#allocation10 + $0x220] sm:$0xf]
    %v840 = vld [vmem:[#allocation10 + $0x224] sm:$0xf]
    %v841 = vld [vmem:[#allocation10 + $0x228] sm:$0xf]
    %v842 = vld [vmem:[#allocation10 + $0x22c] sm:$0xf]
    %v843 = vld [vmem:[#allocation10 + $0x230] sm:$0xf]
    %v844 = vld [vmem:[#allocation10 + $0x234] sm:$0xf]
    %v845 = vld [vmem:[#allocation10 + $0x238] sm:$0xf]
    %v846 = vld [vmem:[#allocation10 + $0x23c] sm:$0xf]
    %v847 = vld [vmem:[#allocation10 + $0x240] sm:$0xf]
    %v848 = vld [vmem:[#allocation10 + $0x244] sm:$0xf]
    %v849 = vld [vmem:[#allocation10 + $0x248] sm:$0xf]
    %v850 = vld [vmem:[#allocation10 + $0x24c] sm:$0xf]
    %v851 = vld [vmem:[#allocation10 + $0x250] sm:$0xf]
    %v852 = vld [vmem:[#allocation10 + $0x254] sm:$0xf]
    %v853 = vld [vmem:[#allocation10 + $0x258] sm:$0xf]
    %v854 = vld [vmem:[#allocation10 + $0x25c] sm:$0xf]
    %v855 = vld [vmem:[#allocation10 + $0x260] sm:$0xf]
    %v856 = vld [vmem:[#allocation10 + $0x264] sm:$0xf]
    %v857 = vld [vmem:[#allocation10 + $0x268] sm:$0xf]
    %v858 = vld [vmem:[#allocation10 + $0x26c] sm:$0xf]
    %v859 = vld [vmem:[#allocation10 + $0x270] sm:$0xf]
    %v860 = vld [vmem:[#allocation10 + $0x274] sm:$0xf]
    %v861 = vld [vmem:[#allocation10 + $0x278] sm:$0xf]
    %v862 = vld [vmem:[#allocation10 + $0x27c] sm:$0xf]
    %v863 = vld [vmem:[#allocation10 + $0x280] sm:$0xf]
    %v864 = vld [vmem:[#allocation10 + $0x284] sm:$0xf]
    %v865 = vld [vmem:[#allocation10 + $0x288] sm:$0xf]
    %v866 = vld [vmem:[#allocation10 + $0x28c] sm:$0xf]
    %v867 = vld [vmem:[#allocation10 + $0x290] sm:$0xf]
    %v868 = vld [vmem:[#allocation10 + $0x294] sm:$0xf]
    %v869 = vld [vmem:[#allocation10 + $0x298] sm:$0xf]
    %v870 = vld [vmem:[#allocation10 + $0x29c] sm:$0xf]
    %v871 = vld [vmem:[#allocation10 + $0x2a0] sm:$0xf]
    %v872 = vld [vmem:[#allocation10 + $0x2a4] sm:$0xf]
    %v873 = vld [vmem:[#allocation10 + $0x2a8] sm:$0xf]
    %v874 = vld [vmem:[#allocation10 + $0x2ac] sm:$0xf]
    %v875 = vld [vmem:[#allocation10 + $0x2b0] sm:$0xf]
    %v876 = vld [vmem:[#allocation10 + $0x2b4] sm:$0xf]
    %v877 = vld [vmem:[#allocation10 + $0x2b8] sm:$0xf]
    %v878 = vld [vmem:[#allocation10 + $0x2bc] sm:$0xf]
    %v879 = vld [vmem:[#allocation10 + $0x2c0] sm:$0xf]
    %v880 = vld [vmem:[#allocation10 + $0x2c4] sm:$0xf]
    %v881 = vld [vmem:[#allocation10 + $0x2c8] sm:$0xf]
    %v882 = vld [vmem:[#allocation10 + $0x2cc] sm:$0xf]
    %v883 = vld [vmem:[#allocation10 + $0x2d0] sm:$0xf]
    %v884 = vld [vmem:[#allocation10 + $0x2d4] sm:$0xf]
    %v885 = vld [vmem:[#allocation10 + $0x2d8] sm:$0xf]
    %v886 = vld [vmem:[#allocation10 + $0x2dc] sm:$0xf]
    %v887 = vld [vmem:[#allocation10 + $0x2e0] sm:$0xf]
    %v888 = vld [vmem:[#allocation10 + $0x2e4] sm:$0xf]
    %v889 = vld [vmem:[#allocation10 + $0x2e8] sm:$0xf]
    %v890 = vld [vmem:[#allocation10 + $0x2ec] sm:$0xf]
    %v891 = vld [vmem:[#allocation10 + $0x2f0] sm:$0xf]
    %v892 = vld [vmem:[#allocation10 + $0x2f4] sm:$0xf]
    %v893 = vld [vmem:[#allocation10 + $0x2f8] sm:$0xf]
    %v894 = vld [vmem:[#allocation10 + $0x2fc] sm:$0xf]
    %v895 = vld [vmem:[#allocation11] sm:$0x1]
    %v897 = vlaneseq
    %v898 = vshrl.u32 %v897, 7
    %v899 = vsub.s32 0, %v898
    %v900 = vrot.slane %v895, %v899
    %v908 = vunpack.c.l.b16 %v697
    %v909 = vunpack.c.h.b16 %v697
    %v910 = vunpack.c.l.b16 %v698
    %v911 = vunpack.c.h.b16 %v698
    %v912 = vunpack.c.l.b16 %v699
    %v913 = vunpack.c.h.b16 %v699
    %v914 = vunpack.c.l.b16 %v700
    %v915 = vunpack.c.h.b16 %v700
    %v916 = vunpack.c.l.b16 %v701
    %v917 = vunpack.c.h.b16 %v701
    %v918 = vunpack.c.l.b16 %v702
    %v919 = vunpack.c.h.b16 %v702
    %v920 = vpack.c.b16 %v908, %v908
    %v921 = vpack.c.b16 %v909, %v909
    %v922 = vpack.c.b16 %v910, %v910
    %v923 = vpack.c.b16 %v911, %v911
    %v924 = vpack.c.b16 %v912, %v912
    %v925 = vpack.c.b16 %v913, %v913
    %v926 = vpack.c.b16 %v914, %v914
    %v927 = vpack.c.b16 %v915, %v915
    %v928 = vpack.c.b16 %v916, %v916
    %v929 = vpack.c.b16 %v917, %v917
    %v930 = vpack.c.b16 %v918, %v918
    %v931 = vpack.c.b16 %v919, %v919
    %v1136 = vunpack.c.l.b16 %v703
    %v1137 = vunpack.c.l.b16 %v704
    %v1138 = vunpack.c.l.b16 %v705
    %v1139 = vunpack.c.l.b16 %v706
    %v1140 = vunpack.c.l.b16 %v707
    %v1141 = vunpack.c.l.b16 %v708
    %v1142 = vunpack.c.l.b16 %v709
    %v1143 = vunpack.c.l.b16 %v710
    %v1144 = vunpack.c.l.b16 %v711
    %v1145 = vunpack.c.l.b16 %v712
    %v1146 = vunpack.c.l.b16 %v713
    %v1147 = vunpack.c.l.b16 %v714
    %v1148 = vunpack.c.l.b16 %v715
    %v1149 = vunpack.c.l.b16 %v716
    %v1150 = vunpack.c.l.b16 %v717
    %v1151 = vunpack.c.l.b16 %v718
    %v1152 = vunpack.c.l.b16 %v719
    %v1153 = vunpack.c.l.b16 %v720
    %v1154 = vunpack.c.l.b16 %v721
    %v1155 = vunpack.c.l.b16 %v722
    %v1156 = vunpack.c.l.b16 %v723
    %v1157 = vunpack.c.l.b16 %v724
    %v1158 = vunpack.c.l.b16 %v725
    %v1159 = vunpack.c.l.b16 %v726
    %v1160 = vunpack.c.l.b16 %v727
    %v1161 = vunpack.c.l.b16 %v728
    %v1162 = vunpack.c.l.b16 %v729
    %v1163 = vunpack.c.l.b16 %v730
    %v1164 = vunpack.c.l.b16 %v731
    %v1165 = vunpack.c.l.b16 %v732
    %v1166 = vunpack.c.l.b16 %v733
    %v1167 = vunpack.c.l.b16 %v734
    %v1168 = vunpack.c.l.b16 %v735
    %v1169 = vunpack.c.l.b16 %v736
    %v1170 = vunpack.c.l.b16 %v737
    %v1171 = vunpack.c.l.b16 %v738
    %v1172 = vunpack.c.l.b16 %v739
    %v1173 = vunpack.c.l.b16 %v740
    %v1174 = vunpack.c.l.b16 %v741
    %v1175 = vunpack.c.l.b16 %v742
    %v1176 = vunpack.c.l.b16 %v743
    %v1177 = vunpack.c.l.b16 %v744
    %v1178 = vunpack.c.l.b16 %v745
    %v1179 = vunpack.c.l.b16 %v746
    %v1180 = vunpack.c.l.b16 %v747
    %v1181 = vunpack.c.l.b16 %v748
    %v1182 = vunpack.c.l.b16 %v749
    %v1183 = vunpack.c.l.b16 %v750
    %v1184 = vunpack.c.l.b16 %v751
    %v1185 = vunpack.c.l.b16 %v752
    %v1186 = vunpack.c.l.b16 %v753
    %v1187 = vunpack.c.l.b16 %v754
    %v1188 = vunpack.c.l.b16 %v755
    %v1189 = vunpack.c.l.b16 %v756
    %v1190 = vunpack.c.l.b16 %v757
    %v1191 = vunpack.c.l.b16 %v758
    %v1192 = vunpack.c.l.b16 %v759
    %v1193 = vunpack.c.l.b16 %v760
    %v1194 = vunpack.c.l.b16 %v761
    %v1195 = vunpack.c.l.b16 %v762
    %v1196 = vunpack.c.l.b16 %v763
    %v1197 = vunpack.c.l.b16 %v764
    %v1198 = vunpack.c.l.b16 %v765
    %v1199 = vunpack.c.l.b16 %v766
    %v1200 = vunpack.c.l.b16 %v767
    %v1201 = vunpack.c.l.b16 %v768
    %v1202 = vunpack.c.l.b16 %v769
    %v1203 = vunpack.c.l.b16 %v770
    %v1204 = vunpack.c.l.b16 %v771
    %v1205 = vunpack.c.l.b16 %v772
    %v1206 = vunpack.c.l.b16 %v773
    %v1207 = vunpack.c.l.b16 %v774
    %v1208 = vunpack.c.l.b16 %v775
    %v1209 = vunpack.c.l.b16 %v776
    %v1210 = vunpack.c.l.b16 %v777
    %v1211 = vunpack.c.l.b16 %v778
    %v1212 = vunpack.c.l.b16 %v779
    %v1213 = vunpack.c.l.b16 %v780
    %v1214 = vunpack.c.l.b16 %v781
    %v1215 = vunpack.c.l.b16 %v782
    %v1216 = vunpack.c.l.b16 %v783
    %v1217 = vunpack.c.l.b16 %v784
    %v1218 = vunpack.c.l.b16 %v785
    %v1219 = vunpack.c.l.b16 %v786
    %v1220 = vunpack.c.l.b16 %v787
    %v1221 = vunpack.c.l.b16 %v788
    %v1222 = vunpack.c.l.b16 %v789
    %v1223 = vunpack.c.l.b16 %v790
    %v1224 = vunpack.c.l.b16 %v791
    %v1225 = vunpack.c.l.b16 %v792
    %v1226 = vunpack.c.l.b16 %v793
    %v1227 = vunpack.c.l.b16 %v794
    %v1228 = vunpack.c.l.b16 %v795
    %v1229 = vunpack.c.l.b16 %v796
    %v1230 = vunpack.c.l.b16 %v797
    %v1231 = vunpack.c.l.b16 %v798
    %v1232 = vunpack.c.l.b16 %v799
    %v1233 = vunpack.c.l.b16 %v800
    %v1234 = vunpack.c.l.b16 %v801
    %v1235 = vunpack.c.l.b16 %v802
    %v1236 = vunpack.c.l.b16 %v803
    %v1237 = vunpack.c.l.b16 %v804
    %v1238 = vunpack.c.l.b16 %v805
    %v1239 = vunpack.c.l.b16 %v806
    %v1240 = vunpack.c.l.b16 %v807
    %v1241 = vunpack.c.l.b16 %v808
    %v1242 = vunpack.c.l.b16 %v809
    %v1243 = vunpack.c.l.b16 %v810
    %v1244 = vunpack.c.l.b16 %v811
    %v1245 = vunpack.c.l.b16 %v812
    %v1246 = vunpack.c.l.b16 %v813
    %v1247 = vunpack.c.l.b16 %v814
    %v1248 = vunpack.c.l.b16 %v815
    %v1249 = vunpack.c.l.b16 %v816
    %v1250 = vunpack.c.l.b16 %v817
    %v1251 = vunpack.c.l.b16 %v818
    %v1252 = vunpack.c.l.b16 %v819
    %v1253 = vunpack.c.l.b16 %v820
    %v1254 = vunpack.c.l.b16 %v821
    %v1255 = vunpack.c.l.b16 %v822
    %v1256 = vunpack.c.l.b16 %v823
    %v1257 = vunpack.c.l.b16 %v824
    %v1258 = vunpack.c.l.b16 %v825
    %v1259 = vunpack.c.l.b16 %v826
    %v1260 = vunpack.c.l.b16 %v827
    %v1261 = vunpack.c.l.b16 %v828
    %v1262 = vunpack.c.l.b16 %v829
    %v1263 = vunpack.c.l.b16 %v830
    %v1264 = vunpack.c.l.b16 %v831
    %v1265 = vunpack.c.l.b16 %v832
    %v1266 = vunpack.c.l.b16 %v833
    %v1267 = vunpack.c.l.b16 %v834
    %v1268 = vunpack.c.l.b16 %v835
    %v1269 = vunpack.c.l.b16 %v836
    %v1270 = vunpack.c.l.b16 %v837
    %v1271 = vunpack.c.l.b16 %v838
    %v1272 = vunpack.c.l.b16 %v839
    %v1273 = vunpack.c.l.b16 %v840
    %v1274 = vunpack.c.l.b16 %v841
    %v1275 = vunpack.c.l.b16 %v842
    %v1276 = vunpack.c.l.b16 %v843
    %v1277 = vunpack.c.l.b16 %v844
    %v1278 = vunpack.c.l.b16 %v845
    %v1279 = vunpack.c.l.b16 %v846
    %v1280 = vunpack.c.l.b16 %v847
    %v1281 = vunpack.c.l.b16 %v848
    %v1282 = vunpack.c.l.b16 %v849
    %v1283 = vunpack.c.l.b16 %v850
    %v1284 = vunpack.c.l.b16 %v851
    %v1285 = vunpack.c.l.b16 %v852
    %v1286 = vunpack.c.l.b16 %v853
    %v1287 = vunpack.c.l.b16 %v854
    %v1288 = vunpack.c.l.b16 %v855
    %v1289 = vunpack.c.l.b16 %v856
    %v1290 = vunpack.c.l.b16 %v857
    %v1291 = vunpack.c.l.b16 %v858
    %v1292 = vunpack.c.l.b16 %v859
    %v1293 = vunpack.c.l.b16 %v860
    %v1294 = vunpack.c.l.b16 %v861
    %v1295 = vunpack.c.l.b16 %v862
    %v1296 = vunpack.c.l.b16 %v863
    %v1297 = vunpack.c.l.b16 %v864
    %v1298 = vunpack.c.l.b16 %v865
    %v1299 = vunpack.c.l.b16 %v866
    %v1300 = vunpack.c.l.b16 %v867
    %v1301 = vunpack.c.l.b16 %v868
    %v1302 = vunpack.c.l.b16 %v869
    %v1303 = vunpack.c.l.b16 %v870
    %v1304 = vunpack.c.l.b16 %v871
    %v1305 = vunpack.c.l.b16 %v872
    %v1306 = vunpack.c.l.b16 %v873
    %v1307 = vunpack.c.l.b16 %v874
    %v1308 = vunpack.c.l.b16 %v875
    %v1309 = vunpack.c.l.b16 %v876
    %v1310 = vunpack.c.l.b16 %v877
    %v1311 = vunpack.c.l.b16 %v878
    %v1312 = vunpack.c.l.b16 %v879
    %v1313 = vunpack.c.l.b16 %v880
    %v1314 = vunpack.c.l.b16 %v881
    %v1315 = vunpack.c.l.b16 %v882
    %v1316 = vunpack.c.l.b16 %v883
    %v1317 = vunpack.c.l.b16 %v884
    %v1318 = vunpack.c.l.b16 %v885
    %v1319 = vunpack.c.l.b16 %v886
    %v1320 = vunpack.c.l.b16 %v887
    %v1321 = vunpack.c.l.b16 %v888
    %v1322 = vunpack.c.l.b16 %v889
    %v1323 = vunpack.c.l.b16 %v890
    %v1324 = vunpack.c.l.b16 %v891
    %v1325 = vunpack.c.l.b16 %v892
    %v1326 = vunpack.c.l.b16 %v893
    %v1327 = vunpack.c.l.b16 %v894
    %v1328 = vpack.c.b16 %v1137, %v1136
    %v1329 = vpack.c.b16 %v1139, %v1138
    %v1330 = vpack.c.b16 %v1141, %v1140
    %v1331 = vpack.c.b16 %v1143, %v1142
    %v1332 = vpack.c.b16 %v1145, %v1144
    %v1333 = vpack.c.b16 %v1147, %v1146
    %v1334 = vpack.c.b16 %v1149, %v1148
    %v1335 = vpack.c.b16 %v1151, %v1150
    %v1336 = vpack.c.b16 %v1153, %v1152
    %v1337 = vpack.c.b16 %v1155, %v1154
    %v1338 = vpack.c.b16 %v1157, %v1156
    %v1339 = vpack.c.b16 %v1159, %v1158
    %v1340 = vpack.c.b16 %v1161, %v1160
    %v1341 = vpack.c.b16 %v1163, %v1162
    %v1342 = vpack.c.b16 %v1165, %v1164
    %v1343 = vpack.c.b16 %v1167, %v1166
    %v1344 = vpack.c.b16 %v1169, %v1168
    %v1345 = vpack.c.b16 %v1171, %v1170
    %v1346 = vpack.c.b16 %v1173, %v1172
    %v1347 = vpack.c.b16 %v1175, %v1174
    %v1348 = vpack.c.b16 %v1177, %v1176
    %v1349 = vpack.c.b16 %v1179, %v1178
    %v1350 = vpack.c.b16 %v1181, %v1180
    %v1351 = vpack.c.b16 %v1183, %v1182
    %v1352 = vpack.c.b16 %v1185, %v1184
    %v1353 = vpack.c.b16 %v1187, %v1186
    %v1354 = vpack.c.b16 %v1189, %v1188
    %v1355 = vpack.c.b16 %v1191, %v1190
    %v1356 = vpack.c.b16 %v1193, %v1192
    %v1357 = vpack.c.b16 %v1195, %v1194
    %v1358 = vpack.c.b16 %v1197, %v1196
    %v1359 = vpack.c.b16 %v1199, %v1198
    %v1360 = vpack.c.b16 %v1201, %v1200
    %v1361 = vpack.c.b16 %v1203, %v1202
    %v1362 = vpack.c.b16 %v1205, %v1204
    %v1363 = vpack.c.b16 %v1207, %v1206
    %v1364 = vpack.c.b16 %v1209, %v1208
    %v1365 = vpack.c.b16 %v1211, %v1210
    %v1366 = vpack.c.b16 %v1213, %v1212
    %v1367 = vpack.c.b16 %v1215, %v1214
    %v1368 = vpack.c.b16 %v1217, %v1216
    %v1369 = vpack.c.b16 %v1219, %v1218
    %v1370 = vpack.c.b16 %v1221, %v1220
    %v1371 = vpack.c.b16 %v1223, %v1222
    %v1372 = vpack.c.b16 %v1225, %v1224
    %v1373 = vpack.c.b16 %v1227, %v1226
    %v1374 = vpack.c.b16 %v1229, %v1228
    %v1375 = vpack.c.b16 %v1231, %v1230
    %v1376 = vpack.c.b16 %v1233, %v1232
    %v1377 = vpack.c.b16 %v1235, %v1234
    %v1378 = vpack.c.b16 %v1237, %v1236
    %v1379 = vpack.c.b16 %v1239, %v1238
    %v1380 = vpack.c.b16 %v1241, %v1240
    %v1381 = vpack.c.b16 %v1243, %v1242
    %v1382 = vpack.c.b16 %v1245, %v1244
    %v1383 = vpack.c.b16 %v1247, %v1246
    %v1384 = vpack.c.b16 %v1249, %v1248
    %v1385 = vpack.c.b16 %v1251, %v1250
    %v1386 = vpack.c.b16 %v1253, %v1252
    %v1387 = vpack.c.b16 %v1255, %v1254
    %v1388 = vpack.c.b16 %v1257, %v1256
    %v1389 = vpack.c.b16 %v1259, %v1258
    %v1390 = vpack.c.b16 %v1261, %v1260
    %v1391 = vpack.c.b16 %v1263, %v1262
    %v1392 = vpack.c.b16 %v1265, %v1264
    %v1393 = vpack.c.b16 %v1267, %v1266
    %v1394 = vpack.c.b16 %v1269, %v1268
    %v1395 = vpack.c.b16 %v1271, %v1270
    %v1396 = vpack.c.b16 %v1273, %v1272
    %v1397 = vpack.c.b16 %v1275, %v1274
    %v1398 = vpack.c.b16 %v1277, %v1276
    %v1399 = vpack.c.b16 %v1279, %v1278
    %v1400 = vpack.c.b16 %v1281, %v1280
    %v1401 = vpack.c.b16 %v1283, %v1282
    %v1402 = vpack.c.b16 %v1285, %v1284
    %v1403 = vpack.c.b16 %v1287, %v1286
    %v1404 = vpack.c.b16 %v1289, %v1288
    %v1405 = vpack.c.b16 %v1291, %v1290
    %v1406 = vpack.c.b16 %v1293, %v1292
    %v1407 = vpack.c.b16 %v1295, %v1294
    %v1408 = vpack.c.b16 %v1297, %v1296
    %v1409 = vpack.c.b16 %v1299, %v1298
    %v1410 = vpack.c.b16 %v1301, %v1300
    %v1411 = vpack.c.b16 %v1303, %v1302
    %v1412 = vpack.c.b16 %v1305, %v1304
    %v1413 = vpack.c.b16 %v1307, %v1306
    %v1414 = vpack.c.b16 %v1309, %v1308
    %v1415 = vpack.c.b16 %v1311, %v1310
    %v1416 = vpack.c.b16 %v1313, %v1312
    %v1417 = vpack.c.b16 %v1315, %v1314
    %v1418 = vpack.c.b16 %v1317, %v1316
    %v1419 = vpack.c.b16 %v1319, %v1318
    %v1420 = vpack.c.b16 %v1321, %v1320
    %v1421 = vpack.c.b16 %v1323, %v1322
    %v1422 = vpack.c.b16 %v1325, %v1324
    %v1423 = vpack.c.b16 %v1327, %v1326
    %1520 = vmatprep.subr.bf16.mxu0 0
    %1521 = vmatpush1.bf16.msra.mxu0 %v1335
    %1522 = vmatprep.subr.bf16.mxu0 0
    %1523 = vmatpush1.bf16.msra.mxu0 %v1334
    %1524 = vmatprep.subr.bf16.mxu0 0
    %1525 = vmatpush1.bf16.msra.mxu0 %v1333
    %1526 = vmatprep.subr.bf16.mxu0 0
    %1527 = vmatpush1.bf16.msra.mxu0 %v1332
    %1528 = vmatprep.subr.bf16.mxu0 0
    %1529 = vmatpush1.bf16.msra.mxu0 %v1331
    %1530 = vmatprep.subr.bf16.mxu0 0
    %1531 = vmatpush1.bf16.msra.mxu0 %v1330
    %1532 = vmatprep.subr.bf16.mxu0 0
    %1533 = vmatpush1.bf16.msra.mxu0 %v1329
    %1534 = vmatprep.subr.bf16.mxu0 0
    %1535 = vmatpush1.bf16.msra.mxu0 %v1328
    %1536 = vmatprep.subr.bf16.mxu0 0
    %1537 = vmatpush2.bf16.msra.mxu0 %v1343
    %1538 = vmatprep.subr.bf16.mxu0 0
    %1539 = vmatpush2.bf16.msra.mxu0 %v1342
    %1540 = vmatprep.subr.bf16.mxu0 0
    %1541 = vmatpush2.bf16.msra.mxu0 %v1341
    %1542 = vmatprep.subr.bf16.mxu0 0
    %1543 = vmatpush2.bf16.msra.mxu0 %v1340
    %1544 = vmatprep.subr.bf16.mxu0 0
    %1545 = vmatpush2.bf16.msra.mxu0 %v1339
    %1546 = vmatprep.subr.bf16.mxu0 0
    %1547 = vmatpush2.bf16.msra.mxu0 %v1338
    %1548 = vmatprep.subr.bf16.mxu0 0
    %1549 = vmatpush2.bf16.msra.mxu0 %v1337
    %1550 = vmatprep.subr.bf16.mxu0 0
    %1551 = vmatpush2.bf16.msra.mxu0 %v1336
    %1552 = vmatprep.mubr.bf16.mxu0 %v921
    %1553 = vmatmul.mubr.bf16.gmra.mxu0 %v920
    %v1554 = vpop.f32.mrf.mxu0
    %v1555 = vadd.f32 %v900, %v1554
    %v1556 = vpop.f32.mrf.mxu0
    %v1557 = vpop.f32.mrf.mxu0
    %v1558 = vpop.f32.mrf.mxu0
    %1559 = vdwg.mxu0
    %1560 = vmatprep.subr.bf16.mxu0 0
    %1561 = vmatpush1.bf16.msra.mxu0 %v1351
    %1562 = vmatprep.subr.bf16.mxu0 0
    %1563 = vmatpush1.bf16.msra.mxu0 %v1350
    %1564 = vmatprep.subr.bf16.mxu0 0
    %1565 = vmatpush1.bf16.msra.mxu0 %v1349
    %1566 = vmatprep.subr.bf16.mxu0 0
    %1567 = vmatpush1.bf16.msra.mxu0 %v1348
    %1568 = vmatprep.subr.bf16.mxu0 0
    %1569 = vmatpush1.bf16.msra.mxu0 %v1347
    %1570 = vmatprep.subr.bf16.mxu0 0
    %1571 = vmatpush1.bf16.msra.mxu0 %v1346
    %1572 = vmatprep.subr.bf16.mxu0 0
    %1573 = vmatpush1.bf16.msra.mxu0 %v1345
    %1574 = vmatprep.subr.bf16.mxu0 0
    %1575 = vmatpush1.bf16.msra.mxu0 %v1344
    %1576 = vmatprep.subr.bf16.mxu0 0
    %1577 = vmatpush2.bf16.msra.mxu0 %v1359
    %1578 = vmatprep.subr.bf16.mxu0 0
    %1579 = vmatpush2.bf16.msra.mxu0 %v1358
    %1580 = vmatprep.subr.bf16.mxu0 0
    %1581 = vmatpush2.bf16.msra.mxu0 %v1357
    %1582 = vmatprep.subr.bf16.mxu0 0
    %1583 = vmatpush2.bf16.msra.mxu0 %v1356
    %1584 = vmatprep.subr.bf16.mxu0 0
    %1585 = vmatpush2.bf16.msra.mxu0 %v1355
    %1586 = vmatprep.subr.bf16.mxu0 0
    %1587 = vmatpush2.bf16.msra.mxu0 %v1354
    %1588 = vmatprep.subr.bf16.mxu0 0
    %1589 = vmatpush2.bf16.msra.mxu0 %v1353
    %1590 = vmatprep.subr.bf16.mxu0 0
    %1591 = vmatpush2.bf16.msra.mxu0 %v1352
    %1592 = vmatprep.mubr.bf16.mxu0 %v923
    %1593 = vmatmul.mubr.bf16.gmra.mxu0 %v922
    %v1594 = vpop.f32.mrf.mxu0
    %v1595 = vadd.f32 %v1555, %v1594
    %v1596 = vpop.f32.mrf.mxu0
    %v1597 = vpop.f32.mrf.mxu0
    %v1598 = vpop.f32.mrf.mxu0
    %1599 = vdwg.mxu0
    %1600 = vmatprep.subr.bf16.mxu0 0
    %1601 = vmatpush1.bf16.msra.mxu0 %v1367
    %1602 = vmatprep.subr.bf16.mxu0 0
    %1603 = vmatpush1.bf16.msra.mxu0 %v1366
    %1604 = vmatprep.subr.bf16.mxu0 0
    %1605 = vmatpush1.bf16.msra.mxu0 %v1365
    %1606 = vmatprep.subr.bf16.mxu0 0
    %1607 = vmatpush1.bf16.msra.mxu0 %v1364
    %1608 = vmatprep.subr.bf16.mxu0 0
    %1609 = vmatpush1.bf16.msra.mxu0 %v1363
    %1610 = vmatprep.subr.bf16.mxu0 0
    %1611 = vmatpush1.bf16.msra.mxu0 %v1362
    %1612 = vmatprep.subr.bf16.mxu0 0
    %1613 = vmatpush1.bf16.msra.mxu0 %v1361
    %1614 = vmatprep.subr.bf16.mxu0 0
    %1615 = vmatpush1.bf16.msra.mxu0 %v1360
    %1616 = vmatprep.subr.bf16.mxu0 0
    %1617 = vmatpush2.bf16.msra.mxu0 %v1375
    %1618 = vmatprep.subr.bf16.mxu0 0
    %1619 = vmatpush2.bf16.msra.mxu0 %v1374
    %1620 = vmatprep.subr.bf16.mxu0 0
    %1621 = vmatpush2.bf16.msra.mxu0 %v1373
    %1622 = vmatprep.subr.bf16.mxu0 0
    %1623 = vmatpush2.bf16.msra.mxu0 %v1372
    %1624 = vmatprep.subr.bf16.mxu0 0
    %1625 = vmatpush2.bf16.msra.mxu0 %v1371
    %1626 = vmatprep.subr.bf16.mxu0 0
    %1627 = vmatpush2.bf16.msra.mxu0 %v1370
    %1628 = vmatprep.subr.bf16.mxu0 0
    %1629 = vmatpush2.bf16.msra.mxu0 %v1369
    %1630 = vmatprep.subr.bf16.mxu0 0
    %1631 = vmatpush2.bf16.msra.mxu0 %v1368
    %1632 = vmatprep.mubr.bf16.mxu0 %v925
    %1633 = vmatmul.mubr.bf16.gmra.mxu0 %v924
    %v1634 = vpop.f32.mrf.mxu0
    %v1635 = vadd.f32 %v1595, %v1634
    %v1636 = vpop.f32.mrf.mxu0
    %v1637 = vpop.f32.mrf.mxu0
    %v1638 = vpop.f32.mrf.mxu0
    %1639 = vdwg.mxu0
    %1640 = vmatprep.subr.bf16.mxu0 0
    %1641 = vmatpush1.bf16.msra.mxu0 %v1383
    %1642 = vmatprep.subr.bf16.mxu0 0
    %1643 = vmatpush1.bf16.msra.mxu0 %v1382
    %1644 = vmatprep.subr.bf16.mxu0 0
    %1645 = vmatpush1.bf16.msra.mxu0 %v1381
    %1646 = vmatprep.subr.bf16.mxu0 0
    %1647 = vmatpush1.bf16.msra.mxu0 %v1380
    %1648 = vmatprep.subr.bf16.mxu0 0
    %1649 = vmatpush1.bf16.msra.mxu0 %v1379
    %1650 = vmatprep.subr.bf16.mxu0 0
    %1651 = vmatpush1.bf16.msra.mxu0 %v1378
    %1652 = vmatprep.subr.bf16.mxu0 0
    %1653 = vmatpush1.bf16.msra.mxu0 %v1377
    %1654 = vmatprep.subr.bf16.mxu0 0
    %1655 = vmatpush1.bf16.msra.mxu0 %v1376
    %1656 = vmatprep.subr.bf16.mxu0 0
    %1657 = vmatpush2.bf16.msra.mxu0 %v1391
    %1658 = vmatprep.subr.bf16.mxu0 0
    %1659 = vmatpush2.bf16.msra.mxu0 %v1390
    %1660 = vmatprep.subr.bf16.mxu0 0
    %1661 = vmatpush2.bf16.msra.mxu0 %v1389
    %1662 = vmatprep.subr.bf16.mxu0 0
    %1663 = vmatpush2.bf16.msra.mxu0 %v1388
    %1664 = vmatprep.subr.bf16.mxu0 0
    %1665 = vmatpush2.bf16.msra.mxu0 %v1387
    %1666 = vmatprep.subr.bf16.mxu0 0
    %1667 = vmatpush2.bf16.msra.mxu0 %v1386
    %1668 = vmatprep.subr.bf16.mxu0 0
    %1669 = vmatpush2.bf16.msra.mxu0 %v1385
    %1670 = vmatprep.subr.bf16.mxu0 0
    %1671 = vmatpush2.bf16.msra.mxu0 %v1384
    %1672 = vmatprep.mubr.bf16.mxu0 %v927
    %1673 = vmatmul.mubr.bf16.gmra.mxu0 %v926
    %v1674 = vpop.f32.mrf.mxu0
    %v1675 = vadd.f32 %v1635, %v1674
    %v1676 = vpop.f32.mrf.mxu0
    %v1677 = vpop.f32.mrf.mxu0
    %v1678 = vpop.f32.mrf.mxu0
    %1679 = vdwg.mxu0
    %1680 = vmatprep.subr.bf16.mxu0 0
    %1681 = vmatpush1.bf16.msra.mxu0 %v1399
    %1682 = vmatprep.subr.bf16.mxu0 0
    %1683 = vmatpush1.bf16.msra.mxu0 %v1398
    %1684 = vmatprep.subr.bf16.mxu0 0
    %1685 = vmatpush1.bf16.msra.mxu0 %v1397
    %1686 = vmatprep.subr.bf16.mxu0 0
    %1687 = vmatpush1.bf16.msra.mxu0 %v1396
    %1688 = vmatprep.subr.bf16.mxu0 0
    %1689 = vmatpush1.bf16.msra.mxu0 %v1395
    %1690 = vmatprep.subr.bf16.mxu0 0
    %1691 = vmatpush1.bf16.msra.mxu0 %v1394
    %1692 = vmatprep.subr.bf16.mxu0 0
    %1693 = vmatpush1.bf16.msra.mxu0 %v1393
    %1694 = vmatprep.subr.bf16.mxu0 0
    %1695 = vmatpush1.bf16.msra.mxu0 %v1392
    %1696 = vmatprep.subr.bf16.mxu0 0
    %1697 = vmatpush2.bf16.msra.mxu0 %v1407
    %1698 = vmatprep.subr.bf16.mxu0 0
    %1699 = vmatpush2.bf16.msra.mxu0 %v1406
    %1700 = vmatprep.subr.bf16.mxu0 0
    %1701 = vmatpush2.bf16.msra.mxu0 %v1405
    %1702 = vmatprep.subr.bf16.mxu0 0
    %1703 = vmatpush2.bf16.msra.mxu0 %v1404
    %1704 = vmatprep.subr.bf16.mxu0 0
    %1705 = vmatpush2.bf16.msra.mxu0 %v1403
    %1706 = vmatprep.subr.bf16.mxu0 0
    %1707 = vmatpush2.bf16.msra.mxu0 %v1402
    %1708 = vmatprep.subr.bf16.mxu0 0
    %1709 = vmatpush2.bf16.msra.mxu0 %v1401
    %1710 = vmatprep.subr.bf16.mxu0 0
    %1711 = vmatpush2.bf16.msra.mxu0 %v1400
    %1712 = vmatprep.mubr.bf16.mxu0 %v929
    %1713 = vmatmul.mubr.bf16.gmra.mxu0 %v928
    %v1714 = vpop.f32.mrf.mxu0
    %v1715 = vadd.f32 %v1675, %v1714
    %v1716 = vpop.f32.mrf.mxu0
    %v1717 = vpop.f32.mrf.mxu0
    %v1718 = vpop.f32.mrf.mxu0
    %1719 = vdwg.mxu0
    %1720 = vmatprep.subr.bf16.mxu0 0
    %1721 = vmatpush1.bf16.msra.mxu0 %v1415
    %1722 = vmatprep.subr.bf16.mxu0 0
    %1723 = vmatpush1.bf16.msra.mxu0 %v1414
    %1724 = vmatprep.subr.bf16.mxu0 0
    %1725 = vmatpush1.bf16.msra.mxu0 %v1413
    %1726 = vmatprep.subr.bf16.mxu0 0
    %1727 = vmatpush1.bf16.msra.mxu0 %v1412
    %1728 = vmatprep.subr.bf16.mxu0 0
    %1729 = vmatpush1.bf16.msra.mxu0 %v1411
    %1730 = vmatprep.subr.bf16.mxu0 0
    %1731 = vmatpush1.bf16.msra.mxu0 %v1410
    %1732 = vmatprep.subr.bf16.mxu0 0
    %1733 = vmatpush1.bf16.msra.mxu0 %v1409
    %1734 = vmatprep.subr.bf16.mxu0 0
    %1735 = vmatpush1.bf16.msra.mxu0 %v1408
    %1736 = vmatprep.subr.bf16.mxu0 0
    %1737 = vmatpush2.bf16.msra.mxu0 %v1423
    %1738 = vmatprep.subr.bf16.mxu0 0
    %1739 = vmatpush2.bf16.msra.mxu0 %v1422
    %1740 = vmatprep.subr.bf16.mxu0 0
    %1741 = vmatpush2.bf16.msra.mxu0 %v1421
    %1742 = vmatprep.subr.bf16.mxu0 0
    %1743 = vmatpush2.bf16.msra.mxu0 %v1420
    %1744 = vmatprep.subr.bf16.mxu0 0
    %1745 = vmatpush2.bf16.msra.mxu0 %v1419
    %1746 = vmatprep.subr.bf16.mxu0 0
    %1747 = vmatpush2.bf16.msra.mxu0 %v1418
    %1748 = vmatprep.subr.bf16.mxu0 0
    %1749 = vmatpush2.bf16.msra.mxu0 %v1417
    %1750 = vmatprep.subr.bf16.mxu0 0
    %1751 = vmatpush2.bf16.msra.mxu0 %v1416
    %1752 = vmatprep.mubr.bf16.mxu0 %v931
    %1753 = vmatmul.mubr.bf16.gmra.mxu0 %v930
    %v1754 = vpop.f32.mrf.mxu0
    %v1755 = vadd.f32 %v1715, %v1754
    %v1756 = vpop.f32.mrf.mxu0
    %v1757 = vpop.f32.mrf.mxu0
    %v1758 = vpop.f32.mrf.mxu0
    %1759 = vdwg.mxu0
    %v1760 = vld [vmem:[%s5] sm:$0xff]
    %v1761 = vld [vmem:[#allocation13] sm:$0x1]
    %1763 = vset.pattern.permute.xlu0 0
    %1764 = vperm.xlu0 %1763, %v1760
    %v1765 = vpop.permute.xlu0 %1764
    %v1767 = vlaneseq
    %v1768 = vshrl.u32 %v1767, 7
    %v1769 = vsub.s32 0, %v1768
    %v1770 = vrot.slane %v1761, %v1769
    %v1771 = vmul.f32 %v1765, %v1770
    %v1772 = vld [vmem:[#allocation13 + $0x1] sm:$0x1]
    %1773 = vset.pattern.permute.xlu0 1
    %1774 = vperm.xlu0 %1773, %v1760
    %v1775 = vpop.permute.xlu0 %1774
    %v1777 = vlaneseq
    %v1778 = vshrl.u32 %v1777, 7
    %v1779 = vsub.s32 0, %v1778
    %v1780 = vrot.slane %v1772, %v1779
    %v1781 = vmul.f32 %v1775, %v1780
    %v1782 = vadd.f32 %v1771, %v1781
    %v1783 = vld [vmem:[#allocation14] sm:$0x1]
    %v1785 = vlaneseq
    %v1786 = vshrl.u32 %v1785, 7
    %v1787 = vsub.s32 0, %v1786
    %v1788 = vrot.slane %v1783, %v1787
    %v1790 = vadd.f32 %v1782, %v1788
    %v1791 = vmul.f32 %v1790, 0.5
    %v1792 = vmul.f32 %v1790, 0.70710677
    %vm1793 = vcmp.ge.f32.partialorder %v1792, 0.0
    %v1794 = vsel %vm1793, 1.0, -1.0
    %v1795 = vand.u32 2147483647, %v1792
    %v1796 = vmul.f32 %v1795, 0.3275911
    %v1797 = vadd.f32 %v1796, 1.0
    %v1798 = vrcp.pop %v1797
    %v1799 = vmul.f32 1.0, %v1798
    %v1800 = vmul.f32 %v1799, 1.0614054
    %v1801 = vadd.f32 %v1800, -1.4531521
    %v1802 = vmul.f32 %v1801, %v1799
    %v1803 = vadd.f32 %v1802, 1.4214138
    %v1804 = vmul.f32 %v1803, %v1799
    %v1805 = vadd.f32 %v1804, -0.28449672
    %v1806 = vmul.f32 %v1805, %v1799
    %v1807 = vadd.f32 %v1806, 0.2548296
    %v1808 = vmul.f32 %v1807, %v1799
    %v1809 = vsub.f32 0.0, %v1795
    %v1810 = vmul.f32 %v1809, %v1795
    %v1811 = vmul.f32 %v1810, 1.442695
    %v1812 = vpow.pop %v1811
    %v1813 = vmul.f32 %v1808, %v1812
    %v1814 = vsub.f32 1.0, %v1813
    %v1815 = vmul.f32 %v1794, %v1814
    %v1816 = vadd.f32 %v1815, 1.0
    %v1817 = vmul.f32 %v1791, %v1816
    %v1818 = vpack.c.bf16 %v1817, %v1817
    %v1819 = vld [vmem:[#allocation16] sm:$0xf]
    %v1820 = vld [vmem:[#allocation16 + $0x4] sm:$0xf]
    %v1821 = vld [vmem:[#allocation16 + $0x8] sm:$0xf]
    %v1822 = vld [vmem:[#allocation16 + $0xc] sm:$0xf]
    %v1823 = vld [vmem:[#allocation16 + $0x10] sm:$0xf]
    %v1824 = vld [vmem:[#allocation16 + $0x14] sm:$0xf]
    %v1825 = vld [vmem:[#allocation16 + $0x18] sm:$0xf]
    %v1826 = vld [vmem:[#allocation16 + $0x1c] sm:$0xf]
    %v1827 = vld [vmem:[#allocation16 + $0x20] sm:$0xf]
    %v1828 = vld [vmem:[#allocation16 + $0x24] sm:$0xf]
    %v1829 = vld [vmem:[#allocation16 + $0x28] sm:$0xf]
    %v1830 = vld [vmem:[#allocation16 + $0x2c] sm:$0xf]
    %v1831 = vld [vmem:[#allocation16 + $0x30] sm:$0xf]
    %v1832 = vld [vmem:[#allocation16 + $0x34] sm:$0xf]
    %v1833 = vld [vmem:[#allocation16 + $0x38] sm:$0xf]
    %v1834 = vld [vmem:[#allocation16 + $0x3c] sm:$0xf]
    %v1835 = vld [vmem:[#allocation17] sm:$0x1]
    %v1837 = vlaneseq
    %v1838 = vshrl.u32 %v1837, 7
    %v1839 = vsub.s32 0, %v1838
    %v1840 = vrot.slane %v1835, %v1839
    %v1858 = vunpack.c.l.b16 %v1819
    %v1859 = vunpack.c.l.b16 %v1820
    %v1860 = vunpack.c.l.b16 %v1821
    %v1861 = vunpack.c.l.b16 %v1822
    %v1862 = vunpack.c.l.b16 %v1823
    %v1863 = vunpack.c.l.b16 %v1824
    %v1864 = vunpack.c.l.b16 %v1825
    %v1865 = vunpack.c.l.b16 %v1826
    %v1866 = vunpack.c.l.b16 %v1827
    %v1867 = vunpack.c.l.b16 %v1828
    %v1868 = vunpack.c.l.b16 %v1829
    %v1869 = vunpack.c.l.b16 %v1830
    %v1870 = vunpack.c.l.b16 %v1831
    %v1871 = vunpack.c.l.b16 %v1832
    %v1872 = vunpack.c.l.b16 %v1833
    %v1873 = vunpack.c.l.b16 %v1834
    %v1874 = vpack.c.b16 %v1859, %v1858
    %v1875 = vpack.c.b16 %v1861, %v1860
    %v1876 = vpack.c.b16 %v1863, %v1862
    %v1877 = vpack.c.b16 %v1865, %v1864
    %v1878 = vpack.c.b16 %v1867, %v1866
    %v1879 = vpack.c.b16 %v1869, %v1868
    %v1880 = vpack.c.b16 %v1871, %v1870
    %v1881 = vpack.c.b16 %v1873, %v1872
    %1890 = vmatprep.subr.bf16.mxu0 0
    %1891 = vmatpush1.bf16.msra.mxu0 %v1881
    %1892 = vmatprep.subr.bf16.mxu0 0
    %1893 = vmatpush1.bf16.msra.mxu0 %v1880
    %1894 = vmatprep.subr.bf16.mxu0 0
    %1895 = vmatpush1.bf16.msra.mxu0 %v1879
    %1896 = vmatprep.subr.bf16.mxu0 0
    %1897 = vmatpush1.bf16.msra.mxu0 %v1878
    %1898 = vmatprep.subr.bf16.mxu0 0
    %1899 = vmatpush1.bf16.msra.mxu0 %v1877
    %1900 = vmatprep.subr.bf16.mxu0 0
    %1901 = vmatpush1.bf16.msra.mxu0 %v1876
    %1902 = vmatprep.subr.bf16.mxu0 0
    %1903 = vmatpush1.bf16.msra.mxu0 %v1875
    %1904 = vmatprep.subr.bf16.mxu0 0
    %1905 = vmatpush1.bf16.msra.mxu0 %v1874
    %1906 = vmatprep.subr.bf16.mxu0 0
    %1907 = vmatpush2.bf16.msra.mxu0 0
    %1908 = vmatprep.subr.bf16.mxu0 0
    %1909 = vmatpush2.bf16.msra.mxu0 0
    %1910 = vmatprep.subr.bf16.mxu0 0
    %1911 = vmatpush2.bf16.msra.mxu0 0
    %1912 = vmatprep.subr.bf16.mxu0 0
    %1913 = vmatpush2.bf16.msra.mxu0 0
    %1914 = vmatprep.subr.bf16.mxu0 0
    %1915 = vmatpush2.bf16.msra.mxu0 0
    %1916 = vmatprep.subr.bf16.mxu0 0
    %1917 = vmatpush2.bf16.msra.mxu0 0
    %1918 = vmatprep.subr.bf16.mxu0 0
    %1919 = vmatpush2.bf16.msra.mxu0 0
    %1920 = vmatprep.subr.bf16.mxu0 0
    %1921 = vmatpush2.bf16.msra.mxu0 0
    %1922 = vmatprep.mubr.bf16.mxu0 0
    %1923 = vmatmul.mubr.bf16.gmra.mxu0 %v1818
    %v1924 = vpop.f32.mrf.mxu0
    %v1925 = vadd.f32 %v1840, %v1924
    %v1926 = vpop.f32.mrf.mxu0
    %v1927 = vpop.f32.mrf.mxu0
    %v1928 = vpop.f32.mrf.mxu0
    %1929 = vdwg.mxu0
    %v1930 = vld [vmem:[#allocation19] sm:$0x1]
    %v1932 = vlaneseq
    %v1933 = vshrl.u32 %v1932, 7
    %v1934 = vsub.s32 0, %v1933
    %v1935 = vrot.slane %v1930, %v1934
    %v1937 = vld [vmem:[#allocation20] sm:$0xf]
    %v1938 = vld [vmem:[#allocation20 + $0x4] sm:$0xf]
    %v1939 = vld [vmem:[#allocation20 + $0x8] sm:$0xf]
    %v1940 = vld [vmem:[#allocation20 + $0xc] sm:$0xf]
    %v1941 = vld [vmem:[#allocation20 + $0x10] sm:$0xf]
    %v1942 = vld [vmem:[#allocation20 + $0x14] sm:$0xf]
    %v1943 = vld [vmem:[#allocation20 + $0x18] sm:$0xf]
    %v1944 = vld [vmem:[#allocation20 + $0x1c] sm:$0xf]
    %v1945 = vld [vmem:[#allocation20 + $0x20] sm:$0xf]
    %v1946 = vld [vmem:[#allocation20 + $0x24] sm:$0xf]
    %v1947 = vld [vmem:[#allocation20 + $0x28] sm:$0xf]
    %v1948 = vld [vmem:[#allocation20 + $0x2c] sm:$0xf]
    %v1949 = vld [vmem:[#allocation20 + $0x30] sm:$0xf]
    %v1950 = vld [vmem:[#allocation20 + $0x34] sm:$0xf]
    %v1951 = vld [vmem:[#allocation20 + $0x38] sm:$0xf]
    %v1952 = vld [vmem:[#allocation20 + $0x3c] sm:$0xf]
    loop: start=0, step=1, limit=4
    $region186: #{tpu_custom_call.1} parent=1 // loop_pre_header
      _
    $region187: #{tpu_custom_call.1} parent=1 // loop_header
      %s1954 = sphi 0, %s1958
      %p1955 = scmp.ge.s32.totalorder %s1954, 4
      %v1959 = vphi %v1935, %v3580
      %v1960 = vphi %v692, %v3581
      %v1961 = vphi %v1755, %v3582
      %v1962 = vphi %v1925, %v3583
    $region188: #{tpu_custom_call.1} parent=1 // loop_header_branch
      %1957 = sbr.rel (%p1955) target = $region192
    $region189: #{tpu_custom_call.1} parent=1 // loop_body
      %v1963 = vpack.c.bf16 %v1960, %v1959
      %v1964 = vpack.c.bf16 %v1962, %v1961
      %s1965 = smul.u32 %s1954, 48
      %s1966 = smul.addr %s1965, 4
      %s1967 = scalar_lea.vmem [#allocation22], %s1966
      %v1968 = vld [vmem:[%s1967] sm:$0xff]
      %v1969 = vld [vmem:[%s1967 + $0x8] sm:$0xf]
      %v1970 = vld [vmem:[%s1967 + $0xc] sm:$0xff]
      %v1971 = vld [vmem:[%s1967 + $0x14] sm:$0xf]
      %v1972 = vld [vmem:[%s1967 + $0x18] sm:$0xff]
      %v1973 = vld [vmem:[%s1967 + $0x20] sm:$0xf]
      %v1974 = vld [vmem:[%s1967 + $0x24] sm:$0xff]
      %v1975 = vld [vmem:[%s1967 + $0x2c] sm:$0xf]
      %v1976 = vld [vmem:[%s1967 + $0x30] sm:$0xff]
      %v1977 = vld [vmem:[%s1967 + $0x38] sm:$0xf]
      %v1978 = vld [vmem:[%s1967 + $0x3c] sm:$0xff]
      %v1979 = vld [vmem:[%s1967 + $0x44] sm:$0xf]
      %v1980 = vld [vmem:[%s1967 + $0x48] sm:$0xff]
      %v1981 = vld [vmem:[%s1967 + $0x50] sm:$0xf]
      %v1982 = vld [vmem:[%s1967 + $0x54] sm:$0xff]
      %v1983 = vld [vmem:[%s1967 + $0x5c] sm:$0xf]
      %v1984 = vld [vmem:[%s1967 + $0x60] sm:$0xff]
      %v1985 = vld [vmem:[%s1967 + $0x68] sm:$0xf]
      %v1986 = vld [vmem:[%s1967 + $0x6c] sm:$0xff]
      %v1987 = vld [vmem:[%s1967 + $0x74] sm:$0xf]
      %v1988 = vld [vmem:[%s1967 + $0x78] sm:$0xff]
      %v1989 = vld [vmem:[%s1967 + $0x80] sm:$0xf]
      %v1990 = vld [vmem:[%s1967 + $0x84] sm:$0xff]
      %v1991 = vld [vmem:[%s1967 + $0x8c] sm:$0xf]
      %v1992 = vld [vmem:[%s1967 + $0x90] sm:$0xff]
      %v1993 = vld [vmem:[%s1967 + $0x98] sm:$0xf]
      %v1994 = vld [vmem:[%s1967 + $0x9c] sm:$0xff]
      %v1995 = vld [vmem:[%s1967 + $0xa4] sm:$0xf]
      %v1996 = vld [vmem:[%s1967 + $0xa8] sm:$0xff]
      %v1997 = vld [vmem:[%s1967 + $0xb0] sm:$0xf]
      %v1998 = vld [vmem:[%s1967 + $0xb4] sm:$0xff]
      %v1999 = vld [vmem:[%s1967 + $0xbc] sm:$0xf]
      %s2000 = smul.u32 %s1954, 3
      %s2001 = scalar_lea.vmem %s29, %s2000
      %v2002 = vld [vmem:[%s2001] sm:$0x7]
      %v2004 = vlaneseq
      %v2005 = vshrl.u32 %v2004, 7
      %v2006 = vsub.s32 0, %v2005
      %v2007 = vrot.slane %v2002, %v2006
      %v2008 = vlaneseq
      %v2009 = vshrl.u32 %v2008, 7
      %v2010 = vsub.s32 1, %v2009
      %v2011 = vrot.slane %v2002, %v2010
      %v2012 = vlaneseq
      %v2013 = vshrl.u32 %v2012, 7
      %v2014 = vsub.s32 2, %v2013
      %v2015 = vrot.slane %v2002, %v2014
      %v2051 = vunpack.c.l.b16 %v1968
      %v2052 = vunpack.c.h.b16 %v1968
      %v2053 = vunpack.c.l.b16 %v1969
      %v2054 = vunpack.c.l.b16 %v1970
      %v2055 = vunpack.c.h.b16 %v1970
      %v2056 = vunpack.c.l.b16 %v1971
      %v2057 = vunpack.c.l.b16 %v1972
      %v2058 = vunpack.c.h.b16 %v1972
      %v2059 = vunpack.c.l.b16 %v1973
      %v2060 = vunpack.c.l.b16 %v1974
      %v2061 = vunpack.c.h.b16 %v1974
      %v2062 = vunpack.c.l.b16 %v1975
      %v2063 = vunpack.c.l.b16 %v1976
      %v2064 = vunpack.c.h.b16 %v1976
      %v2065 = vunpack.c.l.b16 %v1977
      %v2066 = vunpack.c.l.b16 %v1978
      %v2067 = vunpack.c.h.b16 %v1978
      %v2068 = vunpack.c.l.b16 %v1979
      %v2069 = vunpack.c.l.b16 %v1980
      %v2070 = vunpack.c.h.b16 %v1980
      %v2071 = vunpack.c.l.b16 %v1981
      %v2072 = vunpack.c.l.b16 %v1982
      %v2073 = vunpack.c.h.b16 %v1982
      %v2074 = vunpack.c.l.b16 %v1983
      %v2075 = vunpack.c.l.b16 %v1984
      %v2076 = vunpack.c.h.b16 %v1984
      %v2077 = vunpack.c.l.b16 %v1985
      %v2078 = vunpack.c.l.b16 %v1986
      %v2079 = vunpack.c.h.b16 %v1986
      %v2080 = vunpack.c.l.b16 %v1987
      %v2081 = vunpack.c.l.b16 %v1988
      %v2082 = vunpack.c.h.b16 %v1988
      %v2083 = vunpack.c.l.b16 %v1989
      %v2084 = vunpack.c.l.b16 %v1990
      %v2085 = vunpack.c.h.b16 %v1990
      %v2086 = vunpack.c.l.b16 %v1991
      %v2087 = vunpack.c.l.b16 %v1992
      %v2088 = vunpack.c.h.b16 %v1992
      %v2089 = vunpack.c.l.b16 %v1993
      %v2090 = vunpack.c.l.b16 %v1994
      %v2091 = vunpack.c.h.b16 %v1994
      %v2092 = vunpack.c.l.b16 %v1995
      %v2093 = vunpack.c.l.b16 %v1996
      %v2094 = vunpack.c.h.b16 %v1996
      %v2095 = vunpack.c.l.b16 %v1997
      %v2096 = vunpack.c.l.b16 %v1998
      %v2097 = vunpack.c.h.b16 %v1998
      %v2098 = vunpack.c.l.b16 %v1999
      %v2099 = vpack.c.b16 %v2054, %v2051
      %v2100 = vpack.c.b16 %v2055, %v2052
      %v2101 = vpack.c.b16 %v2056, %v2053
      %v2102 = vpack.c.b16 %v2060, %v2057
      %v2103 = vpack.c.b16 %v2061, %v2058
      %v2104 = vpack.c.b16 %v2062, %v2059
      %v2105 = vpack.c.b16 %v2066, %v2063
      %v2106 = vpack.c.b16 %v2067, %v2064
      %v2107 = vpack.c.b16 %v2068, %v2065
      %v2108 = vpack.c.b16 %v2072, %v2069
      %v2109 = vpack.c.b16 %v2073, %v2070
      %v2110 = vpack.c.b16 %v2074, %v2071
      %v2111 = vpack.c.b16 %v2078, %v2075
      %v2112 = vpack.c.b16 %v2079, %v2076
      %v2113 = vpack.c.b16 %v2080, %v2077
      %v2114 = vpack.c.b16 %v2084, %v2081
      %v2115 = vpack.c.b16 %v2085, %v2082
      %v2116 = vpack.c.b16 %v2086, %v2083
      %v2117 = vpack.c.b16 %v2090, %v2087
      %v2118 = vpack.c.b16 %v2091, %v2088
      %v2119 = vpack.c.b16 %v2092, %v2089
      %v2120 = vpack.c.b16 %v2096, %v2093
      %v2121 = vpack.c.b16 %v2097, %v2094
      %v2122 = vpack.c.b16 %v2098, %v2095
      %2147 = vmatprep.subr.bf16.mxu0 %v2121
      %2148 = vmatpush1.bf16.msra.mxu0 %v2120
      %2149 = vmatprep.subr.bf16.mxu0 %v2118
      %2150 = vmatpush1.bf16.msra.mxu0 %v2117
      %2151 = vmatprep.subr.bf16.mxu0 %v2115
      %2152 = vmatpush1.bf16.msra.mxu0 %v2114
      %2153 = vmatprep.subr.bf16.mxu0 %v2112
      %2154 = vmatpush1.bf16.msra.mxu0 %v2111
      %2155 = vmatprep.subr.bf16.mxu0 %v2109
      %2156 = vmatpush1.bf16.msra.mxu0 %v2108
      %2157 = vmatprep.subr.bf16.mxu0 %v2106
      %2158 = vmatpush1.bf16.msra.mxu0 %v2105
      %2159 = vmatprep.subr.bf16.mxu0 %v2103
      %2160 = vmatpush1.bf16.msra.mxu0 %v2102
      %2161 = vmatprep.subr.bf16.mxu0 %v2100
      %2162 = vmatpush1.bf16.msra.mxu0 %v2099
      %2163 = vmatprep.subr.bf16.mxu0 0
      %2164 = vmatpush2.bf16.msra.mxu0 0
      %2165 = vmatprep.subr.bf16.mxu0 0
      %2166 = vmatpush2.bf16.msra.mxu0 0
      %2167 = vmatprep.subr.bf16.mxu0 0
      %2168 = vmatpush2.bf16.msra.mxu0 0
      %2169 = vmatprep.subr.bf16.mxu0 0
      %2170 = vmatpush2.bf16.msra.mxu0 0
      %2171 = vmatprep.subr.bf16.mxu0 0
      %2172 = vmatpush2.bf16.msra.mxu0 0
      %2173 = vmatprep.subr.bf16.mxu0 0
      %2174 = vmatpush2.bf16.msra.mxu0 0
      %2175 = vmatprep.subr.bf16.mxu0 0
      %2176 = vmatpush2.bf16.msra.mxu0 0
      %2177 = vmatprep.subr.bf16.mxu0 0
      %2178 = vmatpush2.bf16.msra.mxu0 0
      %2179 = vmatprep.mubr.bf16.mxu0 0
      %2180 = vmatmul.mubr.bf16.gmra.mxu0 %v1963
      %v2181 = vpop.f32.mrf.mxu0
      %v2182 = vadd.f32 %v2007, %v2181
      %v2183 = vpop.f32.mrf.mxu0
      %v2184 = vadd.f32 %v2011, %v2183
      %v2185 = vpop.f32.mrf.mxu0
      %v2186 = vadd.f32 %v2007, %v2185
      %v2187 = vpop.f32.mrf.mxu0
      %v2188 = vadd.f32 %v2011, %v2187
      %2189 = vmatprep.mubr.bf16.mxu0 0
      %2190 = vmatmul.mubr.bf16.gmra.mxu0 %v1964
      %v2191 = vpop.f32.mrf.mxu0
      %v2192 = vadd.f32 %v2007, %v2191
      %v2193 = vpop.f32.mrf.mxu0
      %v2194 = vadd.f32 %v2011, %v2193
      %v2195 = vpop.f32.mrf.mxu0
      %v2196 = vadd.f32 %v2007, %v2195
      %v2197 = vpop.f32.mrf.mxu0
      %v2198 = vadd.f32 %v2011, %v2197
      %2199 = vdwg.mxu0
      %2200 = vmatprep.subr.bf16.mxu0 0
      %2201 = vmatpush1.bf16.msra.mxu0 %v2122
      %2202 = vmatprep.subr.bf16.mxu0 0
      %2203 = vmatpush1.bf16.msra.mxu0 %v2119
      %2204 = vmatprep.subr.bf16.mxu0 0
      %2205 = vmatpush1.bf16.msra.mxu0 %v2116
      %2206 = vmatprep.subr.bf16.mxu0 0
      %2207 = vmatpush1.bf16.msra.mxu0 %v2113
      %2208 = vmatprep.subr.bf16.mxu0 0
      %2209 = vmatpush1.bf16.msra.mxu0 %v2110
      %2210 = vmatprep.subr.bf16.mxu0 0
      %2211 = vmatpush1.bf16.msra.mxu0 %v2107
      %2212 = vmatprep.subr.bf16.mxu0 0
      %2213 = vmatpush1.bf16.msra.mxu0 %v2104
      %2214 = vmatprep.subr.bf16.mxu0 0
      %2215 = vmatpush1.bf16.msra.mxu0 %v2101
      %2216 = vmatprep.subr.bf16.mxu0 0
      %2217 = vmatpush2.bf16.msra.mxu0 0
      %2218 = vmatprep.subr.bf16.mxu0 0
      %2219 = vmatpush2.bf16.msra.mxu0 0
      %2220 = vmatprep.subr.bf16.mxu0 0
      %2221 = vmatpush2.bf16.msra.mxu0 0
      %2222 = vmatprep.subr.bf16.mxu0 0
      %2223 = vmatpush2.bf16.msra.mxu0 0
      %2224 = vmatprep.subr.bf16.mxu0 0
      %2225 = vmatpush2.bf16.msra.mxu0 0
      %2226 = vmatprep.subr.bf16.mxu0 0
      %2227 = vmatpush2.bf16.msra.mxu0 0
      %2228 = vmatprep.subr.bf16.mxu0 0
      %2229 = vmatpush2.bf16.msra.mxu0 0
      %2230 = vmatprep.subr.bf16.mxu0 0
      %2231 = vmatpush2.bf16.msra.mxu0 0
      %2232 = vmatprep.mubr.bf16.mxu0 0
      %2233 = vmatmul.mubr.bf16.gmra.mxu0 %v1963
      %v2234 = vpop.f32.mrf.mxu0
      %v2235 = vadd.f32 %v2015, %v2234
      %v2236 = vpop.f32.mrf.mxu0
      %v2237 = vpop.f32.mrf.mxu0
      %v2238 = vadd.f32 %v2015, %v2237
      %v2239 = vpop.f32.mrf.mxu0
      %2240 = vmatprep.mubr.bf16.mxu0 0
      %2241 = vmatmul.mubr.bf16.gmra.mxu0 %v1964
      %v2242 = vpop.f32.mrf.mxu0
      %v2243 = vadd.f32 %v2015, %v2242
      %v2244 = vpop.f32.mrf.mxu0
      %v2245 = vpop.f32.mrf.mxu0
      %v2246 = vadd.f32 %v2015, %v2245
      %v2247 = vpop.f32.mrf.mxu0
      %2248 = vdwg.mxu0
      %v2249 = vmul.f32 %v2182, 0.25
      %v2250 = vmul.f32 %v2186, 0.25
      %v2251 = vmul.f32 %v2192, 0.25
      %v2252 = vmul.f32 %v2196, 0.25
      %v2253 = vmul.f32 %v2249, %v2184
      %v2254 = vmul.f32 %v2250, %v2184
      %v2255 = vmul.f32 %v2251, %v2184
      %v2256 = vmul.f32 %v2252, %v2184
      %v2257 = vmul.f32 %v2249, %v2188
      %v2258 = vmul.f32 %v2250, %v2188
      %v2259 = vmul.f32 %v2251, %v2188
      %v2260 = vmul.f32 %v2252, %v2188
      %v2261 = vmul.f32 %v2249, %v2194
      %v2262 = vmul.f32 %v2250, %v2194
      %v2263 = vmul.f32 %v2251, %v2194
      %v2264 = vmul.f32 %v2252, %v2194
      %v2265 = vmul.f32 %v2249, %v2198
      %v2266 = vmul.f32 %v2250, %v2198
      %v2267 = vmul.f32 %v2251, %v2198
      %v2268 = vmul.f32 %v2252, %v2198
      %v2269 = vpack.c.bf16 %v2253, %v2253
      %v2270 = vpack.c.bf16 %v2254, %v2254
      %v2271 = vpack.c.bf16 %v2255, %v2255
      %v2272 = vpack.c.bf16 %v2256, %v2256
      %v2273 = vpack.c.bf16 %v2257, %v2257
      %v2274 = vpack.c.bf16 %v2258, %v2258
      %v2275 = vpack.c.bf16 %v2259, %v2259
      %v2276 = vpack.c.bf16 %v2260, %v2260
      %v2277 = vpack.c.bf16 %v2261, %v2261
      %v2278 = vpack.c.bf16 %v2262, %v2262
      %v2279 = vpack.c.bf16 %v2263, %v2263
      %v2280 = vpack.c.bf16 %v2264, %v2264
      %v2281 = vpack.c.bf16 %v2265, %v2265
      %v2282 = vpack.c.bf16 %v2266, %v2266
      %v2283 = vpack.c.bf16 %v2267, %v2267
      %v2284 = vpack.c.bf16 %v2268, %v2268
      %v2301 = vunpack.c.l.b16 %v2269
      %v2302 = vunpack.c.l.b16 %v2270
      %v2303 = vunpack.c.l.b16 %v2271
      %v2304 = vunpack.c.l.b16 %v2272
      %v2305 = vunpack.c.l.b16 %v2273
      %v2306 = vunpack.c.l.b16 %v2274
      %v2307 = vunpack.c.l.b16 %v2275
      %v2308 = vunpack.c.l.b16 %v2276
      %v2309 = vunpack.c.l.b16 %v2277
      %v2310 = vunpack.c.l.b16 %v2278
      %v2311 = vunpack.c.l.b16 %v2279
      %v2312 = vunpack.c.l.b16 %v2280
      %v2313 = vunpack.c.l.b16 %v2281
      %v2314 = vunpack.c.l.b16 %v2282
      %v2315 = vunpack.c.l.b16 %v2283
      %v2316 = vunpack.c.l.b16 %v2284
      %v2317 = vpack.c.b16 %v2302, %v2301
      %v2318 = vpack.c.b16 %v2304, %v2303
      %v2319 = vpack.c.b16 %v2306, %v2305
      %v2320 = vpack.c.b16 %v2308, %v2307
      %v2321 = vpack.c.b16 %v2310, %v2309
      %v2322 = vpack.c.b16 %v2312, %v2311
      %v2323 = vpack.c.b16 %v2314, %v2313
      %v2324 = vpack.c.b16 %v2316, %v2315
      %v2349 = vunpack.c.l.b16 %v1937
      %v2350 = vunpack.c.l.b16 %v1938
      %v2351 = vunpack.c.l.b16 %v1939
      %v2352 = vunpack.c.l.b16 %v1940
      %v2353 = vunpack.c.l.b16 %v1941
      %v2354 = vunpack.c.l.b16 %v1942
      %v2355 = vunpack.c.l.b16 %v1943
      %v2356 = vunpack.c.l.b16 %v1944
      %v2357 = vunpack.c.l.b16 %v1945
      %v2358 = vunpack.c.l.b16 %v1946
      %v2359 = vunpack.c.l.b16 %v1947
      %v2360 = vunpack.c.l.b16 %v1948
      %v2361 = vunpack.c.l.b16 %v1949
      %v2362 = vunpack.c.l.b16 %v1950
      %v2363 = vunpack.c.l.b16 %v1951
      %v2364 = vunpack.c.l.b16 %v1952
      %v2365 = vpack.c.b16 %v2350, %v2349
      %v2366 = vpack.c.b16 %v2352, %v2351
      %v2367 = vpack.c.b16 %v2354, %v2353
      %v2368 = vpack.c.b16 %v2356, %v2355
      %v2369 = vpack.c.b16 %v2358, %v2357
      %v2370 = vpack.c.b16 %v2360, %v2359
      %v2371 = vpack.c.b16 %v2362, %v2361
      %v2372 = vpack.c.b16 %v2364, %v2363
      %2381 = vmatprep.subr.bf16.mxu0 0
      %2382 = vmatpush1.bf16.msra.mxu0 %v2372
      %2383 = vmatprep.subr.bf16.mxu0 0
      %2384 = vmatpush1.bf16.msra.mxu0 %v2371
      %2385 = vmatprep.subr.bf16.mxu0 0
      %2386 = vmatpush1.bf16.msra.mxu0 %v2370
      %2387 = vmatprep.subr.bf16.mxu0 0
      %2388 = vmatpush1.bf16.msra.mxu0 %v2369
      %2389 = vmatprep.subr.bf16.mxu0 0
      %2390 = vmatpush1.bf16.msra.mxu0 %v2368
      %2391 = vmatprep.subr.bf16.mxu0 0
      %2392 = vmatpush1.bf16.msra.mxu0 %v2367
      %2393 = vmatprep.subr.bf16.mxu0 0
      %2394 = vmatpush1.bf16.msra.mxu0 %v2366
      %2395 = vmatprep.subr.bf16.mxu0 0
      %2396 = vmatpush1.bf16.msra.mxu0 %v2365
      %2397 = vmatprep.subr.bf16.mxu0 0
      %2398 = vmatpush2.bf16.msra.mxu0 0
      %2399 = vmatprep.subr.bf16.mxu0 0
      %2400 = vmatpush2.bf16.msra.mxu0 0
      %2401 = vmatprep.subr.bf16.mxu0 0
      %2402 = vmatpush2.bf16.msra.mxu0 0
      %2403 = vmatprep.subr.bf16.mxu0 0
      %2404 = vmatpush2.bf16.msra.mxu0 0
      %2405 = vmatprep.subr.bf16.mxu0 0
      %2406 = vmatpush2.bf16.msra.mxu0 0
      %2407 = vmatprep.subr.bf16.mxu0 0
      %2408 = vmatpush2.bf16.msra.mxu0 0
      %2409 = vmatprep.subr.bf16.mxu0 0
      %2410 = vmatpush2.bf16.msra.mxu0 0
      %2411 = vmatprep.subr.bf16.mxu0 0
      %2412 = vmatpush2.bf16.msra.mxu0 0
      %2413 = vmatprep.mubr.bf16.mxu0 0
      %2414 = vmatmul.mubr.bf16.gmra.mxu0 %v2317
      %v2415 = vpop.f32.mrf.mxu0
      %v2416 = vadd.f32 0.0, %v2415
      %v2417 = vpop.f32.mrf.mxu0
      %v2418 = vpop.f32.mrf.mxu0
      %v2419 = vadd.f32 0.0, %v2418
      %v2420 = vpop.f32.mrf.mxu0
      %2421 = vmatprep.mubr.bf16.mxu0 0
      %2422 = vmatmul.mubr.bf16.gmra.mxu0 %v2318
      %v2423 = vpop.f32.mrf.mxu0
      %v2424 = vadd.f32 0.0, %v2423
      %v2425 = vpop.f32.mrf.mxu0
      %v2426 = vpop.f32.mrf.mxu0
      %v2427 = vadd.f32 0.0, %v2426
      %v2428 = vpop.f32.mrf.mxu0
      %2429 = vmatprep.mubr.bf16.mxu0 0
      %2430 = vmatmul.mubr.bf16.gmra.mxu0 %v2319
      %v2431 = vpop.f32.mrf.mxu0
      %v2432 = vadd.f32 0.0, %v2431
      %v2433 = vpop.f32.mrf.mxu0
      %v2434 = vpop.f32.mrf.mxu0
      %v2435 = vadd.f32 0.0, %v2434
      %v2436 = vpop.f32.mrf.mxu0
      %2437 = vmatprep.mubr.bf16.mxu0 0
      %2438 = vmatmul.mubr.bf16.gmra.mxu0 %v2320
      %v2439 = vpop.f32.mrf.mxu0
      %v2440 = vadd.f32 0.0, %v2439
      %v2441 = vpop.f32.mrf.mxu0
      %v2442 = vpop.f32.mrf.mxu0
      %v2443 = vadd.f32 0.0, %v2442
      %v2444 = vpop.f32.mrf.mxu0
      %2445 = vmatprep.mubr.bf16.mxu0 0
      %2446 = vmatmul.mubr.bf16.gmra.mxu0 %v2321
      %v2447 = vpop.f32.mrf.mxu0
      %v2448 = vadd.f32 0.0, %v2447
      %v2449 = vpop.f32.mrf.mxu0
      %v2450 = vpop.f32.mrf.mxu0
      %v2451 = vadd.f32 0.0, %v2450
      %v2452 = vpop.f32.mrf.mxu0
      %2453 = vmatprep.mubr.bf16.mxu0 0
      %2454 = vmatmul.mubr.bf16.gmra.mxu0 %v2322
      %v2455 = vpop.f32.mrf.mxu0
      %v2456 = vadd.f32 0.0, %v2455
      %v2457 = vpop.f32.mrf.mxu0
      %v2458 = vpop.f32.mrf.mxu0
      %v2459 = vadd.f32 0.0, %v2458
      %v2460 = vpop.f32.mrf.mxu0
      %2461 = vmatprep.mubr.bf16.mxu0 0
      %2462 = vmatmul.mubr.bf16.gmra.mxu0 %v2323
      %v2463 = vpop.f32.mrf.mxu0
      %v2464 = vadd.f32 0.0, %v2463
      %v2465 = vpop.f32.mrf.mxu0
      %v2466 = vpop.f32.mrf.mxu0
      %v2467 = vadd.f32 0.0, %v2466
      %v2468 = vpop.f32.mrf.mxu0
      %2469 = vmatprep.mubr.bf16.mxu0 0
      %2470 = vmatmul.mubr.bf16.gmra.mxu0 %v2324
      %v2471 = vpop.f32.mrf.mxu0
      %v2472 = vadd.f32 0.0, %v2471
      %v2473 = vpop.f32.mrf.mxu0
      %v2474 = vpop.f32.mrf.mxu0
      %v2475 = vadd.f32 0.0, %v2474
      %v2476 = vpop.f32.mrf.mxu0
      %2477 = vdwg.mxu0
      %v2478 = vmax.f32 %v2416, %v2432
      %v2479 = vmax.f32 %v2478, %v2448
      %v2480 = vmax.f32 %v2479, %v2464
      %v2481 = vmax.f32 %v2419, %v2435
      %v2482 = vmax.f32 %v2481, %v2451
      %v2483 = vmax.f32 %v2482, %v2467
      %v2484 = vmax.f32 %v2424, %v2440
      %v2485 = vmax.f32 %v2484, %v2456
      %v2486 = vmax.f32 %v2485, %v2472
      %v2487 = vmax.f32 %v2427, %v2443
      %v2488 = vmax.f32 %v2487, %v2459
      %v2489 = vmax.f32 %v2488, %v2475
      %v2490 = vsub.f32 %v2416, %v2480
      %v2491 = vsub.f32 %v2419, %v2483
      %v2492 = vsub.f32 %v2424, %v2486
      %v2493 = vsub.f32 %v2427, %v2489
      %v2494 = vsub.f32 %v2432, %v2480
      %v2495 = vsub.f32 %v2435, %v2483
      %v2496 = vsub.f32 %v2440, %v2486
      %v2497 = vsub.f32 %v2443, %v2489
      %v2498 = vsub.f32 %v2448, %v2480
      %v2499 = vsub.f32 %v2451, %v2483
      %v2500 = vsub.f32 %v2456, %v2486
      %v2501 = vsub.f32 %v2459, %v2489
      %v2502 = vsub.f32 %v2464, %v2480
      %v2503 = vsub.f32 %v2467, %v2483
      %v2504 = vsub.f32 %v2472, %v2486
      %v2505 = vsub.f32 %v2475, %v2489
      %v2506 = vmul.f32 %v2490, 1.442695
      %v2507 = vpow.pop %v2506
      %v2508 = vmul.f32 %v2491, 1.442695
      %v2509 = vpow.pop %v2508
      %v2510 = vmul.f32 %v2492, 1.442695
      %v2511 = vpow.pop %v2510
      %v2512 = vmul.f32 %v2493, 1.442695
      %v2513 = vpow.pop %v2512
      %v2514 = vmul.f32 %v2494, 1.442695
      %v2515 = vpow.pop %v2514
      %v2516 = vmul.f32 %v2495, 1.442695
      %v2517 = vpow.pop %v2516
      %v2518 = vmul.f32 %v2496, 1.442695
      %v2519 = vpow.pop %v2518
      %v2520 = vmul.f32 %v2497, 1.442695
      %v2521 = vpow.pop %v2520
      %v2522 = vmul.f32 %v2498, 1.442695
      %v2523 = vpow.pop %v2522
      %v2524 = vmul.f32 %v2499, 1.442695
      %v2525 = vpow.pop %v2524
      %v2526 = vmul.f32 %v2500, 1.442695
      %v2527 = vpow.pop %v2526
      %v2528 = vmul.f32 %v2501, 1.442695
      %v2529 = vpow.pop %v2528
      %v2530 = vmul.f32 %v2502, 1.442695
      %v2531 = vpow.pop %v2530
      %v2532 = vmul.f32 %v2503, 1.442695
      %v2533 = vpow.pop %v2532
      %v2534 = vmul.f32 %v2504, 1.442695
      %v2535 = vpow.pop %v2534
      %v2536 = vmul.f32 %v2505, 1.442695
      %v2537 = vpow.pop %v2536
      %v2538 = vadd.f32 %v2507, %v2515
      %v2539 = vadd.f32 %v2538, %v2523
      %v2540 = vadd.f32 %v2539, %v2531
      %v2541 = vadd.f32 %v2509, %v2517
      %v2542 = vadd.f32 %v2541, %v2525
      %v2543 = vadd.f32 %v2542, %v2533
      %v2544 = vadd.f32 %v2511, %v2519
      %v2545 = vadd.f32 %v2544, %v2527
      %v2546 = vadd.f32 %v2545, %v2535
      %v2547 = vadd.f32 %v2513, %v2521
      %v2548 = vadd.f32 %v2547, %v2529
      %v2549 = vadd.f32 %v2548, %v2537
      %v2550 = vrcp.pop %v2540
      %v2551 = vrcp.pop %v2543
      %v2552 = vrcp.pop %v2546
      %v2553 = vrcp.pop %v2549
      %v2554 = vmul.f32 %v2507, %v2550
      %v2555 = vmul.f32 %v2509, %v2551
      %v2556 = vmul.f32 %v2511, %v2552
      %v2557 = vmul.f32 %v2513, %v2553
      %v2558 = vmul.f32 %v2515, %v2550
      %v2559 = vmul.f32 %v2517, %v2551
      %v2560 = vmul.f32 %v2519, %v2552
      %v2561 = vmul.f32 %v2521, %v2553
      %v2562 = vmul.f32 %v2523, %v2550
      %v2563 = vmul.f32 %v2525, %v2551
      %v2564 = vmul.f32 %v2527, %v2552
      %v2565 = vmul.f32 %v2529, %v2553
      %v2566 = vmul.f32 %v2531, %v2550
      %v2567 = vmul.f32 %v2533, %v2551
      %v2568 = vmul.f32 %v2535, %v2552
      %v2569 = vmul.f32 %v2537, %v2553
      %v2570 = vmul.f32 %v2554, %v2235
      %v2571 = vmul.f32 %v2555, %v2235
      %v2572 = vmul.f32 %v2556, %v2235
      %v2573 = vmul.f32 %v2557, %v2235
      %v2574 = vmul.f32 %v2558, %v2238
      %v2575 = vmul.f32 %v2559, %v2238
      %v2576 = vmul.f32 %v2560, %v2238
      %v2577 = vmul.f32 %v2561, %v2238
      %v2578 = vmul.f32 %v2562, %v2243
      %v2579 = vmul.f32 %v2563, %v2243
      %v2580 = vmul.f32 %v2564, %v2243
      %v2581 = vmul.f32 %v2565, %v2243
      %v2582 = vmul.f32 %v2566, %v2246
      %v2583 = vmul.f32 %v2567, %v2246
      %v2584 = vmul.f32 %v2568, %v2246
      %v2585 = vmul.f32 %v2569, %v2246
      %v2586 = vadd.f32 %v2570, %v2574
      %v2587 = vadd.f32 %v2586, %v2578
      %v2588 = vadd.f32 %v2587, %v2582
      %v2589 = vadd.f32 %v2571, %v2575
      %v2590 = vadd.f32 %v2589, %v2579
      %v2591 = vadd.f32 %v2590, %v2583
      %v2592 = vadd.f32 %v2572, %v2576
      %v2593 = vadd.f32 %v2592, %v2580
      %v2594 = vadd.f32 %v2593, %v2584
      %v2595 = vadd.f32 %v2573, %v2577
      %v2596 = vadd.f32 %v2595, %v2581
      %v2597 = vadd.f32 %v2596, %v2585
      %v2598 = vpack.c.bf16 %v2591, %v2588
      %v2599 = vpack.c.bf16 %v2597, %v2594
      %s2600 = smul.u32 %s1954, 16
      %s2601 = smul.addr %s2600, 4
      %s2602 = scalar_lea.vmem [#allocation23], %s2601
      %v2603 = vld [vmem:[%s2602] sm:$0xf]
      %v2604 = vld [vmem:[%s2602 + $0x4] sm:$0xf]
      %v2605 = vld [vmem:[%s2602 + $0x8] sm:$0xf]
      %v2606 = vld [vmem:[%s2602 + $0xc] sm:$0xf]
      %v2607 = vld [vmem:[%s2602 + $0x10] sm:$0xf]
      %v2608 = vld [vmem:[%s2602 + $0x14] sm:$0xf]
      %v2609 = vld [vmem:[%s2602 + $0x18] sm:$0xf]
      %v2610 = vld [vmem:[%s2602 + $0x1c] sm:$0xf]
      %v2611 = vld [vmem:[%s2602 + $0x20] sm:$0xf]
      %v2612 = vld [vmem:[%s2602 + $0x24] sm:$0xf]
      %v2613 = vld [vmem:[%s2602 + $0x28] sm:$0xf]
      %v2614 = vld [vmem:[%s2602 + $0x2c] sm:$0xf]
      %v2615 = vld [vmem:[%s2602 + $0x30] sm:$0xf]
      %v2616 = vld [vmem:[%s2602 + $0x34] sm:$0xf]
      %v2617 = vld [vmem:[%s2602 + $0x38] sm:$0xf]
      %v2618 = vld [vmem:[%s2602 + $0x3c] sm:$0xf]
      %s2619 = scalar_lea.vmem %s33, %s1954
      %v2620 = vld [vmem:[%s2619] sm:$0x1]
      %v2622 = vlaneseq
      %v2623 = vshrl.u32 %v2622, 7
      %v2624 = vsub.s32 0, %v2623
      %v2625 = vrot.slane %v2620, %v2624
      %v2643 = vunpack.c.l.b16 %v2603
      %v2644 = vunpack.c.l.b16 %v2604
      %v2645 = vunpack.c.l.b16 %v2605
      %v2646 = vunpack.c.l.b16 %v2606
      %v2647 = vunpack.c.l.b16 %v2607
      %v2648 = vunpack.c.l.b16 %v2608
      %v2649 = vunpack.c.l.b16 %v2609
      %v2650 = vunpack.c.l.b16 %v2610
      %v2651 = vunpack.c.l.b16 %v2611
      %v2652 = vunpack.c.l.b16 %v2612
      %v2653 = vunpack.c.l.b16 %v2613
      %v2654 = vunpack.c.l.b16 %v2614
      %v2655 = vunpack.c.l.b16 %v2615
      %v2656 = vunpack.c.l.b16 %v2616
      %v2657 = vunpack.c.l.b16 %v2617
      %v2658 = vunpack.c.l.b16 %v2618
      %v2659 = vpack.c.b16 %v2644, %v2643
      %v2660 = vpack.c.b16 %v2646, %v2645
      %v2661 = vpack.c.b16 %v2648, %v2647
      %v2662 = vpack.c.b16 %v2650, %v2649
      %v2663 = vpack.c.b16 %v2652, %v2651
      %v2664 = vpack.c.b16 %v2654, %v2653
      %v2665 = vpack.c.b16 %v2656, %v2655
      %v2666 = vpack.c.b16 %v2658, %v2657
      %2675 = vmatprep.subr.bf16.mxu0 0
      %2676 = vmatpush1.bf16.msra.mxu0 %v2666
      %2677 = vmatprep.subr.bf16.mxu0 0
      %2678 = vmatpush1.bf16.msra.mxu0 %v2665
      %2679 = vmatprep.subr.bf16.mxu0 0
      %2680 = vmatpush1.bf16.msra.mxu0 %v2664
      %2681 = vmatprep.subr.bf16.mxu0 0
      %2682 = vmatpush1.bf16.msra.mxu0 %v2663
      %2683 = vmatprep.subr.bf16.mxu0 0
      %2684 = vmatpush1.bf16.msra.mxu0 %v2662
      %2685 = vmatprep.subr.bf16.mxu0 0
      %2686 = vmatpush1.bf16.msra.mxu0 %v2661
      %2687 = vmatprep.subr.bf16.mxu0 0
      %2688 = vmatpush1.bf16.msra.mxu0 %v2660
      %2689 = vmatprep.subr.bf16.mxu0 0
      %2690 = vmatpush1.bf16.msra.mxu0 %v2659
      %2691 = vmatprep.subr.bf16.mxu0 0
      %2692 = vmatpush2.bf16.msra.mxu0 0
      %2693 = vmatprep.subr.bf16.mxu0 0
      %2694 = vmatpush2.bf16.msra.mxu0 0
      %2695 = vmatprep.subr.bf16.mxu0 0
      %2696 = vmatpush2.bf16.msra.mxu0 0
      %2697 = vmatprep.subr.bf16.mxu0 0
      %2698 = vmatpush2.bf16.msra.mxu0 0
      %2699 = vmatprep.subr.bf16.mxu0 0
      %2700 = vmatpush2.bf16.msra.mxu0 0
      %2701 = vmatprep.subr.bf16.mxu0 0
      %2702 = vmatpush2.bf16.msra.mxu0 0
      %2703 = vmatprep.subr.bf16.mxu0 0
      %2704 = vmatpush2.bf16.msra.mxu0 0
      %2705 = vmatprep.subr.bf16.mxu0 0
      %2706 = vmatpush2.bf16.msra.mxu0 0
      %2707 = vmatprep.mubr.bf16.mxu0 0
      %2708 = vmatmul.mubr.bf16.gmra.mxu0 %v2598
      %v2709 = vpop.f32.mrf.mxu0
      %v2710 = vadd.f32 %v2625, %v2709
      %v2711 = vpop.f32.mrf.mxu0
      %v2712 = vpop.f32.mrf.mxu0
      %v2713 = vadd.f32 %v2625, %v2712
      %v2714 = vpop.f32.mrf.mxu0
      %2715 = vmatprep.mubr.bf16.mxu0 0
      %2716 = vmatmul.mubr.bf16.gmra.mxu0 %v2599
      %v2717 = vpop.f32.mrf.mxu0
      %v2718 = vadd.f32 %v2625, %v2717
      %v2719 = vpop.f32.mrf.mxu0
      %v2720 = vpop.f32.mrf.mxu0
      %v2721 = vadd.f32 %v2625, %v2720
      %v2722 = vpop.f32.mrf.mxu0
      %2723 = vdwg.mxu0
      %v2724 = vadd.f32 %v1959, %v2710
      %v2725 = vadd.f32 %v1960, %v2713
      %v2726 = vadd.f32 %v1961, %v2718
      %v2727 = vadd.f32 %v1962, %v2721
      %s2728 = scalar_lea.vmem %s43, %s1954
      %v2729 = vld [vmem:[%s2728] sm:$0x1]
      %s2730 = scalar_lea.vmem %s45, %s1954
      %v2731 = vld [vmem:[%s2730] sm:$0x1]
      %2732 = vadd.xlane.f32.xlu0 %v2724
      %v2733 = vpop.xlane.xlu0 %2732
      %2734 = vadd.xlane.f32.xlu0 %v2725
      %v2735 = vpop.xlane.xlu0 %2734
      %2736 = vadd.xlane.f32.xlu0 %v2726
      %v2737 = vpop.xlane.xlu0 %2736
      %2738 = vadd.xlane.f32.xlu0 %v2727
      %v2739 = vpop.xlane.xlu0 %2738
      %v2740 = vrcp.pop 128.0
      %v2741 = vmul.f32 %v2733, %v2740
      %v2742 = vmul.f32 %v2735, %v2740
      %v2743 = vmul.f32 %v2737, %v2740
      %v2744 = vmul.f32 %v2739, %v2740
      %v2745 = vsub.f32 %v2724, %v2741
      %v2746 = vsub.f32 %v2725, %v2742
      %v2747 = vsub.f32 %v2726, %v2743
      %v2748 = vsub.f32 %v2727, %v2744
      %v2749 = vmul.f32 %v2745, %v2745
      %v2750 = vmul.f32 %v2746, %v2746
      %v2751 = vmul.f32 %v2747, %v2747
      %v2752 = vmul.f32 %v2748, %v2748
      %2753 = vadd.xlane.f32.xlu0 %v2749
      %v2754 = vpop.xlane.xlu0 %2753
      %2755 = vadd.xlane.f32.xlu0 %v2750
      %v2756 = vpop.xlane.xlu0 %2755
      %2757 = vadd.xlane.f32.xlu0 %v2751
      %v2758 = vpop.xlane.xlu0 %2757
      %2759 = vadd.xlane.f32.xlu0 %v2752
      %v2760 = vpop.xlane.xlu0 %2759
      %v2761 = vmul.f32 %v2754, %v2740
      %v2762 = vmul.f32 %v2756, %v2740
      %v2763 = vmul.f32 %v2758, %v2740
      %v2764 = vmul.f32 %v2760, %v2740
      %v2765 = vadd.f32 %v2761, 1e-05
      %v2766 = vadd.f32 %v2762, 1e-05
      %v2767 = vadd.f32 %v2763, 1e-05
      %v2768 = vadd.f32 %v2764, 1e-05
      %v2769 = vrsqrt.pop %v2765
      %v2770 = vrsqrt.pop %v2766
      %v2771 = vrsqrt.pop %v2767
      %v2772 = vrsqrt.pop %v2768
      %v2773 = vmul.f32 %v2745, %v2769
      %v2774 = vmul.f32 %v2746, %v2770
      %v2775 = vmul.f32 %v2747, %v2771
      %v2776 = vmul.f32 %v2748, %v2772
      %v2778 = vlaneseq
      %v2779 = vshrl.u32 %v2778, 7
      %v2780 = vsub.s32 0, %v2779
      %v2781 = vrot.slane %v2729, %v2780
      %v2783 = vmul.f32 %v2773, %v2781
      %v2784 = vmul.f32 %v2774, %v2781
      %v2785 = vmul.f32 %v2775, %v2781
      %v2786 = vmul.f32 %v2776, %v2781
      %v2788 = vlaneseq
      %v2789 = vshrl.u32 %v2788, 7
      %v2790 = vsub.s32 0, %v2789
      %v2791 = vrot.slane %v2731, %v2790
      %v2793 = vadd.f32 %v2783, %v2791
      %v2794 = vadd.f32 %v2784, %v2791
      %v2795 = vadd.f32 %v2785, %v2791
      %v2796 = vadd.f32 %v2786, %v2791
      %v2797 = vpack.c.bf16 %v2794, %v2793
      %v2798 = vpack.c.bf16 %v2796, %v2795
      %s2799 = smul.u32 %s1954, 64
      %s2800 = smul.addr %s2799, 4
      %s2801 = scalar_lea.vmem [#allocation25], %s2800
      %v2802 = vld [vmem:[%s2801] sm:$0xff]
      %v2803 = vld [vmem:[%s2801 + $0x8] sm:$0xff]
      %v2804 = vld [vmem:[%s2801 + $0x10] sm:$0xff]
      %v2805 = vld [vmem:[%s2801 + $0x18] sm:$0xff]
      %v2806 = vld [vmem:[%s2801 + $0x20] sm:$0xff]
      %v2807 = vld [vmem:[%s2801 + $0x28] sm:$0xff]
      %v2808 = vld [vmem:[%s2801 + $0x30] sm:$0xff]
      %v2809 = vld [vmem:[%s2801 + $0x38] sm:$0xff]
      %v2810 = vld [vmem:[%s2801 + $0x40] sm:$0xff]
      %v2811 = vld [vmem:[%s2801 + $0x48] sm:$0xff]
      %v2812 = vld [vmem:[%s2801 + $0x50] sm:$0xff]
      %v2813 = vld [vmem:[%s2801 + $0x58] sm:$0xff]
      %v2814 = vld [vmem:[%s2801 + $0x60] sm:$0xff]
      %v2815 = vld [vmem:[%s2801 + $0x68] sm:$0xff]
      %v2816 = vld [vmem:[%s2801 + $0x70] sm:$0xff]
      %v2817 = vld [vmem:[%s2801 + $0x78] sm:$0xff]
      %v2818 = vld [vmem:[%s2801 + $0x80] sm:$0xff]
      %v2819 = vld [vmem:[%s2801 + $0x88] sm:$0xff]
      %v2820 = vld [vmem:[%s2801 + $0x90] sm:$0xff]
      %v2821 = vld [vmem:[%s2801 + $0x98] sm:$0xff]
      %v2822 = vld [vmem:[%s2801 + $0xa0] sm:$0xff]
      %v2823 = vld [vmem:[%s2801 + $0xa8] sm:$0xff]
      %v2824 = vld [vmem:[%s2801 + $0xb0] sm:$0xff]
      %v2825 = vld [vmem:[%s2801 + $0xb8] sm:$0xff]
      %v2826 = vld [vmem:[%s2801 + $0xc0] sm:$0xff]
      %v2827 = vld [vmem:[%s2801 + $0xc8] sm:$0xff]
      %v2828 = vld [vmem:[%s2801 + $0xd0] sm:$0xff]
      %v2829 = vld [vmem:[%s2801 + $0xd8] sm:$0xff]
      %v2830 = vld [vmem:[%s2801 + $0xe0] sm:$0xff]
      %v2831 = vld [vmem:[%s2801 + $0xe8] sm:$0xff]
      %v2832 = vld [vmem:[%s2801 + $0xf0] sm:$0xff]
      %v2833 = vld [vmem:[%s2801 + $0xf8] sm:$0xff]
      %s2834 = smul.u32 %s1954, 4
      %s2835 = scalar_lea.vmem %s37, %s2834
      %v2836 = vld [vmem:[%s2835] sm:$0xf]
      %v2838 = vlaneseq
      %v2839 = vshrl.u32 %v2838, 7
      %v2840 = vsub.s32 0, %v2839
      %v2841 = vrot.slane %v2836, %v2840
      %v2842 = vlaneseq
      %v2843 = vshrl.u32 %v2842, 7
      %v2844 = vsub.s32 1, %v2843
      %v2845 = vrot.slane %v2836, %v2844
      %v2846 = vlaneseq
      %v2847 = vshrl.u32 %v2846, 7
      %v2848 = vsub.s32 2, %v2847
      %v2849 = vrot.slane %v2836, %v2848
      %v2850 = vlaneseq
      %v2851 = vshrl.u32 %v2850, 7
      %v2852 = vsub.s32 3, %v2851
      %v2853 = vrot.slane %v2836, %v2852
      %v2890 = vunpack.c.l.b16 %v2802
      %v2891 = vunpack.c.h.b16 %v2802
      %v2892 = vunpack.c.l.b16 %v2803
      %v2893 = vunpack.c.h.b16 %v2803
      %v2894 = vunpack.c.l.b16 %v2804
      %v2895 = vunpack.c.h.b16 %v2804
      %v2896 = vunpack.c.l.b16 %v2805
      %v2897 = vunpack.c.h.b16 %v2805
      %v2898 = vunpack.c.l.b16 %v2806
      %v2899 = vunpack.c.h.b16 %v2806
      %v2900 = vunpack.c.l.b16 %v2807
      %v2901 = vunpack.c.h.b16 %v2807
      %v2902 = vunpack.c.l.b16 %v2808
      %v2903 = vunpack.c.h.b16 %v2808
      %v2904 = vunpack.c.l.b16 %v2809
      %v2905 = vunpack.c.h.b16 %v2809
      %v2906 = vunpack.c.l.b16 %v2810
      %v2907 = vunpack.c.h.b16 %v2810
      %v2908 = vunpack.c.l.b16 %v2811
      %v2909 = vunpack.c.h.b16 %v2811
      %v2910 = vunpack.c.l.b16 %v2812
      %v2911 = vunpack.c.h.b16 %v2812
      %v2912 = vunpack.c.l.b16 %v2813
      %v2913 = vunpack.c.h.b16 %v2813
      %v2914 = vunpack.c.l.b16 %v2814
      %v2915 = vunpack.c.h.b16 %v2814
      %v2916 = vunpack.c.l.b16 %v2815
      %v2917 = vunpack.c.h.b16 %v2815
      %v2918 = vunpack.c.l.b16 %v2816
      %v2919 = vunpack.c.h.b16 %v2816
      %v2920 = vunpack.c.l.b16 %v2817
      %v2921 = vunpack.c.h.b16 %v2817
      %v2922 = vunpack.c.l.b16 %v2818
      %v2923 = vunpack.c.h.b16 %v2818
      %v2924 = vunpack.c.l.b16 %v2819
      %v2925 = vunpack.c.h.b16 %v2819
      %v2926 = vunpack.c.l.b16 %v2820
      %v2927 = vunpack.c.h.b16 %v2820
      %v2928 = vunpack.c.l.b16 %v2821
      %v2929 = vunpack.c.h.b16 %v2821
      %v2930 = vunpack.c.l.b16 %v2822
      %v2931 = vunpack.c.h.b16 %v2822
      %v2932 = vunpack.c.l.b16 %v2823
      %v2933 = vunpack.c.h.b16 %v2823
      %v2934 = vunpack.c.l.b16 %v2824
      %v2935 = vunpack.c.h.b16 %v2824
      %v2936 = vunpack.c.l.b16 %v2825
      %v2937 = vunpack.c.h.b16 %v2825
      %v2938 = vunpack.c.l.b16 %v2826
      %v2939 = vunpack.c.h.b16 %v2826
      %v2940 = vunpack.c.l.b16 %v2827
      %v2941 = vunpack.c.h.b16 %v2827
      %v2942 = vunpack.c.l.b16 %v2828
      %v2943 = vunpack.c.h.b16 %v2828
      %v2944 = vunpack.c.l.b16 %v2829
      %v2945 = vunpack.c.h.b16 %v2829
      %v2946 = vunpack.c.l.b16 %v2830
      %v2947 = vunpack.c.h.b16 %v2830
      %v2948 = vunpack.c.l.b16 %v2831
      %v2949 = vunpack.c.h.b16 %v2831
      %v2950 = vunpack.c.l.b16 %v2832
      %v2951 = vunpack.c.h.b16 %v2832
      %v2952 = vunpack.c.l.b16 %v2833
      %v2953 = vunpack.c.h.b16 %v2833
      %v2954 = vpack.c.b16 %v2894, %v2890
      %v2955 = vpack.c.b16 %v2895, %v2891
      %v2956 = vpack.c.b16 %v2896, %v2892
      %v2957 = vpack.c.b16 %v2897, %v2893
      %v2958 = vpack.c.b16 %v2902, %v2898
      %v2959 = vpack.c.b16 %v2903, %v2899
      %v2960 = vpack.c.b16 %v2904, %v2900
      %v2961 = vpack.c.b16 %v2905, %v2901
      %v2962 = vpack.c.b16 %v2910, %v2906
      %v2963 = vpack.c.b16 %v2911, %v2907
      %v2964 = vpack.c.b16 %v2912, %v2908
      %v2965 = vpack.c.b16 %v2913, %v2909
      %v2966 = vpack.c.b16 %v2918, %v2914
      %v2967 = vpack.c.b16 %v2919, %v2915
      %v2968 = vpack.c.b16 %v2920, %v2916
      %v2969 = vpack.c.b16 %v2921, %v2917
      %v2970 = vpack.c.b16 %v2926, %v2922
      %v2971 = vpack.c.b16 %v2927, %v2923
      %v2972 = vpack.c.b16 %v2928, %v2924
      %v2973 = vpack.c.b16 %v2929, %v2925
      %v2974 = vpack.c.b16 %v2934, %v2930
      %v2975 = vpack.c.b16 %v2935, %v2931
      %v2976 = vpack.c.b16 %v2936, %v2932
      %v2977 = vpack.c.b16 %v2937, %v2933
      %v2978 = vpack.c.b16 %v2942, %v2938
      %v2979 = vpack.c.b16 %v2943, %v2939
      %v2980 = vpack.c.b16 %v2944, %v2940
      %v2981 = vpack.c.b16 %v2945, %v2941
      %v2982 = vpack.c.b16 %v2950, %v2946
      %v2983 = vpack.c.b16 %v2951, %v2947
      %v2984 = vpack.c.b16 %v2952, %v2948
      %v2985 = vpack.c.b16 %v2953, %v2949
      %3018 = vmatprep.subr.bf16.mxu0 %v2983
      %3019 = vmatpush1.bf16.msra.mxu0 %v2982
      %3020 = vmatprep.subr.bf16.mxu0 %v2979
      %3021 = vmatpush1.bf16.msra.mxu0 %v2978
      %3022 = vmatprep.subr.bf16.mxu0 %v2975
      %3023 = vmatpush1.bf16.msra.mxu0 %v2974
      %3024 = vmatprep.subr.bf16.mxu0 %v2971
      %3025 = vmatpush1.bf16.msra.mxu0 %v2970
      %3026 = vmatprep.subr.bf16.mxu0 %v2967
      %3027 = vmatpush1.bf16.msra.mxu0 %v2966
      %3028 = vmatprep.subr.bf16.mxu0 %v2963
      %3029 = vmatpush1.bf16.msra.mxu0 %v2962
      %3030 = vmatprep.subr.bf16.mxu0 %v2959
      %3031 = vmatpush1.bf16.msra.mxu0 %v2958
      %3032 = vmatprep.subr.bf16.mxu0 %v2955
      %3033 = vmatpush1.bf16.msra.mxu0 %v2954
      %3034 = vmatprep.subr.bf16.mxu0 0
      %3035 = vmatpush2.bf16.msra.mxu0 0
      %3036 = vmatprep.subr.bf16.mxu0 0
      %3037 = vmatpush2.bf16.msra.mxu0 0
      %3038 = vmatprep.subr.bf16.mxu0 0
      %3039 = vmatpush2.bf16.msra.mxu0 0
      %3040 = vmatprep.subr.bf16.mxu0 0
      %3041 = vmatpush2.bf16.msra.mxu0 0
      %3042 = vmatprep.subr.bf16.mxu0 0
      %3043 = vmatpush2.bf16.msra.mxu0 0
      %3044 = vmatprep.subr.bf16.mxu0 0
      %3045 = vmatpush2.bf16.msra.mxu0 0
      %3046 = vmatprep.subr.bf16.mxu0 0
      %3047 = vmatpush2.bf16.msra.mxu0 0
      %3048 = vmatprep.subr.bf16.mxu0 0
      %3049 = vmatpush2.bf16.msra.mxu0 0
      %3050 = vmatprep.mubr.bf16.mxu0 0
      %3051 = vmatmul.mubr.bf16.gmra.mxu0 %v2797
      %v3052 = vpop.f32.mrf.mxu0
      %v3053 = vadd.f32 %v2841, %v3052
      %v3054 = vpop.f32.mrf.mxu0
      %v3055 = vadd.f32 %v2845, %v3054
      %v3056 = vpop.f32.mrf.mxu0
      %v3057 = vadd.f32 %v2841, %v3056
      %v3058 = vpop.f32.mrf.mxu0
      %v3059 = vadd.f32 %v2845, %v3058
      %3060 = vmatprep.mubr.bf16.mxu0 0
      %3061 = vmatmul.mubr.bf16.gmra.mxu0 %v2798
      %v3062 = vpop.f32.mrf.mxu0
      %v3063 = vadd.f32 %v2841, %v3062
      %v3064 = vpop.f32.mrf.mxu0
      %v3065 = vadd.f32 %v2845, %v3064
      %v3066 = vpop.f32.mrf.mxu0
      %v3067 = vadd.f32 %v2841, %v3066
      %v3068 = vpop.f32.mrf.mxu0
      %v3069 = vadd.f32 %v2845, %v3068
      %3070 = vdwg.mxu0
      %3071 = vmatprep.subr.bf16.mxu0 %v2985
      %3072 = vmatpush1.bf16.msra.mxu0 %v2984
      %3073 = vmatprep.subr.bf16.mxu0 %v2981
      %3074 = vmatpush1.bf16.msra.mxu0 %v2980
      %3075 = vmatprep.subr.bf16.mxu0 %v2977
      %3076 = vmatpush1.bf16.msra.mxu0 %v2976
      %3077 = vmatprep.subr.bf16.mxu0 %v2973
      %3078 = vmatpush1.bf16.msra.mxu0 %v2972
      %3079 = vmatprep.subr.bf16.mxu0 %v2969
      %3080 = vmatpush1.bf16.msra.mxu0 %v2968
      %3081 = vmatprep.subr.bf16.mxu0 %v2965
      %3082 = vmatpush1.bf16.msra.mxu0 %v2964
      %3083 = vmatprep.subr.bf16.mxu0 %v2961
      %3084 = vmatpush1.bf16.msra.mxu0 %v2960
      %3085 = vmatprep.subr.bf16.mxu0 %v2957
      %3086 = vmatpush1.bf16.msra.mxu0 %v2956
      %3087 = vmatprep.subr.bf16.mxu0 0
      %3088 = vmatpush2.bf16.msra.mxu0 0
      %3089 = vmatprep.subr.bf16.mxu0 0
      %3090 = vmatpush2.bf16.msra.mxu0 0
      %3091 = vmatprep.subr.bf16.mxu0 0
      %3092 = vmatpush2.bf16.msra.mxu0 0
      %3093 = vmatprep.subr.bf16.mxu0 0
      %3094 = vmatpush2.bf16.msra.mxu0 0
      %3095 = vmatprep.subr.bf16.mxu0 0
      %3096 = vmatpush2.bf16.msra.mxu0 0
      %3097 = vmatprep.subr.bf16.mxu0 0
      %3098 = vmatpush2.bf16.msra.mxu0 0
      %3099 = vmatprep.subr.bf16.mxu0 0
      %3100 = vmatpush2.bf16.msra.mxu0 0
      %3101 = vmatprep.subr.bf16.mxu0 0
      %3102 = vmatpush2.bf16.msra.mxu0 0
      %3103 = vmatprep.mubr.bf16.mxu0 0
      %3104 = vmatmul.mubr.bf16.gmra.mxu0 %v2797
      %v3105 = vpop.f32.mrf.mxu0
      %v3106 = vadd.f32 %v2849, %v3105
      %v3107 = vpop.f32.mrf.mxu0
      %v3108 = vadd.f32 %v2853, %v3107
      %v3109 = vpop.f32.mrf.mxu0
      %v3110 = vadd.f32 %v2849, %v3109
      %v3111 = vpop.f32.mrf.mxu0
      %v3112 = vadd.f32 %v2853, %v3111
      %3113 = vmatprep.mubr.bf16.mxu0 0
      %3114 = vmatmul.mubr.bf16.gmra.mxu0 %v2798
      %v3115 = vpop.f32.mrf.mxu0
      %v3116 = vadd.f32 %v2849, %v3115
      %v3117 = vpop.f32.mrf.mxu0
      %v3118 = vadd.f32 %v2853, %v3117
      %v3119 = vpop.f32.mrf.mxu0
      %v3120 = vadd.f32 %v2849, %v3119
      %v3121 = vpop.f32.mrf.mxu0
      %v3122 = vadd.f32 %v2853, %v3121
      %3123 = vdwg.mxu0
      %v3124 = vmax.f32 %v3053, 0.0
      %v3125 = vmax.f32 %v3055, 0.0
      %v3126 = vmax.f32 %v3106, 0.0
      %v3127 = vmax.f32 %v3108, 0.0
      %v3128 = vmax.f32 %v3057, 0.0
      %v3129 = vmax.f32 %v3059, 0.0
      %v3130 = vmax.f32 %v3110, 0.0
      %v3131 = vmax.f32 %v3112, 0.0
      %v3132 = vmax.f32 %v3063, 0.0
      %v3133 = vmax.f32 %v3065, 0.0
      %v3134 = vmax.f32 %v3116, 0.0
      %v3135 = vmax.f32 %v3118, 0.0
      %v3136 = vmax.f32 %v3067, 0.0
      %v3137 = vmax.f32 %v3069, 0.0
      %v3138 = vmax.f32 %v3120, 0.0
      %v3139 = vmax.f32 %v3122, 0.0
      %v3140 = vpack.c.bf16 %v3128, %v3124
      %v3141 = vpack.c.bf16 %v3129, %v3125
      %v3142 = vpack.c.bf16 %v3130, %v3126
      %v3143 = vpack.c.bf16 %v3131, %v3127
      %v3144 = vpack.c.bf16 %v3136, %v3132
      %v3145 = vpack.c.bf16 %v3137, %v3133
      %v3146 = vpack.c.bf16 %v3138, %v3134
      %v3147 = vpack.c.bf16 %v3139, %v3135
      %s3148 = smul.addr %s2799, 4
      %s3149 = scalar_lea.vmem [#allocation26], %s3148
      %v3150 = vld [vmem:[%s3149] sm:$0xf]
      %v3151 = vld [vmem:[%s3149 + $0x4] sm:$0xf]
      %v3152 = vld [vmem:[%s3149 + $0x8] sm:$0xf]
      %v3153 = vld [vmem:[%s3149 + $0xc] sm:$0xf]
      %v3154 = vld [vmem:[%s3149 + $0x10] sm:$0xf]
      %v3155 = vld [vmem:[%s3149 + $0x14] sm:$0xf]
      %v3156 = vld [vmem:[%s3149 + $0x18] sm:$0xf]
      %v3157 = vld [vmem:[%s3149 + $0x1c] sm:$0xf]
      %v3158 = vld [vmem:[%s3149 + $0x20] sm:$0xf]
      %v3159 = vld [vmem:[%s3149 + $0x24] sm:$0xf]
      %v3160 = vld [vmem:[%s3149 + $0x28] sm:$0xf]
      %v3161 = vld [vmem:[%s3149 + $0x2c] sm:$0xf]
      %v3162 = vld [vmem:[%s3149 + $0x30] sm:$0xf]
      %v3163 = vld [vmem:[%s3149 + $0x34] sm:$0xf]
      %v3164 = vld [vmem:[%s3149 + $0x38] sm:$0xf]
      %v3165 = vld [vmem:[%s3149 + $0x3c] sm:$0xf]
      %v3166 = vld [vmem:[%s3149 + $0x40] sm:$0xf]
      %v3167 = vld [vmem:[%s3149 + $0x44] sm:$0xf]
      %v3168 = vld [vmem:[%s3149 + $0x48] sm:$0xf]
      %v3169 = vld [vmem:[%s3149 + $0x4c] sm:$0xf]
      %v3170 = vld [vmem:[%s3149 + $0x50] sm:$0xf]
      %v3171 = vld [vmem:[%s3149 + $0x54] sm:$0xf]
      %v3172 = vld [vmem:[%s3149 + $0x58] sm:$0xf]
      %v3173 = vld [vmem:[%s3149 + $0x5c] sm:$0xf]
      %v3174 = vld [vmem:[%s3149 + $0x60] sm:$0xf]
      %v3175 = vld [vmem:[%s3149 + $0x64] sm:$0xf]
      %v3176 = vld [vmem:[%s3149 + $0x68] sm:$0xf]
      %v3177 = vld [vmem:[%s3149 + $0x6c] sm:$0xf]
      %v3178 = vld [vmem:[%s3149 + $0x70] sm:$0xf]
      %v3179 = vld [vmem:[%s3149 + $0x74] sm:$0xf]
      %v3180 = vld [vmem:[%s3149 + $0x78] sm:$0xf]
      %v3181 = vld [vmem:[%s3149 + $0x7c] sm:$0xf]
      %v3182 = vld [vmem:[%s3149 + $0x80] sm:$0xf]
      %v3183 = vld [vmem:[%s3149 + $0x84] sm:$0xf]
      %v3184 = vld [vmem:[%s3149 + $0x88] sm:$0xf]
      %v3185 = vld [vmem:[%s3149 + $0x8c] sm:$0xf]
      %v3186 = vld [vmem:[%s3149 + $0x90] sm:$0xf]
      %v3187 = vld [vmem:[%s3149 + $0x94] sm:$0xf]
      %v3188 = vld [vmem:[%s3149 + $0x98] sm:$0xf]
      %v3189 = vld [vmem:[%s3149 + $0x9c] sm:$0xf]
      %v3190 = vld [vmem:[%s3149 + $0xa0] sm:$0xf]
      %v3191 = vld [vmem:[%s3149 + $0xa4] sm:$0xf]
      %v3192 = vld [vmem:[%s3149 + $0xa8] sm:$0xf]
      %v3193 = vld [vmem:[%s3149 + $0xac] sm:$0xf]
      %v3194 = vld [vmem:[%s3149 + $0xb0] sm:$0xf]
      %v3195 = vld [vmem:[%s3149 + $0xb4] sm:$0xf]
      %v3196 = vld [vmem:[%s3149 + $0xb8] sm:$0xf]
      %v3197 = vld [vmem:[%s3149 + $0xbc] sm:$0xf]
      %v3198 = vld [vmem:[%s3149 + $0xc0] sm:$0xf]
      %v3199 = vld [vmem:[%s3149 + $0xc4] sm:$0xf]
      %v3200 = vld [vmem:[%s3149 + $0xc8] sm:$0xf]
      %v3201 = vld [vmem:[%s3149 + $0xcc] sm:$0xf]
      %v3202 = vld [vmem:[%s3149 + $0xd0] sm:$0xf]
      %v3203 = vld [vmem:[%s3149 + $0xd4] sm:$0xf]
      %v3204 = vld [vmem:[%s3149 + $0xd8] sm:$0xf]
      %v3205 = vld [vmem:[%s3149 + $0xdc] sm:$0xf]
      %v3206 = vld [vmem:[%s3149 + $0xe0] sm:$0xf]
      %v3207 = vld [vmem:[%s3149 + $0xe4] sm:$0xf]
      %v3208 = vld [vmem:[%s3149 + $0xe8] sm:$0xf]
      %v3209 = vld [vmem:[%s3149 + $0xec] sm:$0xf]
      %v3210 = vld [vmem:[%s3149 + $0xf0] sm:$0xf]
      %v3211 = vld [vmem:[%s3149 + $0xf4] sm:$0xf]
      %v3212 = vld [vmem:[%s3149 + $0xf8] sm:$0xf]
      %v3213 = vld [vmem:[%s3149 + $0xfc] sm:$0xf]
      %s3214 = scalar_lea.vmem %s41, %s1954
      %v3215 = vld [vmem:[%s3214] sm:$0x1]
      %v3217 = vlaneseq
      %v3218 = vshrl.u32 %v3217, 7
      %v3219 = vsub.s32 0, %v3218
      %v3220 = vrot.slane %v3215, %v3219
      %v3286 = vunpack.c.l.b16 %v3150
      %v3287 = vunpack.c.l.b16 %v3151
      %v3288 = vunpack.c.l.b16 %v3152
      %v3289 = vunpack.c.l.b16 %v3153
      %v3290 = vunpack.c.l.b16 %v3154
      %v3291 = vunpack.c.l.b16 %v3155
      %v3292 = vunpack.c.l.b16 %v3156
      %v3293 = vunpack.c.l.b16 %v3157
      %v3294 = vunpack.c.l.b16 %v3158
      %v3295 = vunpack.c.l.b16 %v3159
      %v3296 = vunpack.c.l.b16 %v3160
      %v3297 = vunpack.c.l.b16 %v3161
      %v3298 = vunpack.c.l.b16 %v3162
      %v3299 = vunpack.c.l.b16 %v3163
      %v3300 = vunpack.c.l.b16 %v3164
      %v3301 = vunpack.c.l.b16 %v3165
      %v3302 = vunpack.c.l.b16 %v3166
      %v3303 = vunpack.c.l.b16 %v3167
      %v3304 = vunpack.c.l.b16 %v3168
      %v3305 = vunpack.c.l.b16 %v3169
      %v3306 = vunpack.c.l.b16 %v3170
      %v3307 = vunpack.c.l.b16 %v3171
      %v3308 = vunpack.c.l.b16 %v3172
      %v3309 = vunpack.c.l.b16 %v3173
      %v3310 = vunpack.c.l.b16 %v3174
      %v3311 = vunpack.c.l.b16 %v3175
      %v3312 = vunpack.c.l.b16 %v3176
      %v3313 = vunpack.c.l.b16 %v3177
      %v3314 = vunpack.c.l.b16 %v3178
      %v3315 = vunpack.c.l.b16 %v3179
      %v3316 = vunpack.c.l.b16 %v3180
      %v3317 = vunpack.c.l.b16 %v3181
      %v3318 = vunpack.c.l.b16 %v3182
      %v3319 = vunpack.c.l.b16 %v3183
      %v3320 = vunpack.c.l.b16 %v3184
      %v3321 = vunpack.c.l.b16 %v3185
      %v3322 = vunpack.c.l.b16 %v3186
      %v3323 = vunpack.c.l.b16 %v3187
      %v3324 = vunpack.c.l.b16 %v3188
      %v3325 = vunpack.c.l.b16 %v3189
      %v3326 = vunpack.c.l.b16 %v3190
      %v3327 = vunpack.c.l.b16 %v3191
      %v3328 = vunpack.c.l.b16 %v3192
      %v3329 = vunpack.c.l.b16 %v3193
      %v3330 = vunpack.c.l.b16 %v3194
      %v3331 = vunpack.c.l.b16 %v3195
      %v3332 = vunpack.c.l.b16 %v3196
      %v3333 = vunpack.c.l.b16 %v3197
      %v3334 = vunpack.c.l.b16 %v3198
      %v3335 = vunpack.c.l.b16 %v3199
      %v3336 = vunpack.c.l.b16 %v3200
      %v3337 = vunpack.c.l.b16 %v3201
      %v3338 = vunpack.c.l.b16 %v3202
      %v3339 = vunpack.c.l.b16 %v3203
      %v3340 = vunpack.c.l.b16 %v3204
      %v3341 = vunpack.c.l.b16 %v3205
      %v3342 = vunpack.c.l.b16 %v3206
      %v3343 = vunpack.c.l.b16 %v3207
      %v3344 = vunpack.c.l.b16 %v3208
      %v3345 = vunpack.c.l.b16 %v3209
      %v3346 = vunpack.c.l.b16 %v3210
      %v3347 = vunpack.c.l.b16 %v3211
      %v3348 = vunpack.c.l.b16 %v3212
      %v3349 = vunpack.c.l.b16 %v3213
      %v3350 = vpack.c.b16 %v3287, %v3286
      %v3351 = vpack.c.b16 %v3289, %v3288
      %v3352 = vpack.c.b16 %v3291, %v3290
      %v3353 = vpack.c.b16 %v3293, %v3292
      %v3354 = vpack.c.b16 %v3295, %v3294
      %v3355 = vpack.c.b16 %v3297, %v3296
      %v3356 = vpack.c.b16 %v3299, %v3298
      %v3357 = vpack.c.b16 %v3301, %v3300
      %v3358 = vpack.c.b16 %v3303, %v3302
      %v3359 = vpack.c.b16 %v3305, %v3304
      %v3360 = vpack.c.b16 %v3307, %v3306
      %v3361 = vpack.c.b16 %v3309, %v3308
      %v3362 = vpack.c.b16 %v3311, %v3310
      %v3363 = vpack.c.b16 %v3313, %v3312
      %v3364 = vpack.c.b16 %v3315, %v3314
      %v3365 = vpack.c.b16 %v3317, %v3316
      %v3366 = vpack.c.b16 %v3319, %v3318
      %v3367 = vpack.c.b16 %v3321, %v3320
      %v3368 = vpack.c.b16 %v3323, %v3322
      %v3369 = vpack.c.b16 %v3325, %v3324
      %v3370 = vpack.c.b16 %v3327, %v3326
      %v3371 = vpack.c.b16 %v3329, %v3328
      %v3372 = vpack.c.b16 %v3331, %v3330
      %v3373 = vpack.c.b16 %v3333, %v3332
      %v3374 = vpack.c.b16 %v3335, %v3334
      %v3375 = vpack.c.b16 %v3337, %v3336
      %v3376 = vpack.c.b16 %v3339, %v3338
      %v3377 = vpack.c.b16 %v3341, %v3340
      %v3378 = vpack.c.b16 %v3343, %v3342
      %v3379 = vpack.c.b16 %v3345, %v3344
      %v3380 = vpack.c.b16 %v3347, %v3346
      %v3381 = vpack.c.b16 %v3349, %v3348
      %3414 = vmatprep.subr.bf16.mxu0 0
      %3415 = vmatpush1.bf16.msra.mxu0 %v3357
      %3416 = vmatprep.subr.bf16.mxu0 0
      %3417 = vmatpush1.bf16.msra.mxu0 %v3356
      %3418 = vmatprep.subr.bf16.mxu0 0
      %3419 = vmatpush1.bf16.msra.mxu0 %v3355
      %3420 = vmatprep.subr.bf16.mxu0 0
      %3421 = vmatpush1.bf16.msra.mxu0 %v3354
      %3422 = vmatprep.subr.bf16.mxu0 0
      %3423 = vmatpush1.bf16.msra.mxu0 %v3353
      %3424 = vmatprep.subr.bf16.mxu0 0
      %3425 = vmatpush1.bf16.msra.mxu0 %v3352
      %3426 = vmatprep.subr.bf16.mxu0 0
      %3427 = vmatpush1.bf16.msra.mxu0 %v3351
      %3428 = vmatprep.subr.bf16.mxu0 0
      %3429 = vmatpush1.bf16.msra.mxu0 %v3350
      %3430 = vmatprep.subr.bf16.mxu0 0
      %3431 = vmatpush2.bf16.msra.mxu0 %v3365
      %3432 = vmatprep.subr.bf16.mxu0 0
      %3433 = vmatpush2.bf16.msra.mxu0 %v3364
      %3434 = vmatprep.subr.bf16.mxu0 0
      %3435 = vmatpush2.bf16.msra.mxu0 %v3363
      %3436 = vmatprep.subr.bf16.mxu0 0
      %3437 = vmatpush2.bf16.msra.mxu0 %v3362
      %3438 = vmatprep.subr.bf16.mxu0 0
      %3439 = vmatpush2.bf16.msra.mxu0 %v3361
      %3440 = vmatprep.subr.bf16.mxu0 0
      %3441 = vmatpush2.bf16.msra.mxu0 %v3360
      %3442 = vmatprep.subr.bf16.mxu0 0
      %3443 = vmatpush2.bf16.msra.mxu0 %v3359
      %3444 = vmatprep.subr.bf16.mxu0 0
      %3445 = vmatpush2.bf16.msra.mxu0 %v3358
      %3446 = vmatprep.mubr.bf16.mxu0 %v3141
      %3447 = vmatmul.mubr.bf16.gmra.mxu0 %v3140
      %v3448 = vpop.f32.mrf.mxu0
      %v3449 = vadd.f32 %v3220, %v3448
      %v3450 = vpop.f32.mrf.mxu0
      %v3451 = vpop.f32.mrf.mxu0
      %v3452 = vadd.f32 %v3220, %v3451
      %v3453 = vpop.f32.mrf.mxu0
      %3454 = vmatprep.mubr.bf16.mxu0 %v3145
      %3455 = vmatmul.mubr.bf16.gmra.mxu0 %v3144
      %v3456 = vpop.f32.mrf.mxu0
      %v3457 = vadd.f32 %v3220, %v3456
      %v3458 = vpop.f32.mrf.mxu0
      %v3459 = vpop.f32.mrf.mxu0
      %v3460 = vadd.f32 %v3220, %v3459
      %v3461 = vpop.f32.mrf.mxu0
      %3462 = vdwg.mxu0
      %3463 = vmatprep.subr.bf16.mxu0 0
      %3464 = vmatpush1.bf16.msra.mxu0 %v3373
      %3465 = vmatprep.subr.bf16.mxu0 0
      %3466 = vmatpush1.bf16.msra.mxu0 %v3372
      %3467 = vmatprep.subr.bf16.mxu0 0
      %3468 = vmatpush1.bf16.msra.mxu0 %v3371
      %3469 = vmatprep.subr.bf16.mxu0 0
      %3470 = vmatpush1.bf16.msra.mxu0 %v3370
      %3471 = vmatprep.subr.bf16.mxu0 0
      %3472 = vmatpush1.bf16.msra.mxu0 %v3369
      %3473 = vmatprep.subr.bf16.mxu0 0
      %3474 = vmatpush1.bf16.msra.mxu0 %v3368
      %3475 = vmatprep.subr.bf16.mxu0 0
      %3476 = vmatpush1.bf16.msra.mxu0 %v3367
      %3477 = vmatprep.subr.bf16.mxu0 0
      %3478 = vmatpush1.bf16.msra.mxu0 %v3366
      %3479 = vmatprep.subr.bf16.mxu0 0
      %3480 = vmatpush2.bf16.msra.mxu0 %v3381
      %3481 = vmatprep.subr.bf16.mxu0 0
      %3482 = vmatpush2.bf16.msra.mxu0 %v3380
      %3483 = vmatprep.subr.bf16.mxu0 0
      %3484 = vmatpush2.bf16.msra.mxu0 %v3379
      %3485 = vmatprep.subr.bf16.mxu0 0
      %3486 = vmatpush2.bf16.msra.mxu0 %v3378
      %3487 = vmatprep.subr.bf16.mxu0 0
      %3488 = vmatpush2.bf16.msra.mxu0 %v3377
      %3489 = vmatprep.subr.bf16.mxu0 0
      %3490 = vmatpush2.bf16.msra.mxu0 %v3376
      %3491 = vmatprep.subr.bf16.mxu0 0
      %3492 = vmatpush2.bf16.msra.mxu0 %v3375
      %3493 = vmatprep.subr.bf16.mxu0 0
      %3494 = vmatpush2.bf16.msra.mxu0 %v3374
      %3495 = vmatprep.mubr.bf16.mxu0 %v3143
      %3496 = vmatmul.mubr.bf16.gmra.mxu0 %v3142
      %v3497 = vpop.f32.mrf.mxu0
      %v3498 = vadd.f32 %v3449, %v3497
      %v3499 = vpop.f32.mrf.mxu0
      %v3500 = vpop.f32.mrf.mxu0
      %v3501 = vadd.f32 %v3452, %v3500
      %v3502 = vpop.f32.mrf.mxu0
      %3503 = vmatprep.mubr.bf16.mxu0 %v3147
      %3504 = vmatmul.mubr.bf16.gmra.mxu0 %v3146
      %v3505 = vpop.f32.mrf.mxu0
      %v3506 = vadd.f32 %v3457, %v3505
      %v3507 = vpop.f32.mrf.mxu0
      %v3508 = vpop.f32.mrf.mxu0
      %v3509 = vadd.f32 %v3460, %v3508
      %v3510 = vpop.f32.mrf.mxu0
      %3511 = vdwg.mxu0
      %v3512 = vadd.f32 %v2793, %v3498
      %v3513 = vadd.f32 %v2794, %v3501
      %v3514 = vadd.f32 %v2795, %v3506
      %v3515 = vadd.f32 %v2796, %v3509
      %s3516 = scalar_lea.vmem %s47, %s1954
      %v3517 = vld [vmem:[%s3516] sm:$0x1]
      %s3518 = scalar_lea.vmem %s49, %s1954
      %v3519 = vld [vmem:[%s3518] sm:$0x1]
      %3520 = vadd.xlane.f32.xlu0 %v3512
      %v3521 = vpop.xlane.xlu0 %3520
      %3522 = vadd.xlane.f32.xlu0 %v3513
      %v3523 = vpop.xlane.xlu0 %3522
      %3524 = vadd.xlane.f32.xlu0 %v3514
      %v3525 = vpop.xlane.xlu0 %3524
      %3526 = vadd.xlane.f32.xlu0 %v3515
      %v3527 = vpop.xlane.xlu0 %3526
      %v3528 = vmul.f32 %v3521, %v2740
      %v3529 = vmul.f32 %v3523, %v2740
      %v3530 = vmul.f32 %v3525, %v2740
      %v3531 = vmul.f32 %v3527, %v2740
      %v3532 = vsub.f32 %v3512, %v3528
      %v3533 = vsub.f32 %v3513, %v3529
      %v3534 = vsub.f32 %v3514, %v3530
      %v3535 = vsub.f32 %v3515, %v3531
      %v3536 = vmul.f32 %v3532, %v3532
      %v3537 = vmul.f32 %v3533, %v3533
      %v3538 = vmul.f32 %v3534, %v3534
      %v3539 = vmul.f32 %v3535, %v3535
      %3540 = vadd.xlane.f32.xlu0 %v3536
      %v3541 = vpop.xlane.xlu0 %3540
      %3542 = vadd.xlane.f32.xlu0 %v3537
      %v3543 = vpop.xlane.xlu0 %3542
      %3544 = vadd.xlane.f32.xlu0 %v3538
      %v3545 = vpop.xlane.xlu0 %3544
      %3546 = vadd.xlane.f32.xlu0 %v3539
      %v3547 = vpop.xlane.xlu0 %3546
      %v3548 = vmul.f32 %v3541, %v2740
      %v3549 = vmul.f32 %v3543, %v2740
      %v3550 = vmul.f32 %v3545, %v2740
      %v3551 = vmul.f32 %v3547, %v2740
      %v3552 = vadd.f32 %v3548, 1e-05
      %v3553 = vadd.f32 %v3549, 1e-05
      %v3554 = vadd.f32 %v3550, 1e-05
      %v3555 = vadd.f32 %v3551, 1e-05
      %v3556 = vrsqrt.pop %v3552
      %v3557 = vrsqrt.pop %v3553
      %v3558 = vrsqrt.pop %v3554
      %v3559 = vrsqrt.pop %v3555
      %v3560 = vmul.f32 %v3532, %v3556
      %v3561 = vmul.f32 %v3533, %v3557
      %v3562 = vmul.f32 %v3534, %v3558
      %v3563 = vmul.f32 %v3535, %v3559
      %v3565 = vlaneseq
      %v3566 = vshrl.u32 %v3565, 7
      %v3567 = vsub.s32 0, %v3566
      %v3568 = vrot.slane %v3517, %v3567
      %v3570 = vmul.f32 %v3560, %v3568
      %v3571 = vmul.f32 %v3561, %v3568
      %v3572 = vmul.f32 %v3562, %v3568
      %v3573 = vmul.f32 %v3563, %v3568
      %v3575 = vlaneseq
      %v3576 = vshrl.u32 %v3575, 7
      %v3577 = vsub.s32 0, %v3576
      %v3578 = vrot.slane %v3519, %v3577
      %v3580 = vadd.f32 %v3570, %v3578
      %v3581 = vadd.f32 %v3571, %v3578
      %v3582 = vadd.f32 %v3572, %v3578
      %v3583 = vadd.f32 %v3573, %v3578
    $region190: #{tpu_custom_call.1} parent=1 // loop_footer
      %s1958 = sadd.s32 1, %s1954
    $region191: #{tpu_custom_call.1} parent=1 // loop_footer_branch
      %1953 = sbr.rel target = $region187
    $region192: #{tpu_custom_call.1} parent=1 // loop_exit
      _
    %v3584 = vld [vmem:[%s51] sm:$0x1]
    %v3585 = vld [vmem:[%s53] sm:$0x1]
    %3586 = vadd.xlane.f32.xlu0 %v1959
    %v3587 = vpop.xlane.xlu0 %3586
    %v3588 = vrcp.pop 128.0
    %v3589 = vmul.f32 %v3587, %v3588
    %v3590 = vsub.f32 %v1959, %v3589
    %v3591 = vmul.f32 %v3590, %v3590
    %3592 = vadd.xlane.f32.xlu0 %v3591
    %v3593 = vpop.xlane.xlu0 %3592
    %v3594 = vmul.f32 %v3593, %v3588
    %v3595 = vadd.f32 %v3594, 1e-05
    %v3596 = vrsqrt.pop %v3595
    %v3597 = vmul.f32 %v3590, %v3596
    %v3599 = vlaneseq
    %v3600 = vshrl.u32 %v3599, 7
    %v3601 = vsub.s32 0, %v3600
    %v3602 = vrot.slane %v3584, %v3601
    %v3604 = vmul.f32 %v3597, %v3602
    %v3606 = vlaneseq
    %v3607 = vshrl.u32 %v3606, 7
    %v3608 = vsub.s32 0, %v3607
    %v3609 = vrot.slane %v3585, %v3608
    %v3611 = vadd.f32 %v3604, %v3609
    %v3612 = vld [vmem:[#allocation28] sm:$0xff]
    %v3613 = vld [vmem:[#allocation28 + $0x8] sm:$0xff]
    %v3614 = vld [vmem:[#allocation28 + $0x10] sm:$0xff]
    %v3615 = vld [vmem:[#allocation28 + $0x18] sm:$0xff]
    %v3616 = vld [vmem:[#allocation28 + $0x20] sm:$0xff]
    %v3617 = vld [vmem:[#allocation28 + $0x28] sm:$0xff]
    %v3618 = vld [vmem:[#allocation28 + $0x30] sm:$0xff]
    %v3619 = vld [vmem:[#allocation28 + $0x38] sm:$0xff]
    %v3620 = vld [vmem:[#allocation28 + $0x40] sm:$0xff]
    %v3621 = vld [vmem:[#allocation28 + $0x48] sm:$0xff]
    %v3622 = vld [vmem:[#allocation28 + $0x50] sm:$0xff]
    %v3623 = vld [vmem:[#allocation28 + $0x58] sm:$0xff]
    %v3624 = vld [vmem:[#allocation28 + $0x60] sm:$0xff]
    %v3625 = vld [vmem:[#allocation28 + $0x68] sm:$0xff]
    %v3626 = vld [vmem:[#allocation28 + $0x70] sm:$0xff]
    %v3627 = vld [vmem:[#allocation28 + $0x78] sm:$0xff]
    %v3628 = vld [vmem:[%s57] sm:$0x1]
    %v3630 = vlaneseq
    %v3631 = vshrl.u32 %v3630, 7
    %v3632 = vsub.s32 0, %v3631
    %v3633 = vrot.slane %v3628, %v3632
    %3635 = vmatprep.subr.mxu0 0.0
    %3636 = vmatpush1.msra.mxu0 %v3627
    %3637 = vmatprep.subr.mxu0 0.0
    %3638 = vmatpush1.msra.mxu0 %v3626
    %3639 = vmatprep.subr.mxu0 0.0
    %3640 = vmatpush1.msra.mxu0 %v3625
    %3641 = vmatprep.subr.mxu0 0.0
    %3642 = vmatpush1.msra.mxu0 %v3624
    %3643 = vmatprep.subr.mxu0 0.0
    %3644 = vmatpush1.msra.mxu0 %v3623
    %3645 = vmatprep.subr.mxu0 0.0
    %3646 = vmatpush1.msra.mxu0 %v3622
    %3647 = vmatprep.subr.mxu0 0.0
    %3648 = vmatpush1.msra.mxu0 %v3621
    %3649 = vmatprep.subr.mxu0 0.0
    %3650 = vmatpush1.msra.mxu0 %v3620
    %3651 = vmatprep.subr.mxu0 0.0
    %3652 = vmatpush1.msra.mxu0 %v3619
    %3653 = vmatprep.subr.mxu0 0.0
    %3654 = vmatpush1.msra.mxu0 %v3618
    %3655 = vmatprep.subr.mxu0 0.0
    %3656 = vmatpush1.msra.mxu0 %v3617
    %3657 = vmatprep.subr.mxu0 0.0
    %3658 = vmatpush1.msra.mxu0 %v3616
    %3659 = vmatprep.subr.mxu0 0.0
    %3660 = vmatpush1.msra.mxu0 %v3615
    %3661 = vmatprep.subr.mxu0 0.0
    %3662 = vmatpush1.msra.mxu0 %v3614
    %3663 = vmatprep.subr.mxu0 0.0
    %3664 = vmatpush1.msra.mxu0 %v3613
    %3665 = vmatprep.subr.mxu0 0.0
    %3666 = vmatpush1.msra.mxu0 %v3612
    %3667 = vmatprep.subr.mxu0 0.0
    %3668 = vmatpush2.msra.mxu0 0.0
    %3669 = vmatprep.subr.mxu0 0.0
    %3670 = vmatpush2.msra.mxu0 0.0
    %3671 = vmatprep.subr.mxu0 0.0
    %3672 = vmatpush2.msra.mxu0 0.0
    %3673 = vmatprep.subr.mxu0 0.0
    %3674 = vmatpush2.msra.mxu0 0.0
    %3675 = vmatprep.subr.mxu0 0.0
    %3676 = vmatpush2.msra.mxu0 0.0
    %3677 = vmatprep.subr.mxu0 0.0
    %3678 = vmatpush2.msra.mxu0 0.0
    %3679 = vmatprep.subr.mxu0 0.0
    %3680 = vmatpush2.msra.mxu0 0.0
    %3681 = vmatprep.subr.mxu0 0.0
    %3682 = vmatpush2.msra.mxu0 0.0
    %3683 = vmatprep.subr.mxu0 0.0
    %3684 = vmatpush2.msra.mxu0 0.0
    %3685 = vmatprep.subr.mxu0 0.0
    %3686 = vmatpush2.msra.mxu0 0.0
    %3687 = vmatprep.subr.mxu0 0.0
    %3688 = vmatpush2.msra.mxu0 0.0
    %3689 = vmatprep.subr.mxu0 0.0
    %3690 = vmatpush2.msra.mxu0 0.0
    %3691 = vmatprep.subr.mxu0 0.0
    %3692 = vmatpush2.msra.mxu0 0.0
    %3693 = vmatprep.subr.mxu0 0.0
    %3694 = vmatpush2.msra.mxu0 0.0
    %3695 = vmatprep.subr.mxu0 0.0
    %3696 = vmatpush2.msra.mxu0 0.0
    %3697 = vmatprep.subr.mxu0 0.0
    %3698 = vmatpush2.msra.mxu0 0.0
    %3699 = vmatprep.mubr.f32.mxu0 0.0
    %3700 = vmatmul.mubr.f32.gmra.mxu0 %v3611
    %v3701 = vpop.f32.mrf.mxu0
    %v3702 = vadd.f32 %v3633, %v3701
    %v3703 = vpop.f32.mrf.mxu0
    %3704 = vdwg.mxu0
    %3705 = vst [vmem:[#allocation29] sm:$0xff] %v3702
    // Predicated region
    $region193: #{tpu_custom_call.1} parent=1 // pred_check
      _
    $region194: #{tpu_custom_call.1} parent=1 // pred_check_branch
      %3707 = sbr.rel (0) target = $region196
    $region195: #{tpu_custom_call.1} parent=1 // pred_region
      %s3709 = ssub.s32 128, 128
      %3710 = vsyncadd [#allocation4], %s3709
      %s3712 = sshll.u32 [#allocation29], 4
      %s3713 = int_to_ptr.vmem [resolvable:$true] %s3712
      %3715 = dma.vmem_to_hbm [thread:$0]  %s3713, 128, %s59, [#allocation4]
    $region196: #{tpu_custom_call.1} parent=1 // pred_fallthru
      _
    // Predicated region
    $region197: #{tpu_custom_call.1} parent=1 // pred_check
      _
    $region198: #{tpu_custom_call.1} parent=1 // pred_check_branch
      %3717 = sbr.rel (0) target = $region200
    $region199: #{tpu_custom_call.1} parent=1 // pred_region
      %3718 = dma.done [#allocation4], 128
    $region200: #{tpu_custom_call.1} parent=1 // pred_fallthru
      _
    %3719 = vsyncpa [#allocation3], 1
    %3720 = vsyncpa [#allocation6], 1
    %3721 = vsyncpa [#allocation9], 1
    %3722 = vsyncpa [#allocation12], 1
    %3723 = vsyncpa [#allocation15], 1
    %3724 = vsyncpa [#allocation18], 1
    %3725 = vsyncpa [#allocation21], 1
    %3726 = vsyncpa [#allocation24], 1
    %3727 = vsyncpa [#allocation27], 1
    %3728 = vsyncpa [#allocation4], 1

</llo_original>
